<compile_context>
chip_gen: v5e
topology: v5e:2x2
jax: 0.10.0
libtpu: 0.0.40
codegen_flags: <defaults>
</compile_context>

<pallas_src>
import functools

import jax
import jax.numpy as jnp
from jax.experimental import pallas as pl
from jax.experimental.pallas import tpu as pltpu


# --------------------------- Fused forward kernel ----------------------------
def _fused_attention_kernel(x_ref, xh_ref, wqkv_ref, wp_ref, bp_ref,
                            out_ref, outh_ref, *, num_heads, n_mt):
    B, N, C = x_ref.shape
    H = num_heads
    D = C // H
    M = B * N

    # ---- fused QKV projection: both streams stacked -> one (2M, 3C) matmul --
    x2 = jnp.concatenate(
        [x_ref[...].reshape(M, C), xh_ref[...].reshape(M, C)], axis=0
    ).astype(jnp.float32)                                        # (2M, C)
    wqkv = wqkv_ref[...].astype(jnp.float32)                     # (C, 3C), Q cols pre-scaled
    qkv = jnp.dot(x2, wqkv, preferred_element_type=jnp.float32)  # (2M, 3C)
    qkv = qkv.reshape(2 * B, N, 3 * C)                           # [:B] = x, [B:] = x_hsi

    # ---- per-head softmax attention, heads packed along lanes ----------------
    def attn(q_src, kv_src):
        # q_src: (Bb, Nq, 3C) rows used as queries; kv_src: (Bb, Nk, 3C)
        # head h of Q/K/V = lanes [h*D, C + h*D, 2*C + h*D) of the fused slab.
        outs = []
        for h in range(H):
            q = q_src[:, :, h * D:(h + 1) * D]
            k = kv_src[:, :, C + h * D:C + (h + 1) * D]
            v = kv_src[:, :, 2 * C + h * D:2 * C + (h + 1) * D]
            s = jnp.einsum('bqd,bkd->bqk', q, k,
                           preferred_element_type=jnp.float32)
            s = s - jnp.max(s, axis=-1, keepdims=True)
            p = jnp.exp(s)
            p = p / jnp.sum(p, axis=-1, keepdims=True)
            outs.append(jnp.einsum('bqk,bkd->bqd', p, v,
                                   preferred_element_type=jnp.float32))
        return jnp.concatenate(outs, axis=-1)                    # (Bb, Nq, C)

    # Template/memory tokens attend among themselves (x stream only).
    x_mt = attn(qkv[:B, :n_mt], qkv[:B, :n_mt])                  # (B, n_mt, C)
    # Search tokens of BOTH streams, stacked along batch -> one attention.
    x_s2 = attn(qkv[:, n_mt:], qkv)                              # (2B, n_s, C)

    # ---- output projection: both streams stacked -> one (2M, C) matmul -------
    pre = jnp.concatenate([
        jnp.concatenate([x_mt, x_s2[:B]], axis=1),               # x stream
        jnp.concatenate([x_mt, x_s2[B:]], axis=1),               # hsi stream
    ], axis=0).reshape(2 * M, C)

    wp = wp_ref[...].astype(jnp.float32)
    bp = bp_ref[...].astype(jnp.float32)
    proj = jnp.dot(pre, wp, preferred_element_type=jnp.float32) + bp

    out_ref[...] = proj[:M].reshape(B, N, C).astype(out_ref.dtype)
    outh_ref[...] = proj[M:].reshape(B, N, C).astype(outh_ref.dtype)


# ---------------------------- Parameter preparation ---------------------------
def prepare_params(params, num_heads):
    """One-time prep: keep the fused (C, 3C) qkv weight and fold the attention
    scale into its Q columns (qkv_bias=False, so the zero bias is dropped)."""
    C = params["w_proj"].shape[0]
    D = C // num_heads
    scale = float(D) ** -0.5
    w_qkv = params["w_qkv"]                      # (C, 3C), stored as (in, out)
    w_qkv_scaled = jnp.concatenate(
        [w_qkv[:, :C] * scale, w_qkv[:, C:]], axis=1)
    return {
        "w_qkv": w_qkv_scaled,
        "w_proj": params["w_proj"],
        "b_proj": params["b_proj"],
    }


# ------------------------------- Forward wrapper ------------------------------
def attention_forward(x, x_hsi, prepared, num_heads, t_h, t_w, s_h, s_w):
    B, N, C = x.shape
    n_mt = t_h * t_w * 2
    n_s = s_h * s_w
    assert N == n_mt + n_s
    assert C % num_heads == 0

    kernel = functools.partial(_fused_attention_kernel,
                               num_heads=num_heads, n_mt=n_mt)

    def full3(shape):
        return pl.BlockSpec(shape, lambda i: (0, 0, 0))

    def full2(shape):
        return pl.BlockSpec(shape, lambda i: (0, 0))

    out, out_hsi = pl.pallas_call(
        kernel,
        out_shape=(jax.ShapeDtypeStruct((B, N, C), x.dtype),
                   jax.ShapeDtypeStruct((B, N, C), x.dtype)),
        grid=(1,),
        in_specs=[
            full3((B, N, C)),            # x
            full3((B, N, C)),            # x_hsi
            full2((C, 3 * C)),           # fused w_qkv (scale folded into Q)
            full2((C, C)),               # w_proj
            full2((1, C)),               # b_proj
        ],
        out_specs=(full3((B, N, C)), full3((B, N, C))),
        compiler_params=pltpu.CompilerParams(
            dimension_semantics=("arbitrary",)),
    )(x, x_hsi, prepared["w_qkv"], prepared["w_proj"], prepared["b_proj"])
    return out, out_hsi


# -------------------------------- Pure-JAX ref --------------------------------
def reference_forward(x, x_hsi, params, num_heads, t_h, t_w, s_h, s_w):
    B, N, C = x.shape
    H = num_heads
    D = C // H
    scale = float(D) ** -0.5
    n_mt = t_h * t_w * 2

    def qkv_heads(inp):
        qkv = inp @ params["w_qkv"] + params["b_qkv"]
        qkv = qkv.reshape(B, N, 3, H, D).transpose(2, 0, 3, 1, 4)
        return qkv[0], qkv[1], qkv[2]

    def attn(q, k, v):
        s = jnp.einsum("bhqd,bhkd->bhqk", q, k) * scale
        p = jax.nn.softmax(s, axis=-1)
        return jnp.einsum("bhqk,bhkd->bhqd", p, v)

    q, k, v = qkv_heads(x)
    q_hsi, k_hsi, v_hsi = qkv_heads(x_hsi)

    x_mt = attn(q[:, :, :n_mt], k[:, :, :n_mt], v[:, :, :n_mt])
    x_s = attn(q[:, :, n_mt:], k, v)
    x_s_hsi = attn(q_hsi[:, :, n_mt:], k_hsi, v_hsi)

    x_mt = x_mt.transpose(0, 2, 1, 3).reshape(B, n_mt, C)
    x_s = x_s.transpose(0, 2, 1, 3).reshape(B, -1, C)
    x_s_hsi = x_s_hsi.transpose(0, 2, 1, 3).reshape(B, -1, C)

    out = jnp.concatenate([x_mt, x_s], axis=1) @ params["w_proj"] + params["b_proj"]
    out_hsi = jnp.concatenate([x_mt, x_s_hsi], axis=1) @ params["w_proj"] + params["b_proj"]
    return out, out_hsi


# ------------------------------------ Main ------------------------------------
if __name__ == "__main__":
    B = 2
    C = 32           # dim
    num_heads = 4    # head_dim = 8
    t_h = t_w = 2    # template tokens: t_h*t_w*2 = 8
    s_h = s_w = 4    # search tokens:   s_h*s_w   = 16
    N = t_h * t_w * 2 + s_h * s_w

    key = jax.random.PRNGKey(0)
    kx, kxh, kw1, kw2, kb2 = jax.random.split(key, 5)

    x = jax.random.normal(kx, (B, N, C), dtype=jnp.float32)
    x_hsi = jax.random.normal(kxh, (B, N, C), dtype=jnp.float32)

    # nn.Linear(dim, 3*dim, bias=False) and nn.Linear(dim, dim); weights stored
    # pre-transposed as (in, out) so kernels do x @ W.
    params = {
        "w_qkv": 0.05 * jax.random.normal(kw1, (C, 3 * C), dtype=jnp.float32),
        "b_qkv": jnp.zeros((1, 3 * C), dtype=jnp.float32),   # qkv_bias=False
        "w_proj": 0.05 * jax.random.normal(kw2, (C, C), dtype=jnp.float32),
        "b_proj": 0.01 * jax.random.normal(kb2, (1, C), dtype=jnp.float32),
    }

    prepared = prepare_params(params, num_heads)

    out, out_hsi = attention_forward(x, x_hsi, prepared, num_heads,
                                     t_h, t_w, s_h, s_w)
    jax.block_until_ready((out, out_hsi))

    ref, ref_hsi = reference_forward(x, x_hsi, params, num_heads,
                                     t_h, t_w, s_h, s_w)
    assert out.shape == (B, N, C) and out_hsi.shape == (B, N, C)
    assert jnp.allclose(out, ref, atol=1e-4, rtol=1e-4)
    assert jnp.allclose(out_hsi, ref_hsi, atol=1e-4, rtol=1e-4)

    print("KERNEL_OK")
</pallas_src>

<mosaic_0001>
module attributes {stable_mosaic.version = 11 : i64} {
  func.func @_fused_attention_kernel(%arg0: i32, %arg1: memref<2x24x32xf32, #tpu.memory_space<vmem>>, %arg2: memref<2x24x32xf32, #tpu.memory_space<vmem>>, %arg3: memref<32x96xf32, #tpu.memory_space<vmem>>, %arg4: memref<32x32xf32, #tpu.memory_space<vmem>>, %arg5: memref<1x32xf32, #tpu.memory_space<vmem>>, %arg6: memref<2x24x32xf32, #tpu.memory_space<vmem>>, %arg7: memref<2x24x32xf32, #tpu.memory_space<vmem>>) attributes {dimension_semantics = [#tpu.dimension_semantics<arbitrary>], iteration_bounds = array<i64: 1>, scalar_prefetch = 0 : i64, scratch_operands = 0 : i64, tpu.core_type = #tpu.core_type<tc>, window_params = [{pipeline_mode = #tpu.pipeline_mode<synchronous>, transform_indices = @transform_0, window_bounds = array<i64: 2, 24, 32>}, {pipeline_mode = #tpu.pipeline_mode<synchronous>, transform_indices = @transform_1, window_bounds = array<i64: 2, 24, 32>}, {pipeline_mode = #tpu.pipeline_mode<synchronous>, transform_indices = @transform_2, window_bounds = array<i64: 32, 96>}, {pipeline_mode = #tpu.pipeline_mode<synchronous>, transform_indices = @transform_3, window_bounds = array<i64: 32, 32>}, {pipeline_mode = #tpu.pipeline_mode<synchronous>, transform_indices = @transform_4, window_bounds = array<i64: 1, 32>}, {pipeline_mode = #tpu.pipeline_mode<synchronous>, transform_indices = @transform_5, window_bounds = array<i64: 2, 24, 32>}, {pipeline_mode = #tpu.pipeline_mode<synchronous>, transform_indices = @transform_6, window_bounds = array<i64: 2, 24, 32>}]} {
    %c0 = arith.constant 0 : index
    %c0_0 = arith.constant 0 : index
    %c0_1 = arith.constant 0 : index
    %0 = vector.load %arg1[%c0, %c0_0, %c0_1] : memref<2x24x32xf32, #tpu.memory_space<vmem>>, vector<2x24x32xf32>
    %1 = vector.shape_cast %0 : vector<2x24x32xf32> to vector<48x32xf32>
    %c0_2 = arith.constant 0 : index
    %c0_3 = arith.constant 0 : index
    %c0_4 = arith.constant 0 : index
    %2 = vector.load %arg2[%c0_2, %c0_3, %c0_4] : memref<2x24x32xf32, #tpu.memory_space<vmem>>, vector<2x24x32xf32>
    %3 = vector.shape_cast %2 : vector<2x24x32xf32> to vector<48x32xf32>
    %4 = tpu.concatenate %1, %3 in 0 : vector<48x32xf32>, vector<48x32xf32> -> vector<96x32xf32>
    %c0_5 = arith.constant 0 : index
    %c0_6 = arith.constant 0 : index
    %5 = vector.load %arg3[%c0_5, %c0_6] : memref<32x96xf32, #tpu.memory_space<vmem>>, vector<32x96xf32>
    %cst = arith.constant dense<0.000000e+00> : vector<96x96xf32>
    %6 = tpu.matmul %4, %5, %cst {dimension_numbers = #tpu.dot_dimension_numbers<[1], [0], [0], [1], [0, 0, 1, 1], [], []>} : vector<96x32xf32>, vector<32x96xf32>, vector<96x96xf32> -> vector<96x96xf32>
    %7 = vector.shape_cast %6 : vector<96x96xf32> to vector<4x24x96xf32>
    %8 = vector.extract_strided_slice %7 {offsets = [0, 0, 0], sizes = [2, 8, 96], strides = [1, 1, 1]} : vector<4x24x96xf32> to vector<2x8x96xf32>
    %9 = vector.extract_strided_slice %7 {offsets = [0, 0, 0], sizes = [2, 8, 96], strides = [1, 1, 1]} : vector<4x24x96xf32> to vector<2x8x96xf32>
    %10 = vector.extract_strided_slice %8 {offsets = [0, 0, 0], sizes = [2, 8, 8], strides = [1, 1, 1]} : vector<2x8x96xf32> to vector<2x8x8xf32>
    %11 = vector.extract_strided_slice %9 {offsets = [0, 0, 32], sizes = [2, 8, 8], strides = [1, 1, 1]} : vector<2x8x96xf32> to vector<2x8x8xf32>
    %12 = vector.extract_strided_slice %9 {offsets = [0, 0, 64], sizes = [2, 8, 8], strides = [1, 1, 1]} : vector<2x8x96xf32> to vector<2x8x8xf32>
    "tpu.trace_start"() <{level = 10 : i32, message = "bqd,bkd->bqk"}> : () -> ()
    %cst_7 = arith.constant dense<0.000000e+00> : vector<2x8x8xf32>
    %13 = tpu.matmul %10, %11, %cst_7 {dimension_numbers = #tpu.dot_dimension_numbers<[2], [2], [1], [1], [0, 0, 0, 1, 1, 1], [0], [0]>} : vector<2x8x8xf32>, vector<2x8x8xf32>, vector<2x8x8xf32> -> vector<2x8x8xf32>
    "tpu.trace_stop"() : () -> ()
    %cst_8 = arith.constant dense<0xFF800000> : vector<2x8xf32>
    %14 = vector.multi_reduction <maximumf>, %13, %cst_8 [2] : vector<2x8x8xf32> to vector<2x8xf32>
    %15 = vector.shape_cast %14 : vector<2x8xf32> to vector<2x8x1xf32>
    %16 = vector.broadcast %15 : vector<2x8x1xf32> to vector<2x8x8xf32>
    %17 = arith.subf %13, %16 : vector<2x8x8xf32>
    %18 = math.exp %17 : vector<2x8x8xf32>
    %cst_9 = arith.constant dense<0.000000e+00> : vector<2x8xf32>
    %19 = vector.multi_reduction <add>, %18, %cst_9 [2] : vector<2x8x8xf32> to vector<2x8xf32>
    %20 = vector.shape_cast %19 : vector<2x8xf32> to vector<2x8x1xf32>
    %21 = vector.broadcast %20 : vector<2x8x1xf32> to vector<2x8x8xf32>
    %22 = arith.divf %18, %21 : vector<2x8x8xf32>
    "tpu.trace_start"() <{level = 10 : i32, message = "bqk,bkd->bqd"}> : () -> ()
    %cst_10 = arith.constant dense<0.000000e+00> : vector<2x8x8xf32>
    %23 = tpu.matmul %22, %12, %cst_10 {dimension_numbers = #tpu.dot_dimension_numbers<[2], [1], [1], [2], [0, 0, 0, 1, 1, 2], [0], [0]>} : vector<2x8x8xf32>, vector<2x8x8xf32>, vector<2x8x8xf32> -> vector<2x8x8xf32>
    "tpu.trace_stop"() : () -> ()
    %24 = vector.extract_strided_slice %8 {offsets = [0, 0, 8], sizes = [2, 8, 8], strides = [1, 1, 1]} : vector<2x8x96xf32> to vector<2x8x8xf32>
    %25 = vector.extract_strided_slice %9 {offsets = [0, 0, 40], sizes = [2, 8, 8], strides = [1, 1, 1]} : vector<2x8x96xf32> to vector<2x8x8xf32>
    %26 = vector.extract_strided_slice %9 {offsets = [0, 0, 72], sizes = [2, 8, 8], strides = [1, 1, 1]} : vector<2x8x96xf32> to vector<2x8x8xf32>
    "tpu.trace_start"() <{level = 10 : i32, message = "bqd,bkd->bqk"}> : () -> ()
    %cst_11 = arith.constant dense<0.000000e+00> : vector<2x8x8xf32>
    %27 = tpu.matmul %24, %25, %cst_11 {dimension_numbers = #tpu.dot_dimension_numbers<[2], [2], [1], [1], [0, 0, 0, 1, 1, 1], [0], [0]>} : vector<2x8x8xf32>, vector<2x8x8xf32>, vector<2x8x8xf32> -> vector<2x8x8xf32>
    "tpu.trace_stop"() : () -> ()
    %cst_12 = arith.constant dense<0xFF800000> : vector<2x8xf32>
    %28 = vector.multi_reduction <maximumf>, %27, %cst_12 [2] : vector<2x8x8xf32> to vector<2x8xf32>
    %29 = vector.shape_cast %28 : vector<2x8xf32> to vector<2x8x1xf32>
    %30 = vector.broadcast %29 : vector<2x8x1xf32> to vector<2x8x8xf32>
    %31 = arith.subf %27, %30 : vector<2x8x8xf32>
    %32 = math.exp %31 : vector<2x8x8xf32>
    %cst_13 = arith.constant dense<0.000000e+00> : vector<2x8xf32>
    %33 = vector.multi_reduction <add>, %32, %cst_13 [2] : vector<2x8x8xf32> to vector<2x8xf32>
    %34 = vector.shape_cast %33 : vector<2x8xf32> to vector<2x8x1xf32>
    %35 = vector.broadcast %34 : vector<2x8x1xf32> to vector<2x8x8xf32>
    %36 = arith.divf %32, %35 : vector<2x8x8xf32>
    "tpu.trace_start"() <{level = 10 : i32, message = "bqk,bkd->bqd"}> : () -> ()
    %cst_14 = arith.constant dense<0.000000e+00> : vector<2x8x8xf32>
    %37 = tpu.matmul %36, %26, %cst_14 {dimension_numbers = #tpu.dot_dimension_numbers<[2], [1], [1], [2], [0, 0, 0, 1, 1, 2], [0], [0]>} : vector<2x8x8xf32>, vector<2x8x8xf32>, vector<2x8x8xf32> -> vector<2x8x8xf32>
    "tpu.trace_stop"() : () -> ()
    %38 = vector.extract_strided_slice %8 {offsets = [0, 0, 16], sizes = [2, 8, 8], strides = [1, 1, 1]} : vector<2x8x96xf32> to vector<2x8x8xf32>
    %39 = vector.extract_strided_slice %9 {offsets = [0, 0, 48], sizes = [2, 8, 8], strides = [1, 1, 1]} : vector<2x8x96xf32> to vector<2x8x8xf32>
    %40 = vector.extract_strided_slice %9 {offsets = [0, 0, 80], sizes = [2, 8, 8], strides = [1, 1, 1]} : vector<2x8x96xf32> to vector<2x8x8xf32>
    "tpu.trace_start"() <{level = 10 : i32, message = "bqd,bkd->bqk"}> : () -> ()
    %cst_15 = arith.constant dense<0.000000e+00> : vector<2x8x8xf32>
    %41 = tpu.matmul %38, %39, %cst_15 {dimension_numbers = #tpu.dot_dimension_numbers<[2], [2], [1], [1], [0, 0, 0, 1, 1, 1], [0], [0]>} : vector<2x8x8xf32>, vector<2x8x8xf32>, vector<2x8x8xf32> -> vector<2x8x8xf32>
    "tpu.trace_stop"() : () -> ()
    %cst_16 = arith.constant dense<0xFF800000> : vector<2x8xf32>
    %42 = vector.multi_reduction <maximumf>, %41, %cst_16 [2] : vector<2x8x8xf32> to vector<2x8xf32>
    %43 = vector.shape_cast %42 : vector<2x8xf32> to vector<2x8x1xf32>
    %44 = vector.broadcast %43 : vector<2x8x1xf32> to vector<2x8x8xf32>
    %45 = arith.subf %41, %44 : vector<2x8x8xf32>
    %46 = math.exp %45 : vector<2x8x8xf32>
    %cst_17 = arith.constant dense<0.000000e+00> : vector<2x8xf32>
    %47 = vector.multi_reduction <add>, %46, %cst_17 [2] : vector<2x8x8xf32> to vector<2x8xf32>
    %48 = vector.shape_cast %47 : vector<2x8xf32> to vector<2x8x1xf32>
    %49 = vector.broadcast %48 : vector<2x8x1xf32> to vector<2x8x8xf32>
    %50 = arith.divf %46, %49 : vector<2x8x8xf32>
    "tpu.trace_start"() <{level = 10 : i32, message = "bqk,bkd->bqd"}> : () -> ()
    %cst_18 = arith.constant dense<0.000000e+00> : vector<2x8x8xf32>
    %51 = tpu.matmul %50, %40, %cst_18 {dimension_numbers = #tpu.dot_dimension_numbers<[2], [1], [1], [2], [0, 0, 0, 1, 1, 2], [0], [0]>} : vector<2x8x8xf32>, vector<2x8x8xf32>, vector<2x8x8xf32> -> vector<2x8x8xf32>
    "tpu.trace_stop"() : () -> ()
    %52 = vector.extract_strided_slice %8 {offsets = [0, 0, 24], sizes = [2, 8, 8], strides = [1, 1, 1]} : vector<2x8x96xf32> to vector<2x8x8xf32>
    %53 = vector.extract_strided_slice %9 {offsets = [0, 0, 56], sizes = [2, 8, 8], strides = [1, 1, 1]} : vector<2x8x96xf32> to vector<2x8x8xf32>
    %54 = vector.extract_strided_slice %9 {offsets = [0, 0, 88], sizes = [2, 8, 8], strides = [1, 1, 1]} : vector<2x8x96xf32> to vector<2x8x8xf32>
    "tpu.trace_start"() <{level = 10 : i32, message = "bqd,bkd->bqk"}> : () -> ()
    %cst_19 = arith.constant dense<0.000000e+00> : vector<2x8x8xf32>
    %55 = tpu.matmul %52, %53, %cst_19 {dimension_numbers = #tpu.dot_dimension_numbers<[2], [2], [1], [1], [0, 0, 0, 1, 1, 1], [0], [0]>} : vector<2x8x8xf32>, vector<2x8x8xf32>, vector<2x8x8xf32> -> vector<2x8x8xf32>
    "tpu.trace_stop"() : () -> ()
    %cst_20 = arith.constant dense<0xFF800000> : vector<2x8xf32>
    %56 = vector.multi_reduction <maximumf>, %55, %cst_20 [2] : vector<2x8x8xf32> to vector<2x8xf32>
    %57 = vector.shape_cast %56 : vector<2x8xf32> to vector<2x8x1xf32>
    %58 = vector.broadcast %57 : vector<2x8x1xf32> to vector<2x8x8xf32>
    %59 = arith.subf %55, %58 : vector<2x8x8xf32>
    %60 = math.exp %59 : vector<2x8x8xf32>
    %cst_21 = arith.constant dense<0.000000e+00> : vector<2x8xf32>
    %61 = vector.multi_reduction <add>, %60, %cst_21 [2] : vector<2x8x8xf32> to vector<2x8xf32>
    %62 = vector.shape_cast %61 : vector<2x8xf32> to vector<2x8x1xf32>
    %63 = vector.broadcast %62 : vector<2x8x1xf32> to vector<2x8x8xf32>
    %64 = arith.divf %60, %63 : vector<2x8x8xf32>
    "tpu.trace_start"() <{level = 10 : i32, message = "bqk,bkd->bqd"}> : () -> ()
    %cst_22 = arith.constant dense<0.000000e+00> : vector<2x8x8xf32>
    %65 = tpu.matmul %64, %54, %cst_22 {dimension_numbers = #tpu.dot_dimension_numbers<[2], [1], [1], [2], [0, 0, 0, 1, 1, 2], [0], [0]>} : vector<2x8x8xf32>, vector<2x8x8xf32>, vector<2x8x8xf32> -> vector<2x8x8xf32>
    "tpu.trace_stop"() : () -> ()
    %66 = tpu.concatenate %23, %37, %51, %65 in 2 : vector<2x8x8xf32>, vector<2x8x8xf32>, vector<2x8x8xf32>, vector<2x8x8xf32> -> vector<2x8x32xf32>
    %67 = vector.extract_strided_slice %7 {offsets = [0, 8, 0], sizes = [4, 16, 96], strides = [1, 1, 1]} : vector<4x24x96xf32> to vector<4x16x96xf32>
    %68 = vector.extract_strided_slice %67 {offsets = [0, 0, 0], sizes = [4, 16, 8], strides = [1, 1, 1]} : vector<4x16x96xf32> to vector<4x16x8xf32>
    %69 = vector.extract_strided_slice %7 {offsets = [0, 0, 32], sizes = [4, 24, 8], strides = [1, 1, 1]} : vector<4x24x96xf32> to vector<4x24x8xf32>
    %70 = vector.extract_strided_slice %7 {offsets = [0, 0, 64], sizes = [4, 24, 8], strides = [1, 1, 1]} : vector<4x24x96xf32> to vector<4x24x8xf32>
    "tpu.trace_start"() <{level = 10 : i32, message = "bqd,bkd->bqk"}> : () -> ()
    %cst_23 = arith.constant dense<0.000000e+00> : vector<4x16x24xf32>
    %71 = tpu.matmul %68, %69, %cst_23 {dimension_numbers = #tpu.dot_dimension_numbers<[2], [2], [1], [1], [0, 0, 0, 1, 1, 1], [0], [0]>} : vector<4x16x8xf32>, vector<4x24x8xf32>, vector<4x16x24xf32> -> vector<4x16x24xf32>
    "tpu.trace_stop"() : () -> ()
    %cst_24 = arith.constant dense<0xFF800000> : vector<4x16xf32>
    %72 = vector.multi_reduction <maximumf>, %71, %cst_24 [2] : vector<4x16x24xf32> to vector<4x16xf32>
    %73 = vector.shape_cast %72 : vector<4x16xf32> to vector<4x16x1xf32>
    %74 = vector.broadcast %73 : vector<4x16x1xf32> to vector<4x16x24xf32>
    %75 = arith.subf %71, %74 : vector<4x16x24xf32>
    %76 = math.exp %75 : vector<4x16x24xf32>
    %cst_25 = arith.constant dense<0.000000e+00> : vector<4x16xf32>
    %77 = vector.multi_reduction <add>, %76, %cst_25 [2] : vector<4x16x24xf32> to vector<4x16xf32>
    %78 = vector.shape_cast %77 : vector<4x16xf32> to vector<4x16x1xf32>
    %79 = vector.broadcast %78 : vector<4x16x1xf32> to vector<4x16x24xf32>
    %80 = arith.divf %76, %79 : vector<4x16x24xf32>
    "tpu.trace_start"() <{level = 10 : i32, message = "bqk,bkd->bqd"}> : () -> ()
    %cst_26 = arith.constant dense<0.000000e+00> : vector<4x16x8xf32>
    %81 = tpu.matmul %80, %70, %cst_26 {dimension_numbers = #tpu.dot_dimension_numbers<[2], [1], [1], [2], [0, 0, 0, 1, 1, 2], [0], [0]>} : vector<4x16x24xf32>, vector<4x24x8xf32>, vector<4x16x8xf32> -> vector<4x16x8xf32>
    "tpu.trace_stop"() : () -> ()
    %82 = vector.extract_strided_slice %67 {offsets = [0, 0, 8], sizes = [4, 16, 8], strides = [1, 1, 1]} : vector<4x16x96xf32> to vector<4x16x8xf32>
    %83 = vector.extract_strided_slice %7 {offsets = [0, 0, 40], sizes = [4, 24, 8], strides = [1, 1, 1]} : vector<4x24x96xf32> to vector<4x24x8xf32>
    %84 = vector.extract_strided_slice %7 {offsets = [0, 0, 72], sizes = [4, 24, 8], strides = [1, 1, 1]} : vector<4x24x96xf32> to vector<4x24x8xf32>
    "tpu.trace_start"() <{level = 10 : i32, message = "bqd,bkd->bqk"}> : () -> ()
    %cst_27 = arith.constant dense<0.000000e+00> : vector<4x16x24xf32>
    %85 = tpu.matmul %82, %83, %cst_27 {dimension_numbers = #tpu.dot_dimension_numbers<[2], [2], [1], [1], [0, 0, 0, 1, 1, 1], [0], [0]>} : vector<4x16x8xf32>, vector<4x24x8xf32>, vector<4x16x24xf32> -> vector<4x16x24xf32>
    "tpu.trace_stop"() : () -> ()
    %cst_28 = arith.constant dense<0xFF800000> : vector<4x16xf32>
    %86 = vector.multi_reduction <maximumf>, %85, %cst_28 [2] : vector<4x16x24xf32> to vector<4x16xf32>
    %87 = vector.shape_cast %86 : vector<4x16xf32> to vector<4x16x1xf32>
    %88 = vector.broadcast %87 : vector<4x16x1xf32> to vector<4x16x24xf32>
    %89 = arith.subf %85, %88 : vector<4x16x24xf32>
    %90 = math.exp %89 : vector<4x16x24xf32>
    %cst_29 = arith.constant dense<0.000000e+00> : vector<4x16xf32>
    %91 = vector.multi_reduction <add>, %90, %cst_29 [2] : vector<4x16x24xf32> to vector<4x16xf32>
    %92 = vector.shape_cast %91 : vector<4x16xf32> to vector<4x16x1xf32>
    %93 = vector.broadcast %92 : vector<4x16x1xf32> to vector<4x16x24xf32>
    %94 = arith.divf %90, %93 : vector<4x16x24xf32>
    "tpu.trace_start"() <{level = 10 : i32, message = "bqk,bkd->bqd"}> : () -> ()
    %cst_30 = arith.constant dense<0.000000e+00> : vector<4x16x8xf32>
    %95 = tpu.matmul %94, %84, %cst_30 {dimension_numbers = #tpu.dot_dimension_numbers<[2], [1], [1], [2], [0, 0, 0, 1, 1, 2], [0], [0]>} : vector<4x16x24xf32>, vector<4x24x8xf32>, vector<4x16x8xf32> -> vector<4x16x8xf32>
    "tpu.trace_stop"() : () -> ()
    %96 = vector.extract_strided_slice %67 {offsets = [0, 0, 16], sizes = [4, 16, 8], strides = [1, 1, 1]} : vector<4x16x96xf32> to vector<4x16x8xf32>
    %97 = vector.extract_strided_slice %7 {offsets = [0, 0, 48], sizes = [4, 24, 8], strides = [1, 1, 1]} : vector<4x24x96xf32> to vector<4x24x8xf32>
    %98 = vector.extract_strided_slice %7 {offsets = [0, 0, 80], sizes = [4, 24, 8], strides = [1, 1, 1]} : vector<4x24x96xf32> to vector<4x24x8xf32>
    "tpu.trace_start"() <{level = 10 : i32, message = "bqd,bkd->bqk"}> : () -> ()
    %cst_31 = arith.constant dense<0.000000e+00> : vector<4x16x24xf32>
    %99 = tpu.matmul %96, %97, %cst_31 {dimension_numbers = #tpu.dot_dimension_numbers<[2], [2], [1], [1], [0, 0, 0, 1, 1, 1], [0], [0]>} : vector<4x16x8xf32>, vector<4x24x8xf32>, vector<4x16x24xf32> -> vector<4x16x24xf32>
    "tpu.trace_stop"() : () -> ()
    %cst_32 = arith.constant dense<0xFF800000> : vector<4x16xf32>
    %100 = vector.multi_reduction <maximumf>, %99, %cst_32 [2] : vector<4x16x24xf32> to vector<4x16xf32>
    %101 = vector.shape_cast %100 : vector<4x16xf32> to vector<4x16x1xf32>
    %102 = vector.broadcast %101 : vector<4x16x1xf32> to vector<4x16x24xf32>
    %103 = arith.subf %99, %102 : vector<4x16x24xf32>
    %104 = math.exp %103 : vector<4x16x24xf32>
    %cst_33 = arith.constant dense<0.000000e+00> : vector<4x16xf32>
    %105 = vector.multi_reduction <add>, %104, %cst_33 [2] : vector<4x16x24xf32> to vector<4x16xf32>
    %106 = vector.shape_cast %105 : vector<4x16xf32> to vector<4x16x1xf32>
    %107 = vector.broadcast %106 : vector<4x16x1xf32> to vector<4x16x24xf32>
    %108 = arith.divf %104, %107 : vector<4x16x24xf32>
    "tpu.trace_start"() <{level = 10 : i32, message = "bqk,bkd->bqd"}> : () -> ()
    %cst_34 = arith.constant dense<0.000000e+00> : vector<4x16x8xf32>
    %109 = tpu.matmul %108, %98, %cst_34 {dimension_numbers = #tpu.dot_dimension_numbers<[2], [1], [1], [2], [0, 0, 0, 1, 1, 2], [0], [0]>} : vector<4x16x24xf32>, vector<4x24x8xf32>, vector<4x16x8xf32> -> vector<4x16x8xf32>
    "tpu.trace_stop"() : () -> ()
    %110 = vector.extract_strided_slice %67 {offsets = [0, 0, 24], sizes = [4, 16, 8], strides = [1, 1, 1]} : vector<4x16x96xf32> to vector<4x16x8xf32>
    %111 = vector.extract_strided_slice %7 {offsets = [0, 0, 56], sizes = [4, 24, 8], strides = [1, 1, 1]} : vector<4x24x96xf32> to vector<4x24x8xf32>
    %112 = vector.extract_strided_slice %7 {offsets = [0, 0, 88], sizes = [4, 24, 8], strides = [1, 1, 1]} : vector<4x24x96xf32> to vector<4x24x8xf32>
    "tpu.trace_start"() <{level = 10 : i32, message = "bqd,bkd->bqk"}> : () -> ()
    %cst_35 = arith.constant dense<0.000000e+00> : vector<4x16x24xf32>
    %113 = tpu.matmul %110, %111, %cst_35 {dimension_numbers = #tpu.dot_dimension_numbers<[2], [2], [1], [1], [0, 0, 0, 1, 1, 1], [0], [0]>} : vector<4x16x8xf32>, vector<4x24x8xf32>, vector<4x16x24xf32> -> vector<4x16x24xf32>
    "tpu.trace_stop"() : () -> ()
    %cst_36 = arith.constant dense<0xFF800000> : vector<4x16xf32>
    %114 = vector.multi_reduction <maximumf>, %113, %cst_36 [2] : vector<4x16x24xf32> to vector<4x16xf32>
    %115 = vector.shape_cast %114 : vector<4x16xf32> to vector<4x16x1xf32>
    %116 = vector.broadcast %115 : vector<4x16x1xf32> to vector<4x16x24xf32>
    %117 = arith.subf %113, %116 : vector<4x16x24xf32>
    %118 = math.exp %117 : vector<4x16x24xf32>
    %cst_37 = arith.constant dense<0.000000e+00> : vector<4x16xf32>
    %119 = vector.multi_reduction <add>, %118, %cst_37 [2] : vector<4x16x24xf32> to vector<4x16xf32>
    %120 = vector.shape_cast %119 : vector<4x16xf32> to vector<4x16x1xf32>
    %121 = vector.broadcast %120 : vector<4x16x1xf32> to vector<4x16x24xf32>
    %122 = arith.divf %118, %121 : vector<4x16x24xf32>
    "tpu.trace_start"() <{level = 10 : i32, message = "bqk,bkd->bqd"}> : () -> ()
    %cst_38 = arith.constant dense<0.000000e+00> : vector<4x16x8xf32>
    %123 = tpu.matmul %122, %112, %cst_38 {dimension_numbers = #tpu.dot_dimension_numbers<[2], [1], [1], [2], [0, 0, 0, 1, 1, 2], [0], [0]>} : vector<4x16x24xf32>, vector<4x24x8xf32>, vector<4x16x8xf32> -> vector<4x16x8xf32>
    "tpu.trace_stop"() : () -> ()
    %124 = tpu.concatenate %81, %95, %109, %123 in 2 : vector<4x16x8xf32>, vector<4x16x8xf32>, vector<4x16x8xf32>, vector<4x16x8xf32> -> vector<4x16x32xf32>
    %125 = vector.extract_strided_slice %124 {offsets = [0, 0, 0], sizes = [2, 16, 32], strides = [1, 1, 1]} : vector<4x16x32xf32> to vector<2x16x32xf32>
    %126 = tpu.concatenate %66, %125 in 1 : vector<2x8x32xf32>, vector<2x16x32xf32> -> vector<2x24x32xf32>
    %127 = vector.extract_strided_slice %124 {offsets = [2, 0, 0], sizes = [2, 16, 32], strides = [1, 1, 1]} : vector<4x16x32xf32> to vector<2x16x32xf32>
    %128 = tpu.concatenate %66, %127 in 1 : vector<2x8x32xf32>, vector<2x16x32xf32> -> vector<2x24x32xf32>
    %129 = tpu.concatenate %126, %128 in 0 : vector<2x24x32xf32>, vector<2x24x32xf32> -> vector<4x24x32xf32>
    %130 = vector.shape_cast %129 : vector<4x24x32xf32> to vector<96x32xf32>
    %c0_39 = arith.constant 0 : index
    %c0_40 = arith.constant 0 : index
    %131 = vector.load %arg4[%c0_39, %c0_40] : memref<32x32xf32, #tpu.memory_space<vmem>>, vector<32x32xf32>
    %c0_41 = arith.constant 0 : index
    %c0_42 = arith.constant 0 : index
    %132 = vector.load %arg5[%c0_41, %c0_42] : memref<1x32xf32, #tpu.memory_space<vmem>>, vector<1x32xf32>
    %cst_43 = arith.constant dense<0.000000e+00> : vector<96x32xf32>
    %133 = tpu.matmul %130, %131, %cst_43 {dimension_numbers = #tpu.dot_dimension_numbers<[1], [0], [0], [1], [0, 0, 1, 1], [], []>} : vector<96x32xf32>, vector<32x32xf32>, vector<96x32xf32> -> vector<96x32xf32>
    %134 = vector.broadcast %132 : vector<1x32xf32> to vector<96x32xf32>
    %135 = arith.addf %133, %134 : vector<96x32xf32>
    %136 = vector.extract_strided_slice %135 {offsets = [0, 0], sizes = [48, 32], strides = [1, 1]} : vector<96x32xf32> to vector<48x32xf32>
    %137 = vector.shape_cast %136 : vector<48x32xf32> to vector<2x24x32xf32>
    %c0_44 = arith.constant 0 : index
    %c0_45 = arith.constant 0 : index
    %c0_46 = arith.constant 0 : index
    %138 = vector.load %arg6[%c0_44, %c0_45, %c0_46] : memref<2x24x32xf32, #tpu.memory_space<vmem>>, vector<2x24x32xf32>
    tpu.vector_store %arg6[%c0_44, %c0_45, %c0_46], %137 {strides = array<i32>} : memref<2x24x32xf32, #tpu.memory_space<vmem>>, vector<2x24x32xf32>,
    %139 = vector.extract_strided_slice %135 {offsets = [48, 0], sizes = [48, 32], strides = [1, 1]} : vector<96x32xf32> to vector<48x32xf32>
    %140 = vector.shape_cast %139 : vector<48x32xf32> to vector<2x24x32xf32>
    %c0_47 = arith.constant 0 : index
    %c0_48 = arith.constant 0 : index
    %c0_49 = arith.constant 0 : index
    %141 = vector.load %arg7[%c0_47, %c0_48, %c0_49] : memref<2x24x32xf32, #tpu.memory_space<vmem>>, vector<2x24x32xf32>
    tpu.vector_store %arg7[%c0_47, %c0_48, %c0_49], %140 {strides = array<i32>} : memref<2x24x32xf32, #tpu.memory_space<vmem>>, vector<2x24x32xf32>,
    return
  }
  func.func @transform_0(%arg0: i32) -> (i32, i32, i32) {
    %c0_i32 = arith.constant 0 : i32
    %c0_i32_0 = arith.constant 0 : i32
    %c0_i32_1 = arith.constant 0 : i32
    %c0_i32_2 = arith.constant 0 : i32
    return %c0_i32, %c0_i32_0, %c0_i32_1 : i32, i32, i32
  }
  func.func @transform_1(%arg0: i32) -> (i32, i32, i32) {
    %c0_i32 = arith.constant 0 : i32
    %c0_i32_0 = arith.constant 0 : i32
    %c0_i32_1 = arith.constant 0 : i32
    %c0_i32_2 = arith.constant 0 : i32
    return %c0_i32, %c0_i32_0, %c0_i32_1 : i32, i32, i32
  }
  func.func @transform_2(%arg0: i32) -> (i32, i32) {
    %c0_i32 = arith.constant 0 : i32
    %c0_i32_0 = arith.constant 0 : i32
    %c0_i32_1 = arith.constant 0 : i32
    return %c0_i32, %c0_i32_0 : i32, i32
  }
  func.func @transform_3(%arg0: i32) -> (i32, i32) {
    %c0_i32 = arith.constant 0 : i32
    %c0_i32_0 = arith.constant 0 : i32
    %c0_i32_1 = arith.constant 0 : i32
    return %c0_i32, %c0_i32_0 : i32, i32
  }
  func.func @transform_4(%arg0: i32) -> (i32, i32) {
    %c0_i32 = arith.constant 0 : i32
    %c0_i32_0 = arith.constant 0 : i32
    %c0_i32_1 = arith.constant 0 : i32
    return %c0_i32, %c0_i32_0 : i32, i32
  }
  func.func @transform_5(%arg0: i32) -> (i32, i32, i32) {
    %c0_i32 = arith.constant 0 : i32
    %c0_i32_0 = arith.constant 0 : i32
    %c0_i32_1 = arith.constant 0 : i32
    %c0_i32_2 = arith.constant 0 : i32
    return %c0_i32, %c0_i32_0, %c0_i32_1 : i32, i32, i32
  }
  func.func @transform_6(%arg0: i32) -> (i32, i32, i32) {
    %c0_i32 = arith.constant 0 : i32
    %c0_i32_0 = arith.constant 0 : i32
    %c0_i32_1 = arith.constant 0 : i32
    %c0_i32_2 = arith.constant 0 : i32
    return %c0_i32, %c0_i32_0, %c0_i32_1 : i32, i32, i32
  }
}

</mosaic_0001>

<llo_original>
// kernel: tpu_custom_call.1
$region0: #{tpu_custom_call.1}
  #allocation0 [shape = 'u32[]', space=smem, size = 0x4, offset = 0x4, fixed_abs, tag = 'smem constant byte address 0x4 - core index']
  #allocation1 [shape = 'u32[72,128]{1,0:T(1,128)}', space=vmem, size = 0x9000, scoped, tag = 'internal scratch']
  %s0 = inlined_call_operand.hbm [shape: f32[2,24,32], index: 0, kind: input, shape index: {}]
  %s1 = inlined_call_operand.hbm [shape: f32[2,24,32], index: 1, kind: input, shape index: {}]
  %s2 = inlined_call_operand.hbm [shape: f32[32,96], index: 2, kind: input, shape index: {}]
  %s3 = inlined_call_operand.hbm [shape: f32[32,32], index: 3, kind: input, shape index: {}]
  %s4 = inlined_call_operand.vmem [shape: f32[1,32], index: 4, kind: input, shape index: {}]
  %s5 = inlined_call_operand.hbm [shape: f32[2,24,32], index: 5, kind: output, shape index: {0}]
  %s6 = inlined_call_operand.hbm [shape: f32[2,24,32], index: 6, kind: output, shape index: {1}]
  %7 = xla_tuple %s5, %s6
  %s8 = sld [smem:[#allocation0]]
  $region54: #{tpu_custom_call.1} parent=0
    _
  %s10 = ssub.s32 1, %s8
  %s11 = scalar_select 0, %s10, %s8
  $region1: #{tpu_custom_call.1} parent=0
    #allocation2 [shape = 'u8[24576]{0}', space=vmem, size = 0x6000, scoped, tag = 'input window, operand 0, single buffered']
    #allocation3 [shape = 's32[1]{0}', space=sflag, size = 0x4, scoped, tag = 'scoped memory for tpu_custom_call.1']
    #allocation4 [shape = 's32[1]{0}', space=sflag, size = 0x4, scoped, tag = 'scoped memory for tpu_custom_call.1']
    #allocation5 [shape = 'u8[24576]{0}', space=vmem, size = 0x6000, scoped, tag = 'input window, operand 1, single buffered']
    #allocation6 [shape = 's32[1]{0}', space=sflag, size = 0x4, scoped, tag = 'scoped memory for tpu_custom_call.1']
    #allocation7 [shape = 'u8[16384]{0}', space=vmem, size = 0x4000, scoped, tag = 'input window, operand 2, single buffered']
    #allocation8 [shape = 'u8[16384]{0}', space=vmem, size = 0x4000, scoped, tag = 'input window, operand 3, single buffered']
    #allocation9 [shape = 's32[1]{0}', space=sflag, size = 0x4, scoped, tag = 'scoped memory for tpu_custom_call.1']
    #allocation10 [shape = 'u8[24576]{0}', space=vmem, size = 0x6000, scoped, tag = 'output window, operand 0, single buffered']
    #allocation11 [shape = 'u8[24576]{0}', space=vmem, size = 0x6000, scoped, tag = 'output window, operand 1, single buffered']
    #allocation12 [shape = 's32[1]{0}', space=sflag, size = 0x4, scoped, tag = 'scoped memory for tpu_custom_call.1']
    %12 = vsyncpa [#allocation3], 0
    %13 = vsyncpa [#allocation6], 0
    %14 = vsyncpa [#allocation9], 0
    %15 = vsyncpa [#allocation4], 0
    %16 = vsyncpa [#allocation12], 0
    // Predicated region
    $region2: #{tpu_custom_call.1} parent=1 // pred_check
      _
    $region3: #{tpu_custom_call.1} parent=1 // pred_check_branch
      %18 = sbr.rel (0) target = $region5
    $region4: #{tpu_custom_call.1} parent=1 // pred_region
      %20 = vsyncadd [#allocation3], 0
      %s21 = sshll.u32 %s0, 4
      %s22 = int_to_ptr.hbm [resolvable:$true] %s21
      %s23 = sshll.u32 [#allocation2], 4
      %s24 = int_to_ptr.vmem [resolvable:$true] %s23
      %29 = dma.hbm_to_vmem [thread:$0]  %s22, 768, %s24, [#allocation3], 128, 128, 8
    $region5: #{tpu_custom_call.1} parent=1 // pred_fallthru
      _
    // Predicated region
    $region6: #{tpu_custom_call.1} parent=1 // pred_check
      _
    $region7: #{tpu_custom_call.1} parent=1 // pred_check_branch
      %31 = sbr.rel (0) target = $region9
    $region8: #{tpu_custom_call.1} parent=1 // pred_region
      %33 = vsyncadd [#allocation6], 0
      %s34 = sshll.u32 %s1, 4
      %s35 = int_to_ptr.hbm [resolvable:$true] %s34
      %s36 = sshll.u32 [#allocation5], 4
      %s37 = int_to_ptr.vmem [resolvable:$true] %s36
      %42 = dma.hbm_to_vmem [thread:$0]  %s35, 768, %s37, [#allocation6], 128, 128, 8
    $region9: #{tpu_custom_call.1} parent=1 // pred_fallthru
      _
    // Predicated region
    $region10: #{tpu_custom_call.1} parent=1 // pred_check
      _
    $region11: #{tpu_custom_call.1} parent=1 // pred_check_branch
      %44 = sbr.rel (0) target = $region13
    $region12: #{tpu_custom_call.1} parent=1 // pred_region
      %46 = vsyncadd [#allocation6], 0
      %s47 = sshll.u32 %s2, 4
      %s48 = int_to_ptr.hbm [resolvable:$true] %s47
      %s49 = sshll.u32 [#allocation7], 4
      %s50 = int_to_ptr.vmem [resolvable:$true] %s49
      %55 = dma.hbm_to_vmem [thread:$0]  %s48, 512, %s50, [#allocation6], 128, 128, 8
    $region13: #{tpu_custom_call.1} parent=1 // pred_fallthru
      _
    // Predicated region
    $region14: #{tpu_custom_call.1} parent=1 // pred_check
      _
    $region15: #{tpu_custom_call.1} parent=1 // pred_check_branch
      %57 = sbr.rel (0) target = $region17
    $region16: #{tpu_custom_call.1} parent=1 // pred_region
      %59 = vsyncadd [#allocation9], 0
      %s60 = sshll.u32 %s3, 4
      %s61 = int_to_ptr.hbm [resolvable:$true] %s60
      %s62 = sshll.u32 [#allocation8], 4
      %s63 = int_to_ptr.vmem [resolvable:$true] %s62
      %68 = dma.hbm_to_vmem [thread:$0]  %s61, 512, %s63, [#allocation9], 128, 128, 8
    $region17: #{tpu_custom_call.1} parent=1 // pred_fallthru
      _
    // Predicated region
    $region18: #{tpu_custom_call.1} parent=1 // pred_check
      _
    $region19: #{tpu_custom_call.1} parent=1 // pred_check_branch
      %70 = sbr.rel (0) target = $region21
    $region20: #{tpu_custom_call.1} parent=1 // pred_region
      _
    $region21: #{tpu_custom_call.1} parent=1 // pred_fallthru
      _
    // Predicated region
    $region22: #{tpu_custom_call.1} parent=1 // pred_check
      _
    $region23: #{tpu_custom_call.1} parent=1 // pred_check_branch
      %72 = sbr.rel (0) target = $region25
    $region24: #{tpu_custom_call.1} parent=1 // pred_region
      %74 = dma.done [#allocation3], 768
    $region25: #{tpu_custom_call.1} parent=1 // pred_fallthru
      _
    // Predicated region
    $region26: #{tpu_custom_call.1} parent=1 // pred_check
      _
    $region27: #{tpu_custom_call.1} parent=1 // pred_check_branch
      %76 = sbr.rel (0) target = $region29
    $region28: #{tpu_custom_call.1} parent=1 // pred_region
      %78 = dma.done [#allocation6], 768
    $region29: #{tpu_custom_call.1} parent=1 // pred_fallthru
      _
    // Predicated region
    $region30: #{tpu_custom_call.1} parent=1 // pred_check
      _
    $region31: #{tpu_custom_call.1} parent=1 // pred_check_branch
      %80 = sbr.rel (0) target = $region33
    $region32: #{tpu_custom_call.1} parent=1 // pred_region
      %82 = dma.done [#allocation6], 512
    $region33: #{tpu_custom_call.1} parent=1 // pred_fallthru
      _
    // Predicated region
    $region34: #{tpu_custom_call.1} parent=1 // pred_check
      _
    $region35: #{tpu_custom_call.1} parent=1 // pred_check_branch
      %84 = sbr.rel (0) target = $region37
    $region36: #{tpu_custom_call.1} parent=1 // pred_region
      %86 = dma.done [#allocation9], 512
    $region37: #{tpu_custom_call.1} parent=1 // pred_fallthru
      _
    %v87 = vld [vmem:[#allocation2] sm:$0xff]
    %v88 = vld [vmem:[#allocation2 + $0x8] sm:$0xff]
    %v89 = vld [vmem:[#allocation2 + $0x10] sm:$0xff]
    %v90 = vld [vmem:[#allocation2 + $0x18] sm:$0xff]
    %v91 = vld [vmem:[#allocation2 + $0x20] sm:$0xff]
    %v92 = vld [vmem:[#allocation2 + $0x28] sm:$0xff]
    %v93 = vld [vmem:[#allocation5] sm:$0xff]
    %v94 = vld [vmem:[#allocation5 + $0x8] sm:$0xff]
    %v95 = vld [vmem:[#allocation5 + $0x10] sm:$0xff]
    %v96 = vld [vmem:[#allocation5 + $0x18] sm:$0xff]
    %v97 = vld [vmem:[#allocation5 + $0x20] sm:$0xff]
    %v98 = vld [vmem:[#allocation5 + $0x28] sm:$0xff]
    %v99 = vld [vmem:[#allocation7] sm:$0xff]
    %v100 = vld [vmem:[#allocation7 + $0x8] sm:$0xff]
    %v101 = vld [vmem:[#allocation7 + $0x10] sm:$0xff]
    %v102 = vld [vmem:[#allocation7 + $0x18] sm:$0xff]
    %vm103 = vcmask 261120
    %v105 = vsel %vm103, %v87, 0
    %v108 = vsel %vm103, %v88, 0
    %v111 = vsel %vm103, %v89, 0
    %v114 = vsel %vm103, %v90, 0
    %v117 = vsel %vm103, %v91, 0
    %v120 = vsel %vm103, %v92, 0
    %v123 = vsel %vm103, %v93, 0
    %v126 = vsel %vm103, %v94, 0
    %v129 = vsel %vm103, %v95, 0
    %v132 = vsel %vm103, %v96, 0
    %v135 = vsel %vm103, %v97, 0
    %v138 = vsel %vm103, %v98, 0
    %140 = vmatpush.msra.mxu0 0.0
    %141 = vmatpush.msra.mxu0 0.0
    %142 = vmatpush.msra.mxu0 0.0
    %143 = vmatpush.msra.mxu0 0.0
    %144 = vmatpush.msra.mxu0 0.0
    %145 = vmatpush.msra.mxu0 0.0
    %146 = vmatpush.msra.mxu0 0.0
    %147 = vmatpush.msra.mxu0 0.0
    %148 = vmatpush.msra.mxu0 0.0
    %149 = vmatpush.msra.mxu0 0.0
    %150 = vmatpush.msra.mxu0 0.0
    %151 = vmatpush.msra.mxu0 0.0
    %152 = vmatpush.msra.mxu0 %v102
    %153 = vmatpush.msra.mxu0 %v101
    %154 = vmatpush.msra.mxu0 %v100
    %155 = vmatpush.msra.mxu0 %v99
    %156 = vmatmul.f32.gmra.mxu0 %v105
    %v157 = vpop.f32.mrf.mxu0
    %v158 = vadd.f32 0.0, %v157
    %159 = vmatmul.f32.gmra.mxu0 %v108
    %v160 = vpop.f32.mrf.mxu0
    %v161 = vadd.f32 0.0, %v160
    %162 = vmatmul.f32.gmra.mxu0 %v111
    %v163 = vpop.f32.mrf.mxu0
    %v164 = vadd.f32 0.0, %v163
    %165 = vmatmul.f32.gmra.mxu0 %v114
    %v166 = vpop.f32.mrf.mxu0
    %v167 = vadd.f32 0.0, %v166
    %168 = vmatmul.f32.gmra.mxu0 %v117
    %v169 = vpop.f32.mrf.mxu0
    %v170 = vadd.f32 0.0, %v169
    %171 = vmatmul.f32.gmra.mxu0 %v120
    %v172 = vpop.f32.mrf.mxu0
    %v173 = vadd.f32 0.0, %v172
    %174 = vmatmul.f32.gmra.mxu0 %v123
    %v175 = vpop.f32.mrf.mxu0
    %v176 = vadd.f32 0.0, %v175
    %177 = vmatmul.f32.gmra.mxu0 %v126
    %v178 = vpop.f32.mrf.mxu0
    %v179 = vadd.f32 0.0, %v178
    %180 = vmatmul.f32.gmra.mxu0 %v129
    %v181 = vpop.f32.mrf.mxu0
    %v182 = vadd.f32 0.0, %v181
    %183 = vmatmul.f32.gmra.mxu0 %v132
    %v184 = vpop.f32.mrf.mxu0
    %v185 = vadd.f32 0.0, %v184
    %186 = vmatmul.f32.gmra.mxu0 %v135
    %v187 = vpop.f32.mrf.mxu0
    %v188 = vadd.f32 0.0, %v187
    %189 = vmatmul.f32.gmra.mxu0 %v138
    %v190 = vpop.f32.mrf.mxu0
    %v191 = vadd.f32 0.0, %v190
    %192 = vdwg.mxu0
    %194 = vrot.lane.b32.xlu0 %v158, 96
    %v195 = vpop.permute.xlu0 %194
    %vm196 = vcmask 64512
    %v197 = vsel %vm196, %v158, 0
    %v199 = vsel %vm196, %v195, 0
    %201 = vmatpush.xpose.msra.mxu0 0.0
    %202 = vmatpush.xpose.msra.mxu0 0.0
    %203 = vmatpush.xpose.msra.mxu0 0.0
    %204 = vmatpush.xpose.msra.mxu0 0.0
    %205 = vmatpush.xpose.msra.mxu0 0.0
    %206 = vmatpush.xpose.msra.mxu0 0.0
    %207 = vmatpush.xpose.msra.mxu0 0.0
    %208 = vmatpush.xpose.msra.mxu0 0.0
    %209 = vmatpush.xpose.msra.mxu0 0.0
    %210 = vmatpush.xpose.msra.mxu0 0.0
    %211 = vmatpush.xpose.msra.mxu0 0.0
    %212 = vmatpush.xpose.msra.mxu0 0.0
    %213 = vmatpush.xpose.msra.mxu0 0.0
    %214 = vmatpush.xpose.msra.mxu0 0.0
    %215 = vmatpush.xpose.msra.mxu0 0.0
    %216 = vmatpush.xpose.msra.mxu0 %v199
    %217 = vmatmul.f32.gmra.mxu0 %v197
    %v218 = vpop.f32.mrf.mxu0
    %v219 = vadd.f32 0.0, %v218
    %220 = vdwg.mxu0
    %222 = vrot.lane.b32.xlu0 %v167, 96
    %v223 = vpop.permute.xlu0 %222
    %v224 = vsel %vm196, %v167, 0
    %v226 = vsel %vm196, %v223, 0
    %228 = vmatpush.xpose.msra.mxu0 0.0
    %229 = vmatpush.xpose.msra.mxu0 0.0
    %230 = vmatpush.xpose.msra.mxu0 0.0
    %231 = vmatpush.xpose.msra.mxu0 0.0
    %232 = vmatpush.xpose.msra.mxu0 0.0
    %233 = vmatpush.xpose.msra.mxu0 0.0
    %234 = vmatpush.xpose.msra.mxu0 0.0
    %235 = vmatpush.xpose.msra.mxu0 0.0
    %236 = vmatpush.xpose.msra.mxu0 0.0
    %237 = vmatpush.xpose.msra.mxu0 0.0
    %238 = vmatpush.xpose.msra.mxu0 0.0
    %239 = vmatpush.xpose.msra.mxu0 0.0
    %240 = vmatpush.xpose.msra.mxu0 0.0
    %241 = vmatpush.xpose.msra.mxu0 0.0
    %242 = vmatpush.xpose.msra.mxu0 0.0
    %243 = vmatpush.xpose.msra.mxu0 %v226
    %244 = vmatmul.f32.gmra.mxu0 %v224
    %v245 = vpop.f32.mrf.mxu0
    %v246 = vadd.f32 0.0, %v245
    %247 = vdwg.mxu0
    %v248 = vsel %vm196, %v219, -inf
    %249 = vmax.xlane.f32.xlu0 %v248
    %v250 = vpop.xlane.xlu0 %249
    %v251 = vsel %vm196, %v246, -inf
    %252 = vmax.xlane.f32.xlu0 %v251
    %v253 = vpop.xlane.xlu0 %252
    %v254 = vsub.f32 %v219, %v250
    %v255 = vsub.f32 %v246, %v253
    %v256 = vmul.f32 %v254, 1.442695
    %v257 = vpow.pop %v256
    %v258 = vmul.f32 %v255, 1.442695
    %v259 = vpow.pop %v258
    %v260 = vsel %vm196, %v257, 0.0
    %261 = vadd.xlane.f32.xlu0 %v260
    %v262 = vpop.xlane.xlu0 %261
    %v263 = vsel %vm196, %v259, 0.0
    %264 = vadd.xlane.f32.xlu0 %v263
    %v265 = vpop.xlane.xlu0 %264
    %v266 = vrcp.pop %v262
    %v267 = vmul.f32 %v262, %v266
    %v268 = vsub.f32 1.0, %v267
    %v269 = vmul.f32 %v266, %v268
    %v270 = vadd.f32 %v266, %v269
    %vm271 = vweird.f32 %v262
    %vm272 = vweird.f32 %v266
    %vm273 = vmor %vm271, %vm272
    %v274 = vsel %vm273, %v266, %v270
    %v275 = vand.u32 2147483647, %v262
    %vm276 = vcmp.eq.f32.partialorder %v275, 8.507059e+37
    %v277 = vand.u32 %v262, 2147483648
    %v278 = vor.u32 1.1754944e-38, %v277
    %v279 = vsel %vm276, %v278, %v274
    %v280 = vmul.f32 %v257, %v279
    %v281 = vrcp.pop %v265
    %v282 = vmul.f32 %v265, %v281
    %v283 = vsub.f32 1.0, %v282
    %v284 = vmul.f32 %v281, %v283
    %v285 = vadd.f32 %v281, %v284
    %vm286 = vweird.f32 %v265
    %vm287 = vweird.f32 %v281
    %vm288 = vmor %vm286, %vm287
    %v289 = vsel %vm288, %v281, %v285
    %v290 = vand.u32 2147483647, %v265
    %vm291 = vcmp.eq.f32.partialorder %v290, 8.507059e+37
    %v292 = vand.u32 %v265, 2147483648
    %v293 = vor.u32 1.1754944e-38, %v292
    %v294 = vsel %vm291, %v293, %v289
    %v295 = vmul.f32 %v259, %v294
    %296 = vrot.lane.b32.xlu0 %v158, 64
    %v297 = vpop.permute.xlu0 %296
    %v300 = vsel %vm196, %v280, 0
    %302 = vmatpush.msra.mxu0 0.0
    %303 = vmatpush.msra.mxu0 0.0
    %304 = vmatpush.msra.mxu0 0.0
    %305 = vmatpush.msra.mxu0 0.0
    %306 = vmatpush.msra.mxu0 0.0
    %307 = vmatpush.msra.mxu0 0.0
    %308 = vmatpush.msra.mxu0 0.0
    %309 = vmatpush.msra.mxu0 0.0
    %310 = vmatpush.msra.mxu0 0.0
    %311 = vmatpush.msra.mxu0 0.0
    %312 = vmatpush.msra.mxu0 0.0
    %313 = vmatpush.msra.mxu0 0.0
    %314 = vmatpush.msra.mxu0 0.0
    %315 = vmatpush.msra.mxu0 0.0
    %316 = vmatpush.msra.mxu0 0.0
    %317 = vmatpush.msra.mxu0 %v297
    %318 = vmatmul.f32.gmra.mxu0 %v300
    %v319 = vpop.f32.mrf.mxu0
    %v320 = vadd.f32 0.0, %v319
    %321 = vdwg.mxu0
    %322 = vrot.lane.b32.xlu0 %v167, 64
    %v323 = vpop.permute.xlu0 %322
    %v326 = vsel %vm196, %v295, 0
    %328 = vmatpush.msra.mxu0 0.0
    %329 = vmatpush.msra.mxu0 0.0
    %330 = vmatpush.msra.mxu0 0.0
    %331 = vmatpush.msra.mxu0 0.0
    %332 = vmatpush.msra.mxu0 0.0
    %333 = vmatpush.msra.mxu0 0.0
    %334 = vmatpush.msra.mxu0 0.0
    %335 = vmatpush.msra.mxu0 0.0
    %336 = vmatpush.msra.mxu0 0.0
    %337 = vmatpush.msra.mxu0 0.0
    %338 = vmatpush.msra.mxu0 0.0
    %339 = vmatpush.msra.mxu0 0.0
    %340 = vmatpush.msra.mxu0 0.0
    %341 = vmatpush.msra.mxu0 0.0
    %342 = vmatpush.msra.mxu0 0.0
    %343 = vmatpush.msra.mxu0 %v323
    %344 = vmatmul.f32.gmra.mxu0 %v326
    %v345 = vpop.f32.mrf.mxu0
    %v346 = vadd.f32 0.0, %v345
    %347 = vdwg.mxu0
    %348 = vrot.lane.b32.xlu0 %v158, 120
    %v349 = vpop.permute.xlu0 %348
    %350 = vrot.lane.b32.xlu0 %v158, 88
    %v351 = vpop.permute.xlu0 %350
    %v352 = vsel %vm196, %v349, 0
    %v354 = vsel %vm196, %v351, 0
    %356 = vmatpush.xpose.msra.mxu0 0.0
    %357 = vmatpush.xpose.msra.mxu0 0.0
    %358 = vmatpush.xpose.msra.mxu0 0.0
    %359 = vmatpush.xpose.msra.mxu0 0.0
    %360 = vmatpush.xpose.msra.mxu0 0.0
    %361 = vmatpush.xpose.msra.mxu0 0.0
    %362 = vmatpush.xpose.msra.mxu0 0.0
    %363 = vmatpush.xpose.msra.mxu0 0.0
    %364 = vmatpush.xpose.msra.mxu0 0.0
    %365 = vmatpush.xpose.msra.mxu0 0.0
    %366 = vmatpush.xpose.msra.mxu0 0.0
    %367 = vmatpush.xpose.msra.mxu0 0.0
    %368 = vmatpush.xpose.msra.mxu0 0.0
    %369 = vmatpush.xpose.msra.mxu0 0.0
    %370 = vmatpush.xpose.msra.mxu0 0.0
    %371 = vmatpush.xpose.msra.mxu0 %v354
    %372 = vmatmul.f32.gmra.mxu0 %v352
    %v373 = vpop.f32.mrf.mxu0
    %v374 = vadd.f32 0.0, %v373
    %375 = vdwg.mxu0
    %376 = vrot.lane.b32.xlu0 %v167, 120
    %v377 = vpop.permute.xlu0 %376
    %378 = vrot.lane.b32.xlu0 %v167, 88
    %v379 = vpop.permute.xlu0 %378
    %v380 = vsel %vm196, %v377, 0
    %v382 = vsel %vm196, %v379, 0
    %384 = vmatpush.xpose.msra.mxu0 0.0
    %385 = vmatpush.xpose.msra.mxu0 0.0
    %386 = vmatpush.xpose.msra.mxu0 0.0
    %387 = vmatpush.xpose.msra.mxu0 0.0
    %388 = vmatpush.xpose.msra.mxu0 0.0
    %389 = vmatpush.xpose.msra.mxu0 0.0
    %390 = vmatpush.xpose.msra.mxu0 0.0
    %391 = vmatpush.xpose.msra.mxu0 0.0
    %392 = vmatpush.xpose.msra.mxu0 0.0
    %393 = vmatpush.xpose.msra.mxu0 0.0
    %394 = vmatpush.xpose.msra.mxu0 0.0
    %395 = vmatpush.xpose.msra.mxu0 0.0
    %396 = vmatpush.xpose.msra.mxu0 0.0
    %397 = vmatpush.xpose.msra.mxu0 0.0
    %398 = vmatpush.xpose.msra.mxu0 0.0
    %399 = vmatpush.xpose.msra.mxu0 %v382
    %400 = vmatmul.f32.gmra.mxu0 %v380
    %v401 = vpop.f32.mrf.mxu0
    %v402 = vadd.f32 0.0, %v401
    %403 = vdwg.mxu0
    %v404 = vsel %vm196, %v374, -inf
    %405 = vmax.xlane.f32.xlu0 %v404
    %v406 = vpop.xlane.xlu0 %405
    %v407 = vsel %vm196, %v402, -inf
    %408 = vmax.xlane.f32.xlu0 %v407
    %v409 = vpop.xlane.xlu0 %408
    %v410 = vsub.f32 %v374, %v406
    %v411 = vsub.f32 %v402, %v409
    %v412 = vmul.f32 %v410, 1.442695
    %v413 = vpow.pop %v412
    %v414 = vmul.f32 %v411, 1.442695
    %v415 = vpow.pop %v414
    %v416 = vsel %vm196, %v413, 0.0
    %417 = vadd.xlane.f32.xlu0 %v416
    %v418 = vpop.xlane.xlu0 %417
    %v419 = vsel %vm196, %v415, 0.0
    %420 = vadd.xlane.f32.xlu0 %v419
    %v421 = vpop.xlane.xlu0 %420
    %v422 = vrcp.pop %v418
    %v423 = vmul.f32 %v418, %v422
    %v424 = vsub.f32 1.0, %v423
    %v425 = vmul.f32 %v422, %v424
    %v426 = vadd.f32 %v422, %v425
    %vm427 = vweird.f32 %v418
    %vm428 = vweird.f32 %v422
    %vm429 = vmor %vm427, %vm428
    %v430 = vsel %vm429, %v422, %v426
    %v431 = vand.u32 2147483647, %v418
    %vm432 = vcmp.eq.f32.partialorder %v431, 8.507059e+37
    %v433 = vand.u32 %v418, 2147483648
    %v434 = vor.u32 1.1754944e-38, %v433
    %v435 = vsel %vm432, %v434, %v430
    %v436 = vmul.f32 %v413, %v435
    %v437 = vrcp.pop %v421
    %v438 = vmul.f32 %v421, %v437
    %v439 = vsub.f32 1.0, %v438
    %v440 = vmul.f32 %v437, %v439
    %v441 = vadd.f32 %v437, %v440
    %vm442 = vweird.f32 %v421
    %vm443 = vweird.f32 %v437
    %vm444 = vmor %vm442, %vm443
    %v445 = vsel %vm444, %v437, %v441
    %v446 = vand.u32 2147483647, %v421
    %vm447 = vcmp.eq.f32.partialorder %v446, 8.507059e+37
    %v448 = vand.u32 %v421, 2147483648
    %v449 = vor.u32 1.1754944e-38, %v448
    %v450 = vsel %vm447, %v449, %v445
    %v451 = vmul.f32 %v415, %v450
    %452 = vrot.lane.b32.xlu0 %v158, 56
    %v453 = vpop.permute.xlu0 %452
    %v456 = vsel %vm196, %v436, 0
    %458 = vmatpush.msra.mxu0 0.0
    %459 = vmatpush.msra.mxu0 0.0
    %460 = vmatpush.msra.mxu0 0.0
    %461 = vmatpush.msra.mxu0 0.0
    %462 = vmatpush.msra.mxu0 0.0
    %463 = vmatpush.msra.mxu0 0.0
    %464 = vmatpush.msra.mxu0 0.0
    %465 = vmatpush.msra.mxu0 0.0
    %466 = vmatpush.msra.mxu0 0.0
    %467 = vmatpush.msra.mxu0 0.0
    %468 = vmatpush.msra.mxu0 0.0
    %469 = vmatpush.msra.mxu0 0.0
    %470 = vmatpush.msra.mxu0 0.0
    %471 = vmatpush.msra.mxu0 0.0
    %472 = vmatpush.msra.mxu0 0.0
    %473 = vmatpush.msra.mxu0 %v453
    %474 = vmatmul.f32.gmra.mxu0 %v456
    %v475 = vpop.f32.mrf.mxu0
    %v476 = vadd.f32 0.0, %v475
    %477 = vdwg.mxu0
    %478 = vrot.lane.b32.xlu0 %v167, 56
    %v479 = vpop.permute.xlu0 %478
    %v482 = vsel %vm196, %v451, 0
    %484 = vmatpush.msra.mxu0 0.0
    %485 = vmatpush.msra.mxu0 0.0
    %486 = vmatpush.msra.mxu0 0.0
    %487 = vmatpush.msra.mxu0 0.0
    %488 = vmatpush.msra.mxu0 0.0
    %489 = vmatpush.msra.mxu0 0.0
    %490 = vmatpush.msra.mxu0 0.0
    %491 = vmatpush.msra.mxu0 0.0
    %492 = vmatpush.msra.mxu0 0.0
    %493 = vmatpush.msra.mxu0 0.0
    %494 = vmatpush.msra.mxu0 0.0
    %495 = vmatpush.msra.mxu0 0.0
    %496 = vmatpush.msra.mxu0 0.0
    %497 = vmatpush.msra.mxu0 0.0
    %498 = vmatpush.msra.mxu0 0.0
    %499 = vmatpush.msra.mxu0 %v479
    %500 = vmatmul.f32.gmra.mxu0 %v482
    %v501 = vpop.f32.mrf.mxu0
    %v502 = vadd.f32 0.0, %v501
    %503 = vdwg.mxu0
    %504 = vrot.lane.b32.xlu0 %v158, 112
    %v505 = vpop.permute.xlu0 %504
    %506 = vrot.lane.b32.xlu0 %v158, 80
    %v507 = vpop.permute.xlu0 %506
    %v508 = vsel %vm196, %v505, 0
    %v510 = vsel %vm196, %v507, 0
    %512 = vmatpush.xpose.msra.mxu0 0.0
    %513 = vmatpush.xpose.msra.mxu0 0.0
    %514 = vmatpush.xpose.msra.mxu0 0.0
    %515 = vmatpush.xpose.msra.mxu0 0.0
    %516 = vmatpush.xpose.msra.mxu0 0.0
    %517 = vmatpush.xpose.msra.mxu0 0.0
    %518 = vmatpush.xpose.msra.mxu0 0.0
    %519 = vmatpush.xpose.msra.mxu0 0.0
    %520 = vmatpush.xpose.msra.mxu0 0.0
    %521 = vmatpush.xpose.msra.mxu0 0.0
    %522 = vmatpush.xpose.msra.mxu0 0.0
    %523 = vmatpush.xpose.msra.mxu0 0.0
    %524 = vmatpush.xpose.msra.mxu0 0.0
    %525 = vmatpush.xpose.msra.mxu0 0.0
    %526 = vmatpush.xpose.msra.mxu0 0.0
    %527 = vmatpush.xpose.msra.mxu0 %v510
    %528 = vmatmul.f32.gmra.mxu0 %v508
    %v529 = vpop.f32.mrf.mxu0
    %v530 = vadd.f32 0.0, %v529
    %531 = vdwg.mxu0
    %532 = vrot.lane.b32.xlu0 %v167, 112
    %v533 = vpop.permute.xlu0 %532
    %534 = vrot.lane.b32.xlu0 %v167, 80
    %v535 = vpop.permute.xlu0 %534
    %v536 = vsel %vm196, %v533, 0
    %v538 = vsel %vm196, %v535, 0
    %540 = vmatpush.xpose.msra.mxu0 0.0
    %541 = vmatpush.xpose.msra.mxu0 0.0
    %542 = vmatpush.xpose.msra.mxu0 0.0
    %543 = vmatpush.xpose.msra.mxu0 0.0
    %544 = vmatpush.xpose.msra.mxu0 0.0
    %545 = vmatpush.xpose.msra.mxu0 0.0
    %546 = vmatpush.xpose.msra.mxu0 0.0
    %547 = vmatpush.xpose.msra.mxu0 0.0
    %548 = vmatpush.xpose.msra.mxu0 0.0
    %549 = vmatpush.xpose.msra.mxu0 0.0
    %550 = vmatpush.xpose.msra.mxu0 0.0
    %551 = vmatpush.xpose.msra.mxu0 0.0
    %552 = vmatpush.xpose.msra.mxu0 0.0
    %553 = vmatpush.xpose.msra.mxu0 0.0
    %554 = vmatpush.xpose.msra.mxu0 0.0
    %555 = vmatpush.xpose.msra.mxu0 %v538
    %556 = vmatmul.f32.gmra.mxu0 %v536
    %v557 = vpop.f32.mrf.mxu0
    %v558 = vadd.f32 0.0, %v557
    %559 = vdwg.mxu0
    %v560 = vsel %vm196, %v530, -inf
    %561 = vmax.xlane.f32.xlu0 %v560
    %v562 = vpop.xlane.xlu0 %561
    %v563 = vsel %vm196, %v558, -inf
    %564 = vmax.xlane.f32.xlu0 %v563
    %v565 = vpop.xlane.xlu0 %564
    %v566 = vsub.f32 %v530, %v562
    %v567 = vsub.f32 %v558, %v565
    %v568 = vmul.f32 %v566, 1.442695
    %v569 = vpow.pop %v568
    %v570 = vmul.f32 %v567, 1.442695
    %v571 = vpow.pop %v570
    %v572 = vsel %vm196, %v569, 0.0
    %573 = vadd.xlane.f32.xlu0 %v572
    %v574 = vpop.xlane.xlu0 %573
    %v575 = vsel %vm196, %v571, 0.0
    %576 = vadd.xlane.f32.xlu0 %v575
    %v577 = vpop.xlane.xlu0 %576
    %v578 = vrcp.pop %v574
    %v579 = vmul.f32 %v574, %v578
    %v580 = vsub.f32 1.0, %v579
    %v581 = vmul.f32 %v578, %v580
    %v582 = vadd.f32 %v578, %v581
    %vm583 = vweird.f32 %v574
    %vm584 = vweird.f32 %v578
    %vm585 = vmor %vm583, %vm584
    %v586 = vsel %vm585, %v578, %v582
    %v587 = vand.u32 2147483647, %v574
    %vm588 = vcmp.eq.f32.partialorder %v587, 8.507059e+37
    %v589 = vand.u32 %v574, 2147483648
    %v590 = vor.u32 1.1754944e-38, %v589
    %v591 = vsel %vm588, %v590, %v586
    %v592 = vmul.f32 %v569, %v591
    %v593 = vrcp.pop %v577
    %v594 = vmul.f32 %v577, %v593
    %v595 = vsub.f32 1.0, %v594
    %v596 = vmul.f32 %v593, %v595
    %v597 = vadd.f32 %v593, %v596
    %vm598 = vweird.f32 %v577
    %vm599 = vweird.f32 %v593
    %vm600 = vmor %vm598, %vm599
    %v601 = vsel %vm600, %v593, %v597
    %v602 = vand.u32 2147483647, %v577
    %vm603 = vcmp.eq.f32.partialorder %v602, 8.507059e+37
    %v604 = vand.u32 %v577, 2147483648
    %v605 = vor.u32 1.1754944e-38, %v604
    %v606 = vsel %vm603, %v605, %v601
    %v607 = vmul.f32 %v571, %v606
    %608 = vrot.lane.b32.xlu0 %v158, 48
    %v609 = vpop.permute.xlu0 %608
    %v612 = vsel %vm196, %v592, 0
    %614 = vmatpush.msra.mxu0 0.0
    %615 = vmatpush.msra.mxu0 0.0
    %616 = vmatpush.msra.mxu0 0.0
    %617 = vmatpush.msra.mxu0 0.0
    %618 = vmatpush.msra.mxu0 0.0
    %619 = vmatpush.msra.mxu0 0.0
    %620 = vmatpush.msra.mxu0 0.0
    %621 = vmatpush.msra.mxu0 0.0
    %622 = vmatpush.msra.mxu0 0.0
    %623 = vmatpush.msra.mxu0 0.0
    %624 = vmatpush.msra.mxu0 0.0
    %625 = vmatpush.msra.mxu0 0.0
    %626 = vmatpush.msra.mxu0 0.0
    %627 = vmatpush.msra.mxu0 0.0
    %628 = vmatpush.msra.mxu0 0.0
    %629 = vmatpush.msra.mxu0 %v609
    %630 = vmatmul.f32.gmra.mxu0 %v612
    %v631 = vpop.f32.mrf.mxu0
    %v632 = vadd.f32 0.0, %v631
    %633 = vdwg.mxu0
    %634 = vrot.lane.b32.xlu0 %v167, 48
    %v635 = vpop.permute.xlu0 %634
    %v638 = vsel %vm196, %v607, 0
    %640 = vmatpush.msra.mxu0 0.0
    %641 = vmatpush.msra.mxu0 0.0
    %642 = vmatpush.msra.mxu0 0.0
    %643 = vmatpush.msra.mxu0 0.0
    %644 = vmatpush.msra.mxu0 0.0
    %645 = vmatpush.msra.mxu0 0.0
    %646 = vmatpush.msra.mxu0 0.0
    %647 = vmatpush.msra.mxu0 0.0
    %648 = vmatpush.msra.mxu0 0.0
    %649 = vmatpush.msra.mxu0 0.0
    %650 = vmatpush.msra.mxu0 0.0
    %651 = vmatpush.msra.mxu0 0.0
    %652 = vmatpush.msra.mxu0 0.0
    %653 = vmatpush.msra.mxu0 0.0
    %654 = vmatpush.msra.mxu0 0.0
    %655 = vmatpush.msra.mxu0 %v635
    %656 = vmatmul.f32.gmra.mxu0 %v638
    %v657 = vpop.f32.mrf.mxu0
    %v658 = vadd.f32 0.0, %v657
    %659 = vdwg.mxu0
    %660 = vrot.lane.b32.xlu0 %v158, 104
    %v661 = vpop.permute.xlu0 %660
    %662 = vrot.lane.b32.xlu0 %v158, 72
    %v663 = vpop.permute.xlu0 %662
    %v664 = vsel %vm196, %v661, 0
    %v666 = vsel %vm196, %v663, 0
    %668 = vmatpush.xpose.msra.mxu0 0.0
    %669 = vmatpush.xpose.msra.mxu0 0.0
    %670 = vmatpush.xpose.msra.mxu0 0.0
    %671 = vmatpush.xpose.msra.mxu0 0.0
    %672 = vmatpush.xpose.msra.mxu0 0.0
    %673 = vmatpush.xpose.msra.mxu0 0.0
    %674 = vmatpush.xpose.msra.mxu0 0.0
    %675 = vmatpush.xpose.msra.mxu0 0.0
    %676 = vmatpush.xpose.msra.mxu0 0.0
    %677 = vmatpush.xpose.msra.mxu0 0.0
    %678 = vmatpush.xpose.msra.mxu0 0.0
    %679 = vmatpush.xpose.msra.mxu0 0.0
    %680 = vmatpush.xpose.msra.mxu0 0.0
    %681 = vmatpush.xpose.msra.mxu0 0.0
    %682 = vmatpush.xpose.msra.mxu0 0.0
    %683 = vmatpush.xpose.msra.mxu0 %v666
    %684 = vmatmul.f32.gmra.mxu0 %v664
    %v685 = vpop.f32.mrf.mxu0
    %v686 = vadd.f32 0.0, %v685
    %687 = vdwg.mxu0
    %688 = vrot.lane.b32.xlu0 %v167, 104
    %v689 = vpop.permute.xlu0 %688
    %690 = vrot.lane.b32.xlu0 %v167, 72
    %v691 = vpop.permute.xlu0 %690
    %v692 = vsel %vm196, %v689, 0
    %v694 = vsel %vm196, %v691, 0
    %696 = vmatpush.xpose.msra.mxu0 0.0
    %697 = vmatpush.xpose.msra.mxu0 0.0
    %698 = vmatpush.xpose.msra.mxu0 0.0
    %699 = vmatpush.xpose.msra.mxu0 0.0
    %700 = vmatpush.xpose.msra.mxu0 0.0
    %701 = vmatpush.xpose.msra.mxu0 0.0
    %702 = vmatpush.xpose.msra.mxu0 0.0
    %703 = vmatpush.xpose.msra.mxu0 0.0
    %704 = vmatpush.xpose.msra.mxu0 0.0
    %705 = vmatpush.xpose.msra.mxu0 0.0
    %706 = vmatpush.xpose.msra.mxu0 0.0
    %707 = vmatpush.xpose.msra.mxu0 0.0
    %708 = vmatpush.xpose.msra.mxu0 0.0
    %709 = vmatpush.xpose.msra.mxu0 0.0
    %710 = vmatpush.xpose.msra.mxu0 0.0
    %711 = vmatpush.xpose.msra.mxu0 %v694
    %712 = vmatmul.f32.gmra.mxu0 %v692
    %v713 = vpop.f32.mrf.mxu0
    %v714 = vadd.f32 0.0, %v713
    %715 = vdwg.mxu0
    %v716 = vsel %vm196, %v686, -inf
    %717 = vmax.xlane.f32.xlu0 %v716
    %v718 = vpop.xlane.xlu0 %717
    %v719 = vsel %vm196, %v714, -inf
    %720 = vmax.xlane.f32.xlu0 %v719
    %v721 = vpop.xlane.xlu0 %720
    %v722 = vsub.f32 %v686, %v718
    %v723 = vsub.f32 %v714, %v721
    %v724 = vmul.f32 %v722, 1.442695
    %v725 = vpow.pop %v724
    %v726 = vmul.f32 %v723, 1.442695
    %v727 = vpow.pop %v726
    %v728 = vsel %vm196, %v725, 0.0
    %729 = vadd.xlane.f32.xlu0 %v728
    %v730 = vpop.xlane.xlu0 %729
    %v731 = vsel %vm196, %v727, 0.0
    %732 = vadd.xlane.f32.xlu0 %v731
    %v733 = vpop.xlane.xlu0 %732
    %v734 = vrcp.pop %v730
    %v735 = vmul.f32 %v730, %v734
    %v736 = vsub.f32 1.0, %v735
    %v737 = vmul.f32 %v734, %v736
    %v738 = vadd.f32 %v734, %v737
    %vm739 = vweird.f32 %v730
    %vm740 = vweird.f32 %v734
    %vm741 = vmor %vm739, %vm740
    %v742 = vsel %vm741, %v734, %v738
    %v743 = vand.u32 2147483647, %v730
    %vm744 = vcmp.eq.f32.partialorder %v743, 8.507059e+37
    %v745 = vand.u32 %v730, 2147483648
    %v746 = vor.u32 1.1754944e-38, %v745
    %v747 = vsel %vm744, %v746, %v742
    %v748 = vmul.f32 %v725, %v747
    %v749 = vrcp.pop %v733
    %v750 = vmul.f32 %v733, %v749
    %v751 = vsub.f32 1.0, %v750
    %v752 = vmul.f32 %v749, %v751
    %v753 = vadd.f32 %v749, %v752
    %vm754 = vweird.f32 %v733
    %vm755 = vweird.f32 %v749
    %vm756 = vmor %vm754, %vm755
    %v757 = vsel %vm756, %v749, %v753
    %v758 = vand.u32 2147483647, %v733
    %vm759 = vcmp.eq.f32.partialorder %v758, 8.507059e+37
    %v760 = vand.u32 %v733, 2147483648
    %v761 = vor.u32 1.1754944e-38, %v760
    %v762 = vsel %vm759, %v761, %v757
    %v763 = vmul.f32 %v727, %v762
    %764 = vrot.lane.b32.xlu0 %v158, 40
    %v765 = vpop.permute.xlu0 %764
    %v768 = vsel %vm196, %v748, 0
    %770 = vmatpush.msra.mxu0 0.0
    %771 = vmatpush.msra.mxu0 0.0
    %772 = vmatpush.msra.mxu0 0.0
    %773 = vmatpush.msra.mxu0 0.0
    %774 = vmatpush.msra.mxu0 0.0
    %775 = vmatpush.msra.mxu0 0.0
    %776 = vmatpush.msra.mxu0 0.0
    %777 = vmatpush.msra.mxu0 0.0
    %778 = vmatpush.msra.mxu0 0.0
    %779 = vmatpush.msra.mxu0 0.0
    %780 = vmatpush.msra.mxu0 0.0
    %781 = vmatpush.msra.mxu0 0.0
    %782 = vmatpush.msra.mxu0 0.0
    %783 = vmatpush.msra.mxu0 0.0
    %784 = vmatpush.msra.mxu0 0.0
    %785 = vmatpush.msra.mxu0 %v765
    %786 = vmatmul.f32.gmra.mxu0 %v768
    %v787 = vpop.f32.mrf.mxu0
    %v788 = vadd.f32 0.0, %v787
    %789 = vdwg.mxu0
    %790 = vrot.lane.b32.xlu0 %v167, 40
    %v791 = vpop.permute.xlu0 %790
    %v794 = vsel %vm196, %v763, 0
    %796 = vmatpush.msra.mxu0 0.0
    %797 = vmatpush.msra.mxu0 0.0
    %798 = vmatpush.msra.mxu0 0.0
    %799 = vmatpush.msra.mxu0 0.0
    %800 = vmatpush.msra.mxu0 0.0
    %801 = vmatpush.msra.mxu0 0.0
    %802 = vmatpush.msra.mxu0 0.0
    %803 = vmatpush.msra.mxu0 0.0
    %804 = vmatpush.msra.mxu0 0.0
    %805 = vmatpush.msra.mxu0 0.0
    %806 = vmatpush.msra.mxu0 0.0
    %807 = vmatpush.msra.mxu0 0.0
    %808 = vmatpush.msra.mxu0 0.0
    %809 = vmatpush.msra.mxu0 0.0
    %810 = vmatpush.msra.mxu0 0.0
    %811 = vmatpush.msra.mxu0 %v791
    %812 = vmatmul.f32.gmra.mxu0 %v794
    %v813 = vpop.f32.mrf.mxu0
    %v814 = vadd.f32 0.0, %v813
    %815 = vdwg.mxu0
    %818 = vrot.lane.b32.xlu0 %v476, 8
    %v819 = vpop.permute.xlu0 %818
    %820 = vrot.lane.b32.xlu0 %v502, 8
    %v821 = vpop.permute.xlu0 %820
    %826 = vrot.lane.b32.xlu0 %v632, 16
    %v827 = vpop.permute.xlu0 %826
    %828 = vrot.lane.b32.xlu0 %v658, 16
    %v829 = vpop.permute.xlu0 %828
    %834 = vrot.lane.b32.xlu0 %v788, 24
    %v835 = vpop.permute.xlu0 %834
    %836 = vrot.lane.b32.xlu0 %v814, 24
    %v837 = vpop.permute.xlu0 %836
    %v840 = vsel %vm196, %v320, %v819
    %v841 = vsel %vm196, %v346, %v821
    %vm842 = vcmask 130048
    %v843 = vsel %vm842, %v840, %v827
    %v844 = vsel %vm842, %v841, %v829
    %vm845 = vcmask 195584
    %v846 = vsel %vm845, %v843, %v835
    %v847 = vsel %vm845, %v844, %v837
    %850 = vrot.lane.b32.xlu0 %v161, 96
    %v851 = vpop.permute.xlu0 %850
    %852 = vrot.lane.b32.xlu0 %v164, 96
    %v853 = vpop.permute.xlu0 %852
    %v854 = vsel %vm196, %v161, 0
    %v856 = vsel %vm196, %v164, 0
    %v858 = vsel %vm196, %v851, 0
    %v860 = vsel %vm196, %v853, 0
    %862 = vmatpush.xpose.msra.mxu0 0.0
    %863 = vmatpush.xpose.msra.mxu0 0.0
    %864 = vmatpush.xpose.msra.mxu0 0.0
    %865 = vmatpush.xpose.msra.mxu0 0.0
    %866 = vmatpush.xpose.msra.mxu0 0.0
    %867 = vmatpush.xpose.msra.mxu0 0.0
    %868 = vmatpush.xpose.msra.mxu0 0.0
    %869 = vmatpush.xpose.msra.mxu0 0.0
    %870 = vmatpush.xpose.msra.mxu0 0.0
    %871 = vmatpush.xpose.msra.mxu0 0.0
    %872 = vmatpush.xpose.msra.mxu0 0.0
    %873 = vmatpush.xpose.msra.mxu0 0.0
    %874 = vmatpush.xpose.msra.mxu0 0.0
    %875 = vmatpush.xpose.msra.mxu0 %v860
    %876 = vmatpush.xpose.msra.mxu0 %v858
    %877 = vmatpush.xpose.msra.mxu0 %v199
    %878 = vmatmul.f32.gmra.mxu0 %v854
    %v879 = vpop.f32.mrf.mxu0
    %v880 = vadd.f32 0.0, %v879
    %881 = vmatmul.f32.gmra.mxu0 %v856
    %v882 = vpop.f32.mrf.mxu0
    %v883 = vadd.f32 0.0, %v882
    %884 = vdwg.mxu0
    %887 = vrot.lane.b32.xlu0 %v170, 96
    %v888 = vpop.permute.xlu0 %887
    %889 = vrot.lane.b32.xlu0 %v173, 96
    %v890 = vpop.permute.xlu0 %889
    %v891 = vsel %vm196, %v170, 0
    %v893 = vsel %vm196, %v173, 0
    %v895 = vsel %vm196, %v888, 0
    %v897 = vsel %vm196, %v890, 0
    %899 = vmatpush.xpose.msra.mxu0 0.0
    %900 = vmatpush.xpose.msra.mxu0 0.0
    %901 = vmatpush.xpose.msra.mxu0 0.0
    %902 = vmatpush.xpose.msra.mxu0 0.0
    %903 = vmatpush.xpose.msra.mxu0 0.0
    %904 = vmatpush.xpose.msra.mxu0 0.0
    %905 = vmatpush.xpose.msra.mxu0 0.0
    %906 = vmatpush.xpose.msra.mxu0 0.0
    %907 = vmatpush.xpose.msra.mxu0 0.0
    %908 = vmatpush.xpose.msra.mxu0 0.0
    %909 = vmatpush.xpose.msra.mxu0 0.0
    %910 = vmatpush.xpose.msra.mxu0 0.0
    %911 = vmatpush.xpose.msra.mxu0 0.0
    %912 = vmatpush.xpose.msra.mxu0 %v897
    %913 = vmatpush.xpose.msra.mxu0 %v895
    %914 = vmatpush.xpose.msra.mxu0 %v226
    %915 = vmatmul.f32.gmra.mxu0 %v891
    %v916 = vpop.f32.mrf.mxu0
    %v917 = vadd.f32 0.0, %v916
    %918 = vmatmul.f32.gmra.mxu0 %v893
    %v919 = vpop.f32.mrf.mxu0
    %v920 = vadd.f32 0.0, %v919
    %921 = vdwg.mxu0
    %925 = vrot.lane.b32.xlu0 %v176, 96
    %v926 = vpop.permute.xlu0 %925
    %927 = vrot.lane.b32.xlu0 %v179, 96
    %v928 = vpop.permute.xlu0 %927
    %929 = vrot.lane.b32.xlu0 %v182, 96
    %v930 = vpop.permute.xlu0 %929
    %v931 = vsel %vm196, %v179, 0
    %v933 = vsel %vm196, %v182, 0
    %v935 = vsel %vm196, %v926, 0
    %v937 = vsel %vm196, %v928, 0
    %v939 = vsel %vm196, %v930, 0
    %941 = vmatpush.xpose.msra.mxu0 0.0
    %942 = vmatpush.xpose.msra.mxu0 0.0
    %943 = vmatpush.xpose.msra.mxu0 0.0
    %944 = vmatpush.xpose.msra.mxu0 0.0
    %945 = vmatpush.xpose.msra.mxu0 0.0
    %946 = vmatpush.xpose.msra.mxu0 0.0
    %947 = vmatpush.xpose.msra.mxu0 0.0
    %948 = vmatpush.xpose.msra.mxu0 0.0
    %949 = vmatpush.xpose.msra.mxu0 0.0
    %950 = vmatpush.xpose.msra.mxu0 0.0
    %951 = vmatpush.xpose.msra.mxu0 0.0
    %952 = vmatpush.xpose.msra.mxu0 0.0
    %953 = vmatpush.xpose.msra.mxu0 0.0
    %954 = vmatpush.xpose.msra.mxu0 %v939
    %955 = vmatpush.xpose.msra.mxu0 %v937
    %956 = vmatpush.xpose.msra.mxu0 %v935
    %957 = vmatmul.f32.gmra.mxu0 %v931
    %v958 = vpop.f32.mrf.mxu0
    %v959 = vadd.f32 0.0, %v958
    %960 = vmatmul.f32.gmra.mxu0 %v933
    %v961 = vpop.f32.mrf.mxu0
    %v962 = vadd.f32 0.0, %v961
    %963 = vdwg.mxu0
    %967 = vrot.lane.b32.xlu0 %v185, 96
    %v968 = vpop.permute.xlu0 %967
    %969 = vrot.lane.b32.xlu0 %v188, 96
    %v970 = vpop.permute.xlu0 %969
    %971 = vrot.lane.b32.xlu0 %v191, 96
    %v972 = vpop.permute.xlu0 %971
    %v973 = vsel %vm196, %v188, 0
    %v975 = vsel %vm196, %v191, 0
    %v977 = vsel %vm196, %v968, 0
    %v979 = vsel %vm196, %v970, 0
    %v981 = vsel %vm196, %v972, 0
    %983 = vmatpush.xpose.msra.mxu0 0.0
    %984 = vmatpush.xpose.msra.mxu0 0.0
    %985 = vmatpush.xpose.msra.mxu0 0.0
    %986 = vmatpush.xpose.msra.mxu0 0.0
    %987 = vmatpush.xpose.msra.mxu0 0.0
    %988 = vmatpush.xpose.msra.mxu0 0.0
    %989 = vmatpush.xpose.msra.mxu0 0.0
    %990 = vmatpush.xpose.msra.mxu0 0.0
    %991 = vmatpush.xpose.msra.mxu0 0.0
    %992 = vmatpush.xpose.msra.mxu0 0.0
    %993 = vmatpush.xpose.msra.mxu0 0.0
    %994 = vmatpush.xpose.msra.mxu0 0.0
    %995 = vmatpush.xpose.msra.mxu0 0.0
    %996 = vmatpush.xpose.msra.mxu0 %v981
    %997 = vmatpush.xpose.msra.mxu0 %v979
    %998 = vmatpush.xpose.msra.mxu0 %v977
    %999 = vmatmul.f32.gmra.mxu0 %v973
    %v1000 = vpop.f32.mrf.mxu0
    %v1001 = vadd.f32 0.0, %v1000
    %1002 = vmatmul.f32.gmra.mxu0 %v975
    %v1003 = vpop.f32.mrf.mxu0
    %v1004 = vadd.f32 0.0, %v1003
    %1005 = vdwg.mxu0
    %v1006 = vsel %vm845, %v880, -inf
    %1007 = vmax.xlane.f32.xlu0 %v1006
    %v1008 = vpop.xlane.xlu0 %1007
    %v1009 = vsel %vm845, %v883, -inf
    %1010 = vmax.xlane.f32.xlu0 %v1009
    %v1011 = vpop.xlane.xlu0 %1010
    %v1012 = vsel %vm845, %v917, -inf
    %1013 = vmax.xlane.f32.xlu0 %v1012
    %v1014 = vpop.xlane.xlu0 %1013
    %v1015 = vsel %vm845, %v920, -inf
    %1016 = vmax.xlane.f32.xlu0 %v1015
    %v1017 = vpop.xlane.xlu0 %1016
    %v1018 = vsel %vm845, %v959, -inf
    %1019 = vmax.xlane.f32.xlu0 %v1018
    %v1020 = vpop.xlane.xlu0 %1019
    %v1021 = vsel %vm845, %v962, -inf
    %1022 = vmax.xlane.f32.xlu0 %v1021
    %v1023 = vpop.xlane.xlu0 %1022
    %v1024 = vsel %vm845, %v1001, -inf
    %1025 = vmax.xlane.f32.xlu0 %v1024
    %v1026 = vpop.xlane.xlu0 %1025
    %v1027 = vsel %vm845, %v1004, -inf
    %1028 = vmax.xlane.f32.xlu0 %v1027
    %v1029 = vpop.xlane.xlu0 %1028
    %v1030 = vsub.f32 %v880, %v1008
    %v1031 = vsub.f32 %v883, %v1011
    %v1032 = vsub.f32 %v917, %v1014
    %v1033 = vsub.f32 %v920, %v1017
    %v1034 = vsub.f32 %v959, %v1020
    %v1035 = vsub.f32 %v962, %v1023
    %v1036 = vsub.f32 %v1001, %v1026
    %v1037 = vsub.f32 %v1004, %v1029
    %v1038 = vmul.f32 %v1030, 1.442695
    %v1039 = vpow.pop %v1038
    %v1040 = vmul.f32 %v1031, 1.442695
    %v1041 = vpow.pop %v1040
    %v1042 = vmul.f32 %v1032, 1.442695
    %v1043 = vpow.pop %v1042
    %v1044 = vmul.f32 %v1033, 1.442695
    %v1045 = vpow.pop %v1044
    %v1046 = vmul.f32 %v1034, 1.442695
    %v1047 = vpow.pop %v1046
    %v1048 = vmul.f32 %v1035, 1.442695
    %v1049 = vpow.pop %v1048
    %v1050 = vmul.f32 %v1036, 1.442695
    %v1051 = vpow.pop %v1050
    %v1052 = vmul.f32 %v1037, 1.442695
    %v1053 = vpow.pop %v1052
    %v1054 = vsel %vm845, %v1039, 0.0
    %1055 = vadd.xlane.f32.xlu0 %v1054
    %v1056 = vpop.xlane.xlu0 %1055
    %v1057 = vsel %vm845, %v1041, 0.0
    %1058 = vadd.xlane.f32.xlu0 %v1057
    %v1059 = vpop.xlane.xlu0 %1058
    %v1060 = vsel %vm845, %v1043, 0.0
    %1061 = vadd.xlane.f32.xlu0 %v1060
    %v1062 = vpop.xlane.xlu0 %1061
    %v1063 = vsel %vm845, %v1045, 0.0
    %1064 = vadd.xlane.f32.xlu0 %v1063
    %v1065 = vpop.xlane.xlu0 %1064
    %v1066 = vsel %vm845, %v1047, 0.0
    %1067 = vadd.xlane.f32.xlu0 %v1066
    %v1068 = vpop.xlane.xlu0 %1067
    %v1069 = vsel %vm845, %v1049, 0.0
    %1070 = vadd.xlane.f32.xlu0 %v1069
    %v1071 = vpop.xlane.xlu0 %1070
    %v1072 = vsel %vm845, %v1051, 0.0
    %1073 = vadd.xlane.f32.xlu0 %v1072
    %v1074 = vpop.xlane.xlu0 %1073
    %v1075 = vsel %vm845, %v1053, 0.0
    %1076 = vadd.xlane.f32.xlu0 %v1075
    %v1077 = vpop.xlane.xlu0 %1076
    %v1078 = vrcp.pop %v1056
    %v1079 = vmul.f32 %v1056, %v1078
    %v1080 = vsub.f32 1.0, %v1079
    %v1081 = vmul.f32 %v1078, %v1080
    %v1082 = vadd.f32 %v1078, %v1081
    %vm1083 = vweird.f32 %v1056
    %vm1084 = vweird.f32 %v1078
    %vm1085 = vmor %vm1083, %vm1084
    %v1086 = vsel %vm1085, %v1078, %v1082
    %v1087 = vand.u32 2147483647, %v1056
    %vm1088 = vcmp.eq.f32.partialorder %v1087, 8.507059e+37
    %v1089 = vand.u32 %v1056, 2147483648
    %v1090 = vor.u32 1.1754944e-38, %v1089
    %v1091 = vsel %vm1088, %v1090, %v1086
    %v1092 = vmul.f32 %v1039, %v1091
    %v1093 = vrcp.pop %v1059
    %v1094 = vmul.f32 %v1059, %v1093
    %v1095 = vsub.f32 1.0, %v1094
    %v1096 = vmul.f32 %v1093, %v1095
    %v1097 = vadd.f32 %v1093, %v1096
    %vm1098 = vweird.f32 %v1059
    %vm1099 = vweird.f32 %v1093
    %vm1100 = vmor %vm1098, %vm1099
    %v1101 = vsel %vm1100, %v1093, %v1097
    %v1102 = vand.u32 2147483647, %v1059
    %vm1103 = vcmp.eq.f32.partialorder %v1102, 8.507059e+37
    %v1104 = vand.u32 %v1059, 2147483648
    %v1105 = vor.u32 1.1754944e-38, %v1104
    %v1106 = vsel %vm1103, %v1105, %v1101
    %v1107 = vmul.f32 %v1041, %v1106
    %v1108 = vrcp.pop %v1062
    %v1109 = vmul.f32 %v1062, %v1108
    %v1110 = vsub.f32 1.0, %v1109
    %v1111 = vmul.f32 %v1108, %v1110
    %v1112 = vadd.f32 %v1108, %v1111
    %vm1113 = vweird.f32 %v1062
    %vm1114 = vweird.f32 %v1108
    %vm1115 = vmor %vm1113, %vm1114
    %v1116 = vsel %vm1115, %v1108, %v1112
    %v1117 = vand.u32 2147483647, %v1062
    %vm1118 = vcmp.eq.f32.partialorder %v1117, 8.507059e+37
    %v1119 = vand.u32 %v1062, 2147483648
    %v1120 = vor.u32 1.1754944e-38, %v1119
    %v1121 = vsel %vm1118, %v1120, %v1116
    %v1122 = vmul.f32 %v1043, %v1121
    %v1123 = vrcp.pop %v1065
    %v1124 = vmul.f32 %v1065, %v1123
    %v1125 = vsub.f32 1.0, %v1124
    %v1126 = vmul.f32 %v1123, %v1125
    %v1127 = vadd.f32 %v1123, %v1126
    %vm1128 = vweird.f32 %v1065
    %vm1129 = vweird.f32 %v1123
    %vm1130 = vmor %vm1128, %vm1129
    %v1131 = vsel %vm1130, %v1123, %v1127
    %v1132 = vand.u32 2147483647, %v1065
    %vm1133 = vcmp.eq.f32.partialorder %v1132, 8.507059e+37
    %v1134 = vand.u32 %v1065, 2147483648
    %v1135 = vor.u32 1.1754944e-38, %v1134
    %v1136 = vsel %vm1133, %v1135, %v1131
    %v1137 = vmul.f32 %v1045, %v1136
    %v1138 = vrcp.pop %v1068
    %v1139 = vmul.f32 %v1068, %v1138
    %v1140 = vsub.f32 1.0, %v1139
    %v1141 = vmul.f32 %v1138, %v1140
    %v1142 = vadd.f32 %v1138, %v1141
    %vm1143 = vweird.f32 %v1068
    %vm1144 = vweird.f32 %v1138
    %vm1145 = vmor %vm1143, %vm1144
    %v1146 = vsel %vm1145, %v1138, %v1142
    %v1147 = vand.u32 2147483647, %v1068
    %vm1148 = vcmp.eq.f32.partialorder %v1147, 8.507059e+37
    %v1149 = vand.u32 %v1068, 2147483648
    %v1150 = vor.u32 1.1754944e-38, %v1149
    %v1151 = vsel %vm1148, %v1150, %v1146
    %v1152 = vmul.f32 %v1047, %v1151
    %v1153 = vrcp.pop %v1071
    %v1154 = vmul.f32 %v1071, %v1153
    %v1155 = vsub.f32 1.0, %v1154
    %v1156 = vmul.f32 %v1153, %v1155
    %v1157 = vadd.f32 %v1153, %v1156
    %vm1158 = vweird.f32 %v1071
    %vm1159 = vweird.f32 %v1153
    %vm1160 = vmor %vm1158, %vm1159
    %v1161 = vsel %vm1160, %v1153, %v1157
    %v1162 = vand.u32 2147483647, %v1071
    %vm1163 = vcmp.eq.f32.partialorder %v1162, 8.507059e+37
    %v1164 = vand.u32 %v1071, 2147483648
    %v1165 = vor.u32 1.1754944e-38, %v1164
    %v1166 = vsel %vm1163, %v1165, %v1161
    %v1167 = vmul.f32 %v1049, %v1166
    %v1168 = vrcp.pop %v1074
    %v1169 = vmul.f32 %v1074, %v1168
    %v1170 = vsub.f32 1.0, %v1169
    %v1171 = vmul.f32 %v1168, %v1170
    %v1172 = vadd.f32 %v1168, %v1171
    %vm1173 = vweird.f32 %v1074
    %vm1174 = vweird.f32 %v1168
    %vm1175 = vmor %vm1173, %vm1174
    %v1176 = vsel %vm1175, %v1168, %v1172
    %v1177 = vand.u32 2147483647, %v1074
    %vm1178 = vcmp.eq.f32.partialorder %v1177, 8.507059e+37
    %v1179 = vand.u32 %v1074, 2147483648
    %v1180 = vor.u32 1.1754944e-38, %v1179
    %v1181 = vsel %vm1178, %v1180, %v1176
    %v1182 = vmul.f32 %v1051, %v1181
    %v1183 = vrcp.pop %v1077
    %v1184 = vmul.f32 %v1077, %v1183
    %v1185 = vsub.f32 1.0, %v1184
    %v1186 = vmul.f32 %v1183, %v1185
    %v1187 = vadd.f32 %v1183, %v1186
    %vm1188 = vweird.f32 %v1077
    %vm1189 = vweird.f32 %v1183
    %vm1190 = vmor %vm1188, %vm1189
    %v1191 = vsel %vm1190, %v1183, %v1187
    %v1192 = vand.u32 2147483647, %v1077
    %vm1193 = vcmp.eq.f32.partialorder %v1192, 8.507059e+37
    %v1194 = vand.u32 %v1077, 2147483648
    %v1195 = vor.u32 1.1754944e-38, %v1194
    %v1196 = vsel %vm1193, %v1195, %v1191
    %v1197 = vmul.f32 %v1053, %v1196
    %1198 = vrot.lane.b32.xlu0 %v161, 64
    %v1199 = vpop.permute.xlu0 %1198
    %1200 = vrot.lane.b32.xlu0 %v164, 64
    %v1201 = vpop.permute.xlu0 %1200
    %v1205 = vsel %vm845, %v1092, 0
    %v1208 = vsel %vm845, %v1107, 0
    %1210 = vmatpush.msra.mxu0 0.0
    %1211 = vmatpush.msra.mxu0 0.0
    %1212 = vmatpush.msra.mxu0 0.0
    %1213 = vmatpush.msra.mxu0 0.0
    %1214 = vmatpush.msra.mxu0 0.0
    %1215 = vmatpush.msra.mxu0 0.0
    %1216 = vmatpush.msra.mxu0 0.0
    %1217 = vmatpush.msra.mxu0 0.0
    %1218 = vmatpush.msra.mxu0 0.0
    %1219 = vmatpush.msra.mxu0 0.0
    %1220 = vmatpush.msra.mxu0 0.0
    %1221 = vmatpush.msra.mxu0 0.0
    %1222 = vmatpush.msra.mxu0 0.0
    %1223 = vmatpush.msra.mxu0 %v1201
    %1224 = vmatpush.msra.mxu0 %v1199
    %1225 = vmatpush.msra.mxu0 %v297
    %1226 = vmatmul.f32.gmra.mxu0 %v1205
    %v1227 = vpop.f32.mrf.mxu0
    %v1228 = vadd.f32 0.0, %v1227
    %1229 = vmatmul.f32.gmra.mxu0 %v1208
    %v1230 = vpop.f32.mrf.mxu0
    %v1231 = vadd.f32 0.0, %v1230
    %1232 = vdwg.mxu0
    %1233 = vrot.lane.b32.xlu0 %v170, 64
    %v1234 = vpop.permute.xlu0 %1233
    %1235 = vrot.lane.b32.xlu0 %v173, 64
    %v1236 = vpop.permute.xlu0 %1235
    %v1240 = vsel %vm845, %v1122, 0
    %v1243 = vsel %vm845, %v1137, 0
    %1245 = vmatpush.msra.mxu0 0.0
    %1246 = vmatpush.msra.mxu0 0.0
    %1247 = vmatpush.msra.mxu0 0.0
    %1248 = vmatpush.msra.mxu0 0.0
    %1249 = vmatpush.msra.mxu0 0.0
    %1250 = vmatpush.msra.mxu0 0.0
    %1251 = vmatpush.msra.mxu0 0.0
    %1252 = vmatpush.msra.mxu0 0.0
    %1253 = vmatpush.msra.mxu0 0.0
    %1254 = vmatpush.msra.mxu0 0.0
    %1255 = vmatpush.msra.mxu0 0.0
    %1256 = vmatpush.msra.mxu0 0.0
    %1257 = vmatpush.msra.mxu0 0.0
    %1258 = vmatpush.msra.mxu0 %v1236
    %1259 = vmatpush.msra.mxu0 %v1234
    %1260 = vmatpush.msra.mxu0 %v323
    %1261 = vmatmul.f32.gmra.mxu0 %v1240
    %v1262 = vpop.f32.mrf.mxu0
    %v1263 = vadd.f32 0.0, %v1262
    %1264 = vmatmul.f32.gmra.mxu0 %v1243
    %v1265 = vpop.f32.mrf.mxu0
    %v1266 = vadd.f32 0.0, %v1265
    %1267 = vdwg.mxu0
    %1268 = vrot.lane.b32.xlu0 %v176, 64
    %v1269 = vpop.permute.xlu0 %1268
    %1270 = vrot.lane.b32.xlu0 %v179, 64
    %v1271 = vpop.permute.xlu0 %1270
    %1272 = vrot.lane.b32.xlu0 %v182, 64
    %v1273 = vpop.permute.xlu0 %1272
    %v1278 = vsel %vm845, %v1152, 0
    %v1281 = vsel %vm845, %v1167, 0
    %1283 = vmatpush.msra.mxu0 0.0
    %1284 = vmatpush.msra.mxu0 0.0
    %1285 = vmatpush.msra.mxu0 0.0
    %1286 = vmatpush.msra.mxu0 0.0
    %1287 = vmatpush.msra.mxu0 0.0
    %1288 = vmatpush.msra.mxu0 0.0
    %1289 = vmatpush.msra.mxu0 0.0
    %1290 = vmatpush.msra.mxu0 0.0
    %1291 = vmatpush.msra.mxu0 0.0
    %1292 = vmatpush.msra.mxu0 0.0
    %1293 = vmatpush.msra.mxu0 0.0
    %1294 = vmatpush.msra.mxu0 0.0
    %1295 = vmatpush.msra.mxu0 0.0
    %1296 = vmatpush.msra.mxu0 %v1273
    %1297 = vmatpush.msra.mxu0 %v1271
    %1298 = vmatpush.msra.mxu0 %v1269
    %1299 = vmatmul.f32.gmra.mxu0 %v1278
    %v1300 = vpop.f32.mrf.mxu0
    %v1301 = vadd.f32 0.0, %v1300
    %1302 = vmatmul.f32.gmra.mxu0 %v1281
    %v1303 = vpop.f32.mrf.mxu0
    %v1304 = vadd.f32 0.0, %v1303
    %1305 = vdwg.mxu0
    %1306 = vrot.lane.b32.xlu0 %v185, 64
    %v1307 = vpop.permute.xlu0 %1306
    %1308 = vrot.lane.b32.xlu0 %v188, 64
    %v1309 = vpop.permute.xlu0 %1308
    %1310 = vrot.lane.b32.xlu0 %v191, 64
    %v1311 = vpop.permute.xlu0 %1310
    %v1316 = vsel %vm845, %v1182, 0
    %v1319 = vsel %vm845, %v1197, 0
    %1321 = vmatpush.msra.mxu0 0.0
    %1322 = vmatpush.msra.mxu0 0.0
    %1323 = vmatpush.msra.mxu0 0.0
    %1324 = vmatpush.msra.mxu0 0.0
    %1325 = vmatpush.msra.mxu0 0.0
    %1326 = vmatpush.msra.mxu0 0.0
    %1327 = vmatpush.msra.mxu0 0.0
    %1328 = vmatpush.msra.mxu0 0.0
    %1329 = vmatpush.msra.mxu0 0.0
    %1330 = vmatpush.msra.mxu0 0.0
    %1331 = vmatpush.msra.mxu0 0.0
    %1332 = vmatpush.msra.mxu0 0.0
    %1333 = vmatpush.msra.mxu0 0.0
    %1334 = vmatpush.msra.mxu0 %v1311
    %1335 = vmatpush.msra.mxu0 %v1309
    %1336 = vmatpush.msra.mxu0 %v1307
    %1337 = vmatmul.f32.gmra.mxu0 %v1316
    %v1338 = vpop.f32.mrf.mxu0
    %v1339 = vadd.f32 0.0, %v1338
    %1340 = vmatmul.f32.gmra.mxu0 %v1319
    %v1341 = vpop.f32.mrf.mxu0
    %v1342 = vadd.f32 0.0, %v1341
    %1343 = vdwg.mxu0
    %1344 = vrot.lane.b32.xlu0 %v161, 120
    %v1345 = vpop.permute.xlu0 %1344
    %1346 = vrot.lane.b32.xlu0 %v164, 120
    %v1347 = vpop.permute.xlu0 %1346
    %1348 = vrot.lane.b32.xlu0 %v161, 88
    %v1349 = vpop.permute.xlu0 %1348
    %1350 = vrot.lane.b32.xlu0 %v164, 88
    %v1351 = vpop.permute.xlu0 %1350
    %v1352 = vsel %vm196, %v1345, 0
    %v1354 = vsel %vm196, %v1347, 0
    %v1356 = vsel %vm196, %v1349, 0
    %v1358 = vsel %vm196, %v1351, 0
    %1360 = vmatpush.xpose.msra.mxu0 0.0
    %1361 = vmatpush.xpose.msra.mxu0 0.0
    %1362 = vmatpush.xpose.msra.mxu0 0.0
    %1363 = vmatpush.xpose.msra.mxu0 0.0
    %1364 = vmatpush.xpose.msra.mxu0 0.0
    %1365 = vmatpush.xpose.msra.mxu0 0.0
    %1366 = vmatpush.xpose.msra.mxu0 0.0
    %1367 = vmatpush.xpose.msra.mxu0 0.0
    %1368 = vmatpush.xpose.msra.mxu0 0.0
    %1369 = vmatpush.xpose.msra.mxu0 0.0
    %1370 = vmatpush.xpose.msra.mxu0 0.0
    %1371 = vmatpush.xpose.msra.mxu0 0.0
    %1372 = vmatpush.xpose.msra.mxu0 0.0
    %1373 = vmatpush.xpose.msra.mxu0 %v1358
    %1374 = vmatpush.xpose.msra.mxu0 %v1356
    %1375 = vmatpush.xpose.msra.mxu0 %v354
    %1376 = vmatmul.f32.gmra.mxu0 %v1352
    %v1377 = vpop.f32.mrf.mxu0
    %v1378 = vadd.f32 0.0, %v1377
    %1379 = vmatmul.f32.gmra.mxu0 %v1354
    %v1380 = vpop.f32.mrf.mxu0
    %v1381 = vadd.f32 0.0, %v1380
    %1382 = vdwg.mxu0
    %1383 = vrot.lane.b32.xlu0 %v170, 120
    %v1384 = vpop.permute.xlu0 %1383
    %1385 = vrot.lane.b32.xlu0 %v173, 120
    %v1386 = vpop.permute.xlu0 %1385
    %1387 = vrot.lane.b32.xlu0 %v170, 88
    %v1388 = vpop.permute.xlu0 %1387
    %1389 = vrot.lane.b32.xlu0 %v173, 88
    %v1390 = vpop.permute.xlu0 %1389
    %v1391 = vsel %vm196, %v1384, 0
    %v1393 = vsel %vm196, %v1386, 0
    %v1395 = vsel %vm196, %v1388, 0
    %v1397 = vsel %vm196, %v1390, 0
    %1399 = vmatpush.xpose.msra.mxu0 0.0
    %1400 = vmatpush.xpose.msra.mxu0 0.0
    %1401 = vmatpush.xpose.msra.mxu0 0.0
    %1402 = vmatpush.xpose.msra.mxu0 0.0
    %1403 = vmatpush.xpose.msra.mxu0 0.0
    %1404 = vmatpush.xpose.msra.mxu0 0.0
    %1405 = vmatpush.xpose.msra.mxu0 0.0
    %1406 = vmatpush.xpose.msra.mxu0 0.0
    %1407 = vmatpush.xpose.msra.mxu0 0.0
    %1408 = vmatpush.xpose.msra.mxu0 0.0
    %1409 = vmatpush.xpose.msra.mxu0 0.0
    %1410 = vmatpush.xpose.msra.mxu0 0.0
    %1411 = vmatpush.xpose.msra.mxu0 0.0
    %1412 = vmatpush.xpose.msra.mxu0 %v1397
    %1413 = vmatpush.xpose.msra.mxu0 %v1395
    %1414 = vmatpush.xpose.msra.mxu0 %v382
    %1415 = vmatmul.f32.gmra.mxu0 %v1391
    %v1416 = vpop.f32.mrf.mxu0
    %v1417 = vadd.f32 0.0, %v1416
    %1418 = vmatmul.f32.gmra.mxu0 %v1393
    %v1419 = vpop.f32.mrf.mxu0
    %v1420 = vadd.f32 0.0, %v1419
    %1421 = vdwg.mxu0
    %1422 = vrot.lane.b32.xlu0 %v179, 120
    %v1423 = vpop.permute.xlu0 %1422
    %1424 = vrot.lane.b32.xlu0 %v182, 120
    %v1425 = vpop.permute.xlu0 %1424
    %1426 = vrot.lane.b32.xlu0 %v176, 88
    %v1427 = vpop.permute.xlu0 %1426
    %1428 = vrot.lane.b32.xlu0 %v179, 88
    %v1429 = vpop.permute.xlu0 %1428
    %1430 = vrot.lane.b32.xlu0 %v182, 88
    %v1431 = vpop.permute.xlu0 %1430
    %v1432 = vsel %vm196, %v1423, 0
    %v1434 = vsel %vm196, %v1425, 0
    %v1436 = vsel %vm196, %v1427, 0
    %v1438 = vsel %vm196, %v1429, 0
    %v1440 = vsel %vm196, %v1431, 0
    %1442 = vmatpush.xpose.msra.mxu0 0.0
    %1443 = vmatpush.xpose.msra.mxu0 0.0
    %1444 = vmatpush.xpose.msra.mxu0 0.0
    %1445 = vmatpush.xpose.msra.mxu0 0.0
    %1446 = vmatpush.xpose.msra.mxu0 0.0
    %1447 = vmatpush.xpose.msra.mxu0 0.0
    %1448 = vmatpush.xpose.msra.mxu0 0.0
    %1449 = vmatpush.xpose.msra.mxu0 0.0
    %1450 = vmatpush.xpose.msra.mxu0 0.0
    %1451 = vmatpush.xpose.msra.mxu0 0.0
    %1452 = vmatpush.xpose.msra.mxu0 0.0
    %1453 = vmatpush.xpose.msra.mxu0 0.0
    %1454 = vmatpush.xpose.msra.mxu0 0.0
    %1455 = vmatpush.xpose.msra.mxu0 %v1440
    %1456 = vmatpush.xpose.msra.mxu0 %v1438
    %1457 = vmatpush.xpose.msra.mxu0 %v1436
    %1458 = vmatmul.f32.gmra.mxu0 %v1432
    %v1459 = vpop.f32.mrf.mxu0
    %v1460 = vadd.f32 0.0, %v1459
    %1461 = vmatmul.f32.gmra.mxu0 %v1434
    %v1462 = vpop.f32.mrf.mxu0
    %v1463 = vadd.f32 0.0, %v1462
    %1464 = vdwg.mxu0
    %1465 = vrot.lane.b32.xlu0 %v188, 120
    %v1466 = vpop.permute.xlu0 %1465
    %1467 = vrot.lane.b32.xlu0 %v191, 120
    %v1468 = vpop.permute.xlu0 %1467
    %1469 = vrot.lane.b32.xlu0 %v185, 88
    %v1470 = vpop.permute.xlu0 %1469
    %1471 = vrot.lane.b32.xlu0 %v188, 88
    %v1472 = vpop.permute.xlu0 %1471
    %1473 = vrot.lane.b32.xlu0 %v191, 88
    %v1474 = vpop.permute.xlu0 %1473
    %v1475 = vsel %vm196, %v1466, 0
    %v1477 = vsel %vm196, %v1468, 0
    %v1479 = vsel %vm196, %v1470, 0
    %v1481 = vsel %vm196, %v1472, 0
    %v1483 = vsel %vm196, %v1474, 0
    %1485 = vmatpush.xpose.msra.mxu0 0.0
    %1486 = vmatpush.xpose.msra.mxu0 0.0
    %1487 = vmatpush.xpose.msra.mxu0 0.0
    %1488 = vmatpush.xpose.msra.mxu0 0.0
    %1489 = vmatpush.xpose.msra.mxu0 0.0
    %1490 = vmatpush.xpose.msra.mxu0 0.0
    %1491 = vmatpush.xpose.msra.mxu0 0.0
    %1492 = vmatpush.xpose.msra.mxu0 0.0
    %1493 = vmatpush.xpose.msra.mxu0 0.0
    %1494 = vmatpush.xpose.msra.mxu0 0.0
    %1495 = vmatpush.xpose.msra.mxu0 0.0
    %1496 = vmatpush.xpose.msra.mxu0 0.0
    %1497 = vmatpush.xpose.msra.mxu0 0.0
    %1498 = vmatpush.xpose.msra.mxu0 %v1483
    %1499 = vmatpush.xpose.msra.mxu0 %v1481
    %1500 = vmatpush.xpose.msra.mxu0 %v1479
    %1501 = vmatmul.f32.gmra.mxu0 %v1475
    %v1502 = vpop.f32.mrf.mxu0
    %v1503 = vadd.f32 0.0, %v1502
    %1504 = vmatmul.f32.gmra.mxu0 %v1477
    %v1505 = vpop.f32.mrf.mxu0
    %v1506 = vadd.f32 0.0, %v1505
    %1507 = vdwg.mxu0
    %v1508 = vsel %vm845, %v1378, -inf
    %1509 = vmax.xlane.f32.xlu0 %v1508
    %v1510 = vpop.xlane.xlu0 %1509
    %v1511 = vsel %vm845, %v1381, -inf
    %1512 = vmax.xlane.f32.xlu0 %v1511
    %v1513 = vpop.xlane.xlu0 %1512
    %v1514 = vsel %vm845, %v1417, -inf
    %1515 = vmax.xlane.f32.xlu0 %v1514
    %v1516 = vpop.xlane.xlu0 %1515
    %v1517 = vsel %vm845, %v1420, -inf
    %1518 = vmax.xlane.f32.xlu0 %v1517
    %v1519 = vpop.xlane.xlu0 %1518
    %v1520 = vsel %vm845, %v1460, -inf
    %1521 = vmax.xlane.f32.xlu0 %v1520
    %v1522 = vpop.xlane.xlu0 %1521
    %v1523 = vsel %vm845, %v1463, -inf
    %1524 = vmax.xlane.f32.xlu0 %v1523
    %v1525 = vpop.xlane.xlu0 %1524
    %v1526 = vsel %vm845, %v1503, -inf
    %1527 = vmax.xlane.f32.xlu0 %v1526
    %v1528 = vpop.xlane.xlu0 %1527
    %v1529 = vsel %vm845, %v1506, -inf
    %1530 = vmax.xlane.f32.xlu0 %v1529
    %v1531 = vpop.xlane.xlu0 %1530
    %v1532 = vsub.f32 %v1378, %v1510
    %v1533 = vsub.f32 %v1381, %v1513
    %v1534 = vsub.f32 %v1417, %v1516
    %v1535 = vsub.f32 %v1420, %v1519
    %v1536 = vsub.f32 %v1460, %v1522
    %v1537 = vsub.f32 %v1463, %v1525
    %v1538 = vsub.f32 %v1503, %v1528
    %v1539 = vsub.f32 %v1506, %v1531
    %v1540 = vmul.f32 %v1532, 1.442695
    %v1541 = vpow.pop %v1540
    %v1542 = vmul.f32 %v1533, 1.442695
    %v1543 = vpow.pop %v1542
    %v1544 = vmul.f32 %v1534, 1.442695
    %v1545 = vpow.pop %v1544
    %v1546 = vmul.f32 %v1535, 1.442695
    %v1547 = vpow.pop %v1546
    %v1548 = vmul.f32 %v1536, 1.442695
    %v1549 = vpow.pop %v1548
    %v1550 = vmul.f32 %v1537, 1.442695
    %v1551 = vpow.pop %v1550
    %v1552 = vmul.f32 %v1538, 1.442695
    %v1553 = vpow.pop %v1552
    %v1554 = vmul.f32 %v1539, 1.442695
    %v1555 = vpow.pop %v1554
    %v1556 = vsel %vm845, %v1541, 0.0
    %1557 = vadd.xlane.f32.xlu0 %v1556
    %v1558 = vpop.xlane.xlu0 %1557
    %v1559 = vsel %vm845, %v1543, 0.0
    %1560 = vadd.xlane.f32.xlu0 %v1559
    %v1561 = vpop.xlane.xlu0 %1560
    %v1562 = vsel %vm845, %v1545, 0.0
    %1563 = vadd.xlane.f32.xlu0 %v1562
    %v1564 = vpop.xlane.xlu0 %1563
    %v1565 = vsel %vm845, %v1547, 0.0
    %1566 = vadd.xlane.f32.xlu0 %v1565
    %v1567 = vpop.xlane.xlu0 %1566
    %v1568 = vsel %vm845, %v1549, 0.0
    %1569 = vadd.xlane.f32.xlu0 %v1568
    %v1570 = vpop.xlane.xlu0 %1569
    %v1571 = vsel %vm845, %v1551, 0.0
    %1572 = vadd.xlane.f32.xlu0 %v1571
    %v1573 = vpop.xlane.xlu0 %1572
    %v1574 = vsel %vm845, %v1553, 0.0
    %1575 = vadd.xlane.f32.xlu0 %v1574
    %v1576 = vpop.xlane.xlu0 %1575
    %v1577 = vsel %vm845, %v1555, 0.0
    %1578 = vadd.xlane.f32.xlu0 %v1577
    %v1579 = vpop.xlane.xlu0 %1578
    %v1580 = vrcp.pop %v1558
    %v1581 = vmul.f32 %v1558, %v1580
    %v1582 = vsub.f32 1.0, %v1581
    %v1583 = vmul.f32 %v1580, %v1582
    %v1584 = vadd.f32 %v1580, %v1583
    %vm1585 = vweird.f32 %v1558
    %vm1586 = vweird.f32 %v1580
    %vm1587 = vmor %vm1585, %vm1586
    %v1588 = vsel %vm1587, %v1580, %v1584
    %v1589 = vand.u32 2147483647, %v1558
    %vm1590 = vcmp.eq.f32.partialorder %v1589, 8.507059e+37
    %v1591 = vand.u32 %v1558, 2147483648
    %v1592 = vor.u32 1.1754944e-38, %v1591
    %v1593 = vsel %vm1590, %v1592, %v1588
    %v1594 = vmul.f32 %v1541, %v1593
    %v1595 = vrcp.pop %v1561
    %v1596 = vmul.f32 %v1561, %v1595
    %v1597 = vsub.f32 1.0, %v1596
    %v1598 = vmul.f32 %v1595, %v1597
    %v1599 = vadd.f32 %v1595, %v1598
    %vm1600 = vweird.f32 %v1561
    %vm1601 = vweird.f32 %v1595
    %vm1602 = vmor %vm1600, %vm1601
    %v1603 = vsel %vm1602, %v1595, %v1599
    %v1604 = vand.u32 2147483647, %v1561
    %vm1605 = vcmp.eq.f32.partialorder %v1604, 8.507059e+37
    %v1606 = vand.u32 %v1561, 2147483648
    %v1607 = vor.u32 1.1754944e-38, %v1606
    %v1608 = vsel %vm1605, %v1607, %v1603
    %v1609 = vmul.f32 %v1543, %v1608
    %v1610 = vrcp.pop %v1564
    %v1611 = vmul.f32 %v1564, %v1610
    %v1612 = vsub.f32 1.0, %v1611
    %v1613 = vmul.f32 %v1610, %v1612
    %v1614 = vadd.f32 %v1610, %v1613
    %vm1615 = vweird.f32 %v1564
    %vm1616 = vweird.f32 %v1610
    %vm1617 = vmor %vm1615, %vm1616
    %v1618 = vsel %vm1617, %v1610, %v1614
    %v1619 = vand.u32 2147483647, %v1564
    %vm1620 = vcmp.eq.f32.partialorder %v1619, 8.507059e+37
    %v1621 = vand.u32 %v1564, 2147483648
    %v1622 = vor.u32 1.1754944e-38, %v1621
    %v1623 = vsel %vm1620, %v1622, %v1618
    %v1624 = vmul.f32 %v1545, %v1623
    %v1625 = vrcp.pop %v1567
    %v1626 = vmul.f32 %v1567, %v1625
    %v1627 = vsub.f32 1.0, %v1626
    %v1628 = vmul.f32 %v1625, %v1627
    %v1629 = vadd.f32 %v1625, %v1628
    %vm1630 = vweird.f32 %v1567
    %vm1631 = vweird.f32 %v1625
    %vm1632 = vmor %vm1630, %vm1631
    %v1633 = vsel %vm1632, %v1625, %v1629
    %v1634 = vand.u32 2147483647, %v1567
    %vm1635 = vcmp.eq.f32.partialorder %v1634, 8.507059e+37
    %v1636 = vand.u32 %v1567, 2147483648
    %v1637 = vor.u32 1.1754944e-38, %v1636
    %v1638 = vsel %vm1635, %v1637, %v1633
    %v1639 = vmul.f32 %v1547, %v1638
    %v1640 = vrcp.pop %v1570
    %v1641 = vmul.f32 %v1570, %v1640
    %v1642 = vsub.f32 1.0, %v1641
    %v1643 = vmul.f32 %v1640, %v1642
    %v1644 = vadd.f32 %v1640, %v1643
    %vm1645 = vweird.f32 %v1570
    %vm1646 = vweird.f32 %v1640
    %vm1647 = vmor %vm1645, %vm1646
    %v1648 = vsel %vm1647, %v1640, %v1644
    %v1649 = vand.u32 2147483647, %v1570
    %vm1650 = vcmp.eq.f32.partialorder %v1649, 8.507059e+37
    %v1651 = vand.u32 %v1570, 2147483648
    %v1652 = vor.u32 1.1754944e-38, %v1651
    %v1653 = vsel %vm1650, %v1652, %v1648
    %v1654 = vmul.f32 %v1549, %v1653
    %v1655 = vrcp.pop %v1573
    %v1656 = vmul.f32 %v1573, %v1655
    %v1657 = vsub.f32 1.0, %v1656
    %v1658 = vmul.f32 %v1655, %v1657
    %v1659 = vadd.f32 %v1655, %v1658
    %vm1660 = vweird.f32 %v1573
    %vm1661 = vweird.f32 %v1655
    %vm1662 = vmor %vm1660, %vm1661
    %v1663 = vsel %vm1662, %v1655, %v1659
    %v1664 = vand.u32 2147483647, %v1573
    %vm1665 = vcmp.eq.f32.partialorder %v1664, 8.507059e+37
    %v1666 = vand.u32 %v1573, 2147483648
    %v1667 = vor.u32 1.1754944e-38, %v1666
    %v1668 = vsel %vm1665, %v1667, %v1663
    %v1669 = vmul.f32 %v1551, %v1668
    %v1670 = vrcp.pop %v1576
    %v1671 = vmul.f32 %v1576, %v1670
    %v1672 = vsub.f32 1.0, %v1671
    %v1673 = vmul.f32 %v1670, %v1672
    %v1674 = vadd.f32 %v1670, %v1673
    %vm1675 = vweird.f32 %v1576
    %vm1676 = vweird.f32 %v1670
    %vm1677 = vmor %vm1675, %vm1676
    %v1678 = vsel %vm1677, %v1670, %v1674
    %v1679 = vand.u32 2147483647, %v1576
    %vm1680 = vcmp.eq.f32.partialorder %v1679, 8.507059e+37
    %v1681 = vand.u32 %v1576, 2147483648
    %v1682 = vor.u32 1.1754944e-38, %v1681
    %v1683 = vsel %vm1680, %v1682, %v1678
    %v1684 = vmul.f32 %v1553, %v1683
    %v1685 = vrcp.pop %v1579
    %v1686 = vmul.f32 %v1579, %v1685
    %v1687 = vsub.f32 1.0, %v1686
    %v1688 = vmul.f32 %v1685, %v1687
    %v1689 = vadd.f32 %v1685, %v1688
    %vm1690 = vweird.f32 %v1579
    %vm1691 = vweird.f32 %v1685
    %vm1692 = vmor %vm1690, %vm1691
    %v1693 = vsel %vm1692, %v1685, %v1689
    %v1694 = vand.u32 2147483647, %v1579
    %vm1695 = vcmp.eq.f32.partialorder %v1694, 8.507059e+37
    %v1696 = vand.u32 %v1579, 2147483648
    %v1697 = vor.u32 1.1754944e-38, %v1696
    %v1698 = vsel %vm1695, %v1697, %v1693
    %v1699 = vmul.f32 %v1555, %v1698
    %1700 = vrot.lane.b32.xlu0 %v161, 56
    %v1701 = vpop.permute.xlu0 %1700
    %1702 = vrot.lane.b32.xlu0 %v164, 56
    %v1703 = vpop.permute.xlu0 %1702
    %v1707 = vsel %vm845, %v1594, 0
    %v1710 = vsel %vm845, %v1609, 0
    %1712 = vmatpush.msra.mxu0 0.0
    %1713 = vmatpush.msra.mxu0 0.0
    %1714 = vmatpush.msra.mxu0 0.0
    %1715 = vmatpush.msra.mxu0 0.0
    %1716 = vmatpush.msra.mxu0 0.0
    %1717 = vmatpush.msra.mxu0 0.0
    %1718 = vmatpush.msra.mxu0 0.0
    %1719 = vmatpush.msra.mxu0 0.0
    %1720 = vmatpush.msra.mxu0 0.0
    %1721 = vmatpush.msra.mxu0 0.0
    %1722 = vmatpush.msra.mxu0 0.0
    %1723 = vmatpush.msra.mxu0 0.0
    %1724 = vmatpush.msra.mxu0 0.0
    %1725 = vmatpush.msra.mxu0 %v1703
    %1726 = vmatpush.msra.mxu0 %v1701
    %1727 = vmatpush.msra.mxu0 %v453
    %1728 = vmatmul.f32.gmra.mxu0 %v1707
    %v1729 = vpop.f32.mrf.mxu0
    %v1730 = vadd.f32 0.0, %v1729
    %1731 = vmatmul.f32.gmra.mxu0 %v1710
    %v1732 = vpop.f32.mrf.mxu0
    %v1733 = vadd.f32 0.0, %v1732
    %1734 = vdwg.mxu0
    %1735 = vrot.lane.b32.xlu0 %v170, 56
    %v1736 = vpop.permute.xlu0 %1735
    %1737 = vrot.lane.b32.xlu0 %v173, 56
    %v1738 = vpop.permute.xlu0 %1737
    %v1742 = vsel %vm845, %v1624, 0
    %v1745 = vsel %vm845, %v1639, 0
    %1747 = vmatpush.msra.mxu0 0.0
    %1748 = vmatpush.msra.mxu0 0.0
    %1749 = vmatpush.msra.mxu0 0.0
    %1750 = vmatpush.msra.mxu0 0.0
    %1751 = vmatpush.msra.mxu0 0.0
    %1752 = vmatpush.msra.mxu0 0.0
    %1753 = vmatpush.msra.mxu0 0.0
    %1754 = vmatpush.msra.mxu0 0.0
    %1755 = vmatpush.msra.mxu0 0.0
    %1756 = vmatpush.msra.mxu0 0.0
    %1757 = vmatpush.msra.mxu0 0.0
    %1758 = vmatpush.msra.mxu0 0.0
    %1759 = vmatpush.msra.mxu0 0.0
    %1760 = vmatpush.msra.mxu0 %v1738
    %1761 = vmatpush.msra.mxu0 %v1736
    %1762 = vmatpush.msra.mxu0 %v479
    %1763 = vmatmul.f32.gmra.mxu0 %v1742
    %v1764 = vpop.f32.mrf.mxu0
    %v1765 = vadd.f32 0.0, %v1764
    %1766 = vmatmul.f32.gmra.mxu0 %v1745
    %v1767 = vpop.f32.mrf.mxu0
    %v1768 = vadd.f32 0.0, %v1767
    %1769 = vdwg.mxu0
    %1770 = vrot.lane.b32.xlu0 %v176, 56
    %v1771 = vpop.permute.xlu0 %1770
    %1772 = vrot.lane.b32.xlu0 %v179, 56
    %v1773 = vpop.permute.xlu0 %1772
    %1774 = vrot.lane.b32.xlu0 %v182, 56
    %v1775 = vpop.permute.xlu0 %1774
    %v1780 = vsel %vm845, %v1654, 0
    %v1783 = vsel %vm845, %v1669, 0
    %1785 = vmatpush.msra.mxu0 0.0
    %1786 = vmatpush.msra.mxu0 0.0
    %1787 = vmatpush.msra.mxu0 0.0
    %1788 = vmatpush.msra.mxu0 0.0
    %1789 = vmatpush.msra.mxu0 0.0
    %1790 = vmatpush.msra.mxu0 0.0
    %1791 = vmatpush.msra.mxu0 0.0
    %1792 = vmatpush.msra.mxu0 0.0
    %1793 = vmatpush.msra.mxu0 0.0
    %1794 = vmatpush.msra.mxu0 0.0
    %1795 = vmatpush.msra.mxu0 0.0
    %1796 = vmatpush.msra.mxu0 0.0
    %1797 = vmatpush.msra.mxu0 0.0
    %1798 = vmatpush.msra.mxu0 %v1775
    %1799 = vmatpush.msra.mxu0 %v1773
    %1800 = vmatpush.msra.mxu0 %v1771
    %1801 = vmatmul.f32.gmra.mxu0 %v1780
    %v1802 = vpop.f32.mrf.mxu0
    %v1803 = vadd.f32 0.0, %v1802
    %1804 = vmatmul.f32.gmra.mxu0 %v1783
    %v1805 = vpop.f32.mrf.mxu0
    %v1806 = vadd.f32 0.0, %v1805
    %1807 = vdwg.mxu0
    %1808 = vrot.lane.b32.xlu0 %v185, 56
    %v1809 = vpop.permute.xlu0 %1808
    %1810 = vrot.lane.b32.xlu0 %v188, 56
    %v1811 = vpop.permute.xlu0 %1810
    %1812 = vrot.lane.b32.xlu0 %v191, 56
    %v1813 = vpop.permute.xlu0 %1812
    %v1818 = vsel %vm845, %v1684, 0
    %v1821 = vsel %vm845, %v1699, 0
    %1823 = vmatpush.msra.mxu0 0.0
    %1824 = vmatpush.msra.mxu0 0.0
    %1825 = vmatpush.msra.mxu0 0.0
    %1826 = vmatpush.msra.mxu0 0.0
    %1827 = vmatpush.msra.mxu0 0.0
    %1828 = vmatpush.msra.mxu0 0.0
    %1829 = vmatpush.msra.mxu0 0.0
    %1830 = vmatpush.msra.mxu0 0.0
    %1831 = vmatpush.msra.mxu0 0.0
    %1832 = vmatpush.msra.mxu0 0.0
    %1833 = vmatpush.msra.mxu0 0.0
    %1834 = vmatpush.msra.mxu0 0.0
    %1835 = vmatpush.msra.mxu0 0.0
    %1836 = vmatpush.msra.mxu0 %v1813
    %1837 = vmatpush.msra.mxu0 %v1811
    %1838 = vmatpush.msra.mxu0 %v1809
    %1839 = vmatmul.f32.gmra.mxu0 %v1818
    %v1840 = vpop.f32.mrf.mxu0
    %v1841 = vadd.f32 0.0, %v1840
    %1842 = vmatmul.f32.gmra.mxu0 %v1821
    %v1843 = vpop.f32.mrf.mxu0
    %v1844 = vadd.f32 0.0, %v1843
    %1845 = vdwg.mxu0
    %1846 = vrot.lane.b32.xlu0 %v161, 112
    %v1847 = vpop.permute.xlu0 %1846
    %1848 = vrot.lane.b32.xlu0 %v164, 112
    %v1849 = vpop.permute.xlu0 %1848
    %1850 = vrot.lane.b32.xlu0 %v161, 80
    %v1851 = vpop.permute.xlu0 %1850
    %1852 = vrot.lane.b32.xlu0 %v164, 80
    %v1853 = vpop.permute.xlu0 %1852
    %v1854 = vsel %vm196, %v1847, 0
    %v1856 = vsel %vm196, %v1849, 0
    %v1858 = vsel %vm196, %v1851, 0
    %v1860 = vsel %vm196, %v1853, 0
    %1862 = vmatpush.xpose.msra.mxu0 0.0
    %1863 = vmatpush.xpose.msra.mxu0 0.0
    %1864 = vmatpush.xpose.msra.mxu0 0.0
    %1865 = vmatpush.xpose.msra.mxu0 0.0
    %1866 = vmatpush.xpose.msra.mxu0 0.0
    %1867 = vmatpush.xpose.msra.mxu0 0.0
    %1868 = vmatpush.xpose.msra.mxu0 0.0
    %1869 = vmatpush.xpose.msra.mxu0 0.0
    %1870 = vmatpush.xpose.msra.mxu0 0.0
    %1871 = vmatpush.xpose.msra.mxu0 0.0
    %1872 = vmatpush.xpose.msra.mxu0 0.0
    %1873 = vmatpush.xpose.msra.mxu0 0.0
    %1874 = vmatpush.xpose.msra.mxu0 0.0
    %1875 = vmatpush.xpose.msra.mxu0 %v1860
    %1876 = vmatpush.xpose.msra.mxu0 %v1858
    %1877 = vmatpush.xpose.msra.mxu0 %v510
    %1878 = vmatmul.f32.gmra.mxu0 %v1854
    %v1879 = vpop.f32.mrf.mxu0
    %v1880 = vadd.f32 0.0, %v1879
    %1881 = vmatmul.f32.gmra.mxu0 %v1856
    %v1882 = vpop.f32.mrf.mxu0
    %v1883 = vadd.f32 0.0, %v1882
    %1884 = vdwg.mxu0
    %1885 = vrot.lane.b32.xlu0 %v170, 112
    %v1886 = vpop.permute.xlu0 %1885
    %1887 = vrot.lane.b32.xlu0 %v173, 112
    %v1888 = vpop.permute.xlu0 %1887
    %1889 = vrot.lane.b32.xlu0 %v170, 80
    %v1890 = vpop.permute.xlu0 %1889
    %1891 = vrot.lane.b32.xlu0 %v173, 80
    %v1892 = vpop.permute.xlu0 %1891
    %v1893 = vsel %vm196, %v1886, 0
    %v1895 = vsel %vm196, %v1888, 0
    %v1897 = vsel %vm196, %v1890, 0
    %v1899 = vsel %vm196, %v1892, 0
    %1901 = vmatpush.xpose.msra.mxu0 0.0
    %1902 = vmatpush.xpose.msra.mxu0 0.0
    %1903 = vmatpush.xpose.msra.mxu0 0.0
    %1904 = vmatpush.xpose.msra.mxu0 0.0
    %1905 = vmatpush.xpose.msra.mxu0 0.0
    %1906 = vmatpush.xpose.msra.mxu0 0.0
    %1907 = vmatpush.xpose.msra.mxu0 0.0
    %1908 = vmatpush.xpose.msra.mxu0 0.0
    %1909 = vmatpush.xpose.msra.mxu0 0.0
    %1910 = vmatpush.xpose.msra.mxu0 0.0
    %1911 = vmatpush.xpose.msra.mxu0 0.0
    %1912 = vmatpush.xpose.msra.mxu0 0.0
    %1913 = vmatpush.xpose.msra.mxu0 0.0
    %1914 = vmatpush.xpose.msra.mxu0 %v1899
    %1915 = vmatpush.xpose.msra.mxu0 %v1897
    %1916 = vmatpush.xpose.msra.mxu0 %v538
    %1917 = vmatmul.f32.gmra.mxu0 %v1893
    %v1918 = vpop.f32.mrf.mxu0
    %v1919 = vadd.f32 0.0, %v1918
    %1920 = vmatmul.f32.gmra.mxu0 %v1895
    %v1921 = vpop.f32.mrf.mxu0
    %v1922 = vadd.f32 0.0, %v1921
    %1923 = vdwg.mxu0
    %1924 = vrot.lane.b32.xlu0 %v179, 112
    %v1925 = vpop.permute.xlu0 %1924
    %1926 = vrot.lane.b32.xlu0 %v182, 112
    %v1927 = vpop.permute.xlu0 %1926
    %1928 = vrot.lane.b32.xlu0 %v176, 80
    %v1929 = vpop.permute.xlu0 %1928
    %1930 = vrot.lane.b32.xlu0 %v179, 80
    %v1931 = vpop.permute.xlu0 %1930
    %1932 = vrot.lane.b32.xlu0 %v182, 80
    %v1933 = vpop.permute.xlu0 %1932
    %v1934 = vsel %vm196, %v1925, 0
    %v1936 = vsel %vm196, %v1927, 0
    %v1938 = vsel %vm196, %v1929, 0
    %v1940 = vsel %vm196, %v1931, 0
    %v1942 = vsel %vm196, %v1933, 0
    %1944 = vmatpush.xpose.msra.mxu0 0.0
    %1945 = vmatpush.xpose.msra.mxu0 0.0
    %1946 = vmatpush.xpose.msra.mxu0 0.0
    %1947 = vmatpush.xpose.msra.mxu0 0.0
    %1948 = vmatpush.xpose.msra.mxu0 0.0
    %1949 = vmatpush.xpose.msra.mxu0 0.0
    %1950 = vmatpush.xpose.msra.mxu0 0.0
    %1951 = vmatpush.xpose.msra.mxu0 0.0
    %1952 = vmatpush.xpose.msra.mxu0 0.0
    %1953 = vmatpush.xpose.msra.mxu0 0.0
    %1954 = vmatpush.xpose.msra.mxu0 0.0
    %1955 = vmatpush.xpose.msra.mxu0 0.0
    %1956 = vmatpush.xpose.msra.mxu0 0.0
    %1957 = vmatpush.xpose.msra.mxu0 %v1942
    %1958 = vmatpush.xpose.msra.mxu0 %v1940
    %1959 = vmatpush.xpose.msra.mxu0 %v1938
    %1960 = vmatmul.f32.gmra.mxu0 %v1934
    %v1961 = vpop.f32.mrf.mxu0
    %v1962 = vadd.f32 0.0, %v1961
    %1963 = vmatmul.f32.gmra.mxu0 %v1936
    %v1964 = vpop.f32.mrf.mxu0
    %v1965 = vadd.f32 0.0, %v1964
    %1966 = vdwg.mxu0
    %1967 = vrot.lane.b32.xlu0 %v188, 112
    %v1968 = vpop.permute.xlu0 %1967
    %1969 = vrot.lane.b32.xlu0 %v191, 112
    %v1970 = vpop.permute.xlu0 %1969
    %1971 = vrot.lane.b32.xlu0 %v185, 80
    %v1972 = vpop.permute.xlu0 %1971
    %1973 = vrot.lane.b32.xlu0 %v188, 80
    %v1974 = vpop.permute.xlu0 %1973
    %1975 = vrot.lane.b32.xlu0 %v191, 80
    %v1976 = vpop.permute.xlu0 %1975
    %v1977 = vsel %vm196, %v1968, 0
    %v1979 = vsel %vm196, %v1970, 0
    %v1981 = vsel %vm196, %v1972, 0
    %v1983 = vsel %vm196, %v1974, 0
    %v1985 = vsel %vm196, %v1976, 0
    %1987 = vmatpush.xpose.msra.mxu0 0.0
    %1988 = vmatpush.xpose.msra.mxu0 0.0
    %1989 = vmatpush.xpose.msra.mxu0 0.0
    %1990 = vmatpush.xpose.msra.mxu0 0.0
    %1991 = vmatpush.xpose.msra.mxu0 0.0
    %1992 = vmatpush.xpose.msra.mxu0 0.0
    %1993 = vmatpush.xpose.msra.mxu0 0.0
    %1994 = vmatpush.xpose.msra.mxu0 0.0
    %1995 = vmatpush.xpose.msra.mxu0 0.0
    %1996 = vmatpush.xpose.msra.mxu0 0.0
    %1997 = vmatpush.xpose.msra.mxu0 0.0
    %1998 = vmatpush.xpose.msra.mxu0 0.0
    %1999 = vmatpush.xpose.msra.mxu0 0.0
    %2000 = vmatpush.xpose.msra.mxu0 %v1985
    %2001 = vmatpush.xpose.msra.mxu0 %v1983
    %2002 = vmatpush.xpose.msra.mxu0 %v1981
    %2003 = vmatmul.f32.gmra.mxu0 %v1977
    %v2004 = vpop.f32.mrf.mxu0
    %v2005 = vadd.f32 0.0, %v2004
    %2006 = vmatmul.f32.gmra.mxu0 %v1979
    %v2007 = vpop.f32.mrf.mxu0
    %v2008 = vadd.f32 0.0, %v2007
    %2009 = vdwg.mxu0
    %v2010 = vsel %vm845, %v1880, -inf
    %2011 = vmax.xlane.f32.xlu0 %v2010
    %v2012 = vpop.xlane.xlu0 %2011
    %v2013 = vsel %vm845, %v1883, -inf
    %2014 = vmax.xlane.f32.xlu0 %v2013
    %v2015 = vpop.xlane.xlu0 %2014
    %v2016 = vsel %vm845, %v1919, -inf
    %2017 = vmax.xlane.f32.xlu0 %v2016
    %v2018 = vpop.xlane.xlu0 %2017
    %v2019 = vsel %vm845, %v1922, -inf
    %2020 = vmax.xlane.f32.xlu0 %v2019
    %v2021 = vpop.xlane.xlu0 %2020
    %v2022 = vsel %vm845, %v1962, -inf
    %2023 = vmax.xlane.f32.xlu0 %v2022
    %v2024 = vpop.xlane.xlu0 %2023
    %v2025 = vsel %vm845, %v1965, -inf
    %2026 = vmax.xlane.f32.xlu0 %v2025
    %v2027 = vpop.xlane.xlu0 %2026
    %v2028 = vsel %vm845, %v2005, -inf
    %2029 = vmax.xlane.f32.xlu0 %v2028
    %v2030 = vpop.xlane.xlu0 %2029
    %v2031 = vsel %vm845, %v2008, -inf
    %2032 = vmax.xlane.f32.xlu0 %v2031
    %v2033 = vpop.xlane.xlu0 %2032
    %v2034 = vsub.f32 %v1880, %v2012
    %v2035 = vsub.f32 %v1883, %v2015
    %v2036 = vsub.f32 %v1919, %v2018
    %v2037 = vsub.f32 %v1922, %v2021
    %v2038 = vsub.f32 %v1962, %v2024
    %v2039 = vsub.f32 %v1965, %v2027
    %v2040 = vsub.f32 %v2005, %v2030
    %v2041 = vsub.f32 %v2008, %v2033
    %v2042 = vmul.f32 %v2034, 1.442695
    %v2043 = vpow.pop %v2042
    %v2044 = vmul.f32 %v2035, 1.442695
    %v2045 = vpow.pop %v2044
    %v2046 = vmul.f32 %v2036, 1.442695
    %v2047 = vpow.pop %v2046
    %v2048 = vmul.f32 %v2037, 1.442695
    %v2049 = vpow.pop %v2048
    %v2050 = vmul.f32 %v2038, 1.442695
    %v2051 = vpow.pop %v2050
    %v2052 = vmul.f32 %v2039, 1.442695
    %v2053 = vpow.pop %v2052
    %v2054 = vmul.f32 %v2040, 1.442695
    %v2055 = vpow.pop %v2054
    %v2056 = vmul.f32 %v2041, 1.442695
    %v2057 = vpow.pop %v2056
    %v2058 = vsel %vm845, %v2043, 0.0
    %2059 = vadd.xlane.f32.xlu0 %v2058
    %v2060 = vpop.xlane.xlu0 %2059
    %v2061 = vsel %vm845, %v2045, 0.0
    %2062 = vadd.xlane.f32.xlu0 %v2061
    %v2063 = vpop.xlane.xlu0 %2062
    %v2064 = vsel %vm845, %v2047, 0.0
    %2065 = vadd.xlane.f32.xlu0 %v2064
    %v2066 = vpop.xlane.xlu0 %2065
    %v2067 = vsel %vm845, %v2049, 0.0
    %2068 = vadd.xlane.f32.xlu0 %v2067
    %v2069 = vpop.xlane.xlu0 %2068
    %v2070 = vsel %vm845, %v2051, 0.0
    %2071 = vadd.xlane.f32.xlu0 %v2070
    %v2072 = vpop.xlane.xlu0 %2071
    %v2073 = vsel %vm845, %v2053, 0.0
    %2074 = vadd.xlane.f32.xlu0 %v2073
    %v2075 = vpop.xlane.xlu0 %2074
    %v2076 = vsel %vm845, %v2055, 0.0
    %2077 = vadd.xlane.f32.xlu0 %v2076
    %v2078 = vpop.xlane.xlu0 %2077
    %v2079 = vsel %vm845, %v2057, 0.0
    %2080 = vadd.xlane.f32.xlu0 %v2079
    %v2081 = vpop.xlane.xlu0 %2080
    %v2082 = vrcp.pop %v2060
    %v2083 = vmul.f32 %v2060, %v2082
    %v2084 = vsub.f32 1.0, %v2083
    %v2085 = vmul.f32 %v2082, %v2084
    %v2086 = vadd.f32 %v2082, %v2085
    %vm2087 = vweird.f32 %v2060
    %vm2088 = vweird.f32 %v2082
    %vm2089 = vmor %vm2087, %vm2088
    %v2090 = vsel %vm2089, %v2082, %v2086
    %v2091 = vand.u32 2147483647, %v2060
    %vm2092 = vcmp.eq.f32.partialorder %v2091, 8.507059e+37
    %v2093 = vand.u32 %v2060, 2147483648
    %v2094 = vor.u32 1.1754944e-38, %v2093
    %v2095 = vsel %vm2092, %v2094, %v2090
    %v2096 = vmul.f32 %v2043, %v2095
    %v2097 = vrcp.pop %v2063
    %v2098 = vmul.f32 %v2063, %v2097
    %v2099 = vsub.f32 1.0, %v2098
    %v2100 = vmul.f32 %v2097, %v2099
    %v2101 = vadd.f32 %v2097, %v2100
    %vm2102 = vweird.f32 %v2063
    %vm2103 = vweird.f32 %v2097
    %vm2104 = vmor %vm2102, %vm2103
    %v2105 = vsel %vm2104, %v2097, %v2101
    %v2106 = vand.u32 2147483647, %v2063
    %vm2107 = vcmp.eq.f32.partialorder %v2106, 8.507059e+37
    %v2108 = vand.u32 %v2063, 2147483648
    %v2109 = vor.u32 1.1754944e-38, %v2108
    %v2110 = vsel %vm2107, %v2109, %v2105
    %v2111 = vmul.f32 %v2045, %v2110
    %v2112 = vrcp.pop %v2066
    %v2113 = vmul.f32 %v2066, %v2112
    %v2114 = vsub.f32 1.0, %v2113
    %v2115 = vmul.f32 %v2112, %v2114
    %v2116 = vadd.f32 %v2112, %v2115
    %vm2117 = vweird.f32 %v2066
    %vm2118 = vweird.f32 %v2112
    %vm2119 = vmor %vm2117, %vm2118
    %v2120 = vsel %vm2119, %v2112, %v2116
    %v2121 = vand.u32 2147483647, %v2066
    %vm2122 = vcmp.eq.f32.partialorder %v2121, 8.507059e+37
    %v2123 = vand.u32 %v2066, 2147483648
    %v2124 = vor.u32 1.1754944e-38, %v2123
    %v2125 = vsel %vm2122, %v2124, %v2120
    %v2126 = vmul.f32 %v2047, %v2125
    %v2127 = vrcp.pop %v2069
    %v2128 = vmul.f32 %v2069, %v2127
    %v2129 = vsub.f32 1.0, %v2128
    %v2130 = vmul.f32 %v2127, %v2129
    %v2131 = vadd.f32 %v2127, %v2130
    %vm2132 = vweird.f32 %v2069
    %vm2133 = vweird.f32 %v2127
    %vm2134 = vmor %vm2132, %vm2133
    %v2135 = vsel %vm2134, %v2127, %v2131
    %v2136 = vand.u32 2147483647, %v2069
    %vm2137 = vcmp.eq.f32.partialorder %v2136, 8.507059e+37
    %v2138 = vand.u32 %v2069, 2147483648
    %v2139 = vor.u32 1.1754944e-38, %v2138
    %v2140 = vsel %vm2137, %v2139, %v2135
    %v2141 = vmul.f32 %v2049, %v2140
    %v2142 = vrcp.pop %v2072
    %v2143 = vmul.f32 %v2072, %v2142
    %v2144 = vsub.f32 1.0, %v2143
    %v2145 = vmul.f32 %v2142, %v2144
    %v2146 = vadd.f32 %v2142, %v2145
    %vm2147 = vweird.f32 %v2072
    %vm2148 = vweird.f32 %v2142
    %vm2149 = vmor %vm2147, %vm2148
    %v2150 = vsel %vm2149, %v2142, %v2146
    %v2151 = vand.u32 2147483647, %v2072
    %vm2152 = vcmp.eq.f32.partialorder %v2151, 8.507059e+37
    %v2153 = vand.u32 %v2072, 2147483648
    %v2154 = vor.u32 1.1754944e-38, %v2153
    %v2155 = vsel %vm2152, %v2154, %v2150
    %v2156 = vmul.f32 %v2051, %v2155
    %v2157 = vrcp.pop %v2075
    %v2158 = vmul.f32 %v2075, %v2157
    %v2159 = vsub.f32 1.0, %v2158
    %v2160 = vmul.f32 %v2157, %v2159
    %v2161 = vadd.f32 %v2157, %v2160
    %vm2162 = vweird.f32 %v2075
    %vm2163 = vweird.f32 %v2157
    %vm2164 = vmor %vm2162, %vm2163
    %v2165 = vsel %vm2164, %v2157, %v2161
    %v2166 = vand.u32 2147483647, %v2075
    %vm2167 = vcmp.eq.f32.partialorder %v2166, 8.507059e+37
    %v2168 = vand.u32 %v2075, 2147483648
    %v2169 = vor.u32 1.1754944e-38, %v2168
    %v2170 = vsel %vm2167, %v2169, %v2165
    %v2171 = vmul.f32 %v2053, %v2170
    %v2172 = vrcp.pop %v2078
    %v2173 = vmul.f32 %v2078, %v2172
    %v2174 = vsub.f32 1.0, %v2173
    %v2175 = vmul.f32 %v2172, %v2174
    %v2176 = vadd.f32 %v2172, %v2175
    %vm2177 = vweird.f32 %v2078
    %vm2178 = vweird.f32 %v2172
    %vm2179 = vmor %vm2177, %vm2178
    %v2180 = vsel %vm2179, %v2172, %v2176
    %v2181 = vand.u32 2147483647, %v2078
    %vm2182 = vcmp.eq.f32.partialorder %v2181, 8.507059e+37
    %v2183 = vand.u32 %v2078, 2147483648
    %v2184 = vor.u32 1.1754944e-38, %v2183
    %v2185 = vsel %vm2182, %v2184, %v2180
    %v2186 = vmul.f32 %v2055, %v2185
    %v2187 = vrcp.pop %v2081
    %v2188 = vmul.f32 %v2081, %v2187
    %v2189 = vsub.f32 1.0, %v2188
    %v2190 = vmul.f32 %v2187, %v2189
    %v2191 = vadd.f32 %v2187, %v2190
    %vm2192 = vweird.f32 %v2081
    %vm2193 = vweird.f32 %v2187
    %vm2194 = vmor %vm2192, %vm2193
    %v2195 = vsel %vm2194, %v2187, %v2191
    %v2196 = vand.u32 2147483647, %v2081
    %vm2197 = vcmp.eq.f32.partialorder %v2196, 8.507059e+37
    %v2198 = vand.u32 %v2081, 2147483648
    %v2199 = vor.u32 1.1754944e-38, %v2198
    %v2200 = vsel %vm2197, %v2199, %v2195
    %v2201 = vmul.f32 %v2057, %v2200
    %2202 = vrot.lane.b32.xlu0 %v161, 48
    %v2203 = vpop.permute.xlu0 %2202
    %2204 = vrot.lane.b32.xlu0 %v164, 48
    %v2205 = vpop.permute.xlu0 %2204
    %v2209 = vsel %vm845, %v2096, 0
    %v2212 = vsel %vm845, %v2111, 0
    %2214 = vmatpush.msra.mxu0 0.0
    %2215 = vmatpush.msra.mxu0 0.0
    %2216 = vmatpush.msra.mxu0 0.0
    %2217 = vmatpush.msra.mxu0 0.0
    %2218 = vmatpush.msra.mxu0 0.0
    %2219 = vmatpush.msra.mxu0 0.0
    %2220 = vmatpush.msra.mxu0 0.0
    %2221 = vmatpush.msra.mxu0 0.0
    %2222 = vmatpush.msra.mxu0 0.0
    %2223 = vmatpush.msra.mxu0 0.0
    %2224 = vmatpush.msra.mxu0 0.0
    %2225 = vmatpush.msra.mxu0 0.0
    %2226 = vmatpush.msra.mxu0 0.0
    %2227 = vmatpush.msra.mxu0 %v2205
    %2228 = vmatpush.msra.mxu0 %v2203
    %2229 = vmatpush.msra.mxu0 %v609
    %2230 = vmatmul.f32.gmra.mxu0 %v2209
    %v2231 = vpop.f32.mrf.mxu0
    %v2232 = vadd.f32 0.0, %v2231
    %2233 = vmatmul.f32.gmra.mxu0 %v2212
    %v2234 = vpop.f32.mrf.mxu0
    %v2235 = vadd.f32 0.0, %v2234
    %2236 = vdwg.mxu0
    %2237 = vrot.lane.b32.xlu0 %v170, 48
    %v2238 = vpop.permute.xlu0 %2237
    %2239 = vrot.lane.b32.xlu0 %v173, 48
    %v2240 = vpop.permute.xlu0 %2239
    %v2244 = vsel %vm845, %v2126, 0
    %v2247 = vsel %vm845, %v2141, 0
    %2249 = vmatpush.msra.mxu0 0.0
    %2250 = vmatpush.msra.mxu0 0.0
    %2251 = vmatpush.msra.mxu0 0.0
    %2252 = vmatpush.msra.mxu0 0.0
    %2253 = vmatpush.msra.mxu0 0.0
    %2254 = vmatpush.msra.mxu0 0.0
    %2255 = vmatpush.msra.mxu0 0.0
    %2256 = vmatpush.msra.mxu0 0.0
    %2257 = vmatpush.msra.mxu0 0.0
    %2258 = vmatpush.msra.mxu0 0.0
    %2259 = vmatpush.msra.mxu0 0.0
    %2260 = vmatpush.msra.mxu0 0.0
    %2261 = vmatpush.msra.mxu0 0.0
    %2262 = vmatpush.msra.mxu0 %v2240
    %2263 = vmatpush.msra.mxu0 %v2238
    %2264 = vmatpush.msra.mxu0 %v635
    %2265 = vmatmul.f32.gmra.mxu0 %v2244
    %v2266 = vpop.f32.mrf.mxu0
    %v2267 = vadd.f32 0.0, %v2266
    %2268 = vmatmul.f32.gmra.mxu0 %v2247
    %v2269 = vpop.f32.mrf.mxu0
    %v2270 = vadd.f32 0.0, %v2269
    %2271 = vdwg.mxu0
    %2272 = vrot.lane.b32.xlu0 %v176, 48
    %v2273 = vpop.permute.xlu0 %2272
    %2274 = vrot.lane.b32.xlu0 %v179, 48
    %v2275 = vpop.permute.xlu0 %2274
    %2276 = vrot.lane.b32.xlu0 %v182, 48
    %v2277 = vpop.permute.xlu0 %2276
    %v2282 = vsel %vm845, %v2156, 0
    %v2285 = vsel %vm845, %v2171, 0
    %2287 = vmatpush.msra.mxu0 0.0
    %2288 = vmatpush.msra.mxu0 0.0
    %2289 = vmatpush.msra.mxu0 0.0
    %2290 = vmatpush.msra.mxu0 0.0
    %2291 = vmatpush.msra.mxu0 0.0
    %2292 = vmatpush.msra.mxu0 0.0
    %2293 = vmatpush.msra.mxu0 0.0
    %2294 = vmatpush.msra.mxu0 0.0
    %2295 = vmatpush.msra.mxu0 0.0
    %2296 = vmatpush.msra.mxu0 0.0
    %2297 = vmatpush.msra.mxu0 0.0
    %2298 = vmatpush.msra.mxu0 0.0
    %2299 = vmatpush.msra.mxu0 0.0
    %2300 = vmatpush.msra.mxu0 %v2277
    %2301 = vmatpush.msra.mxu0 %v2275
    %2302 = vmatpush.msra.mxu0 %v2273
    %2303 = vmatmul.f32.gmra.mxu0 %v2282
    %v2304 = vpop.f32.mrf.mxu0
    %v2305 = vadd.f32 0.0, %v2304
    %2306 = vmatmul.f32.gmra.mxu0 %v2285
    %v2307 = vpop.f32.mrf.mxu0
    %v2308 = vadd.f32 0.0, %v2307
    %2309 = vdwg.mxu0
    %2310 = vrot.lane.b32.xlu0 %v185, 48
    %v2311 = vpop.permute.xlu0 %2310
    %2312 = vrot.lane.b32.xlu0 %v188, 48
    %v2313 = vpop.permute.xlu0 %2312
    %2314 = vrot.lane.b32.xlu0 %v191, 48
    %v2315 = vpop.permute.xlu0 %2314
    %v2320 = vsel %vm845, %v2186, 0
    %v2323 = vsel %vm845, %v2201, 0
    %2325 = vmatpush.msra.mxu0 0.0
    %2326 = vmatpush.msra.mxu0 0.0
    %2327 = vmatpush.msra.mxu0 0.0
    %2328 = vmatpush.msra.mxu0 0.0
    %2329 = vmatpush.msra.mxu0 0.0
    %2330 = vmatpush.msra.mxu0 0.0
    %2331 = vmatpush.msra.mxu0 0.0
    %2332 = vmatpush.msra.mxu0 0.0
    %2333 = vmatpush.msra.mxu0 0.0
    %2334 = vmatpush.msra.mxu0 0.0
    %2335 = vmatpush.msra.mxu0 0.0
    %2336 = vmatpush.msra.mxu0 0.0
    %2337 = vmatpush.msra.mxu0 0.0
    %2338 = vmatpush.msra.mxu0 %v2315
    %2339 = vmatpush.msra.mxu0 %v2313
    %2340 = vmatpush.msra.mxu0 %v2311
    %2341 = vmatmul.f32.gmra.mxu0 %v2320
    %v2342 = vpop.f32.mrf.mxu0
    %v2343 = vadd.f32 0.0, %v2342
    %2344 = vmatmul.f32.gmra.mxu0 %v2323
    %v2345 = vpop.f32.mrf.mxu0
    %v2346 = vadd.f32 0.0, %v2345
    %2347 = vdwg.mxu0
    %2348 = vrot.lane.b32.xlu0 %v161, 104
    %v2349 = vpop.permute.xlu0 %2348
    %2350 = vrot.lane.b32.xlu0 %v164, 104
    %v2351 = vpop.permute.xlu0 %2350
    %2352 = vrot.lane.b32.xlu0 %v161, 72
    %v2353 = vpop.permute.xlu0 %2352
    %2354 = vrot.lane.b32.xlu0 %v164, 72
    %v2355 = vpop.permute.xlu0 %2354
    %v2356 = vsel %vm196, %v2349, 0
    %v2358 = vsel %vm196, %v2351, 0
    %v2360 = vsel %vm196, %v2353, 0
    %v2362 = vsel %vm196, %v2355, 0
    %2364 = vmatpush.xpose.msra.mxu0 0.0
    %2365 = vmatpush.xpose.msra.mxu0 0.0
    %2366 = vmatpush.xpose.msra.mxu0 0.0
    %2367 = vmatpush.xpose.msra.mxu0 0.0
    %2368 = vmatpush.xpose.msra.mxu0 0.0
    %2369 = vmatpush.xpose.msra.mxu0 0.0
    %2370 = vmatpush.xpose.msra.mxu0 0.0
    %2371 = vmatpush.xpose.msra.mxu0 0.0
    %2372 = vmatpush.xpose.msra.mxu0 0.0
    %2373 = vmatpush.xpose.msra.mxu0 0.0
    %2374 = vmatpush.xpose.msra.mxu0 0.0
    %2375 = vmatpush.xpose.msra.mxu0 0.0
    %2376 = vmatpush.xpose.msra.mxu0 0.0
    %2377 = vmatpush.xpose.msra.mxu0 %v2362
    %2378 = vmatpush.xpose.msra.mxu0 %v2360
    %2379 = vmatpush.xpose.msra.mxu0 %v666
    %2380 = vmatmul.f32.gmra.mxu0 %v2356
    %v2381 = vpop.f32.mrf.mxu0
    %v2382 = vadd.f32 0.0, %v2381
    %2383 = vmatmul.f32.gmra.mxu0 %v2358
    %v2384 = vpop.f32.mrf.mxu0
    %v2385 = vadd.f32 0.0, %v2384
    %2386 = vdwg.mxu0
    %2387 = vrot.lane.b32.xlu0 %v170, 104
    %v2388 = vpop.permute.xlu0 %2387
    %2389 = vrot.lane.b32.xlu0 %v173, 104
    %v2390 = vpop.permute.xlu0 %2389
    %2391 = vrot.lane.b32.xlu0 %v170, 72
    %v2392 = vpop.permute.xlu0 %2391
    %2393 = vrot.lane.b32.xlu0 %v173, 72
    %v2394 = vpop.permute.xlu0 %2393
    %v2395 = vsel %vm196, %v2388, 0
    %v2397 = vsel %vm196, %v2390, 0
    %v2399 = vsel %vm196, %v2392, 0
    %v2401 = vsel %vm196, %v2394, 0
    %2403 = vmatpush.xpose.msra.mxu0 0.0
    %2404 = vmatpush.xpose.msra.mxu0 0.0
    %2405 = vmatpush.xpose.msra.mxu0 0.0
    %2406 = vmatpush.xpose.msra.mxu0 0.0
    %2407 = vmatpush.xpose.msra.mxu0 0.0
    %2408 = vmatpush.xpose.msra.mxu0 0.0
    %2409 = vmatpush.xpose.msra.mxu0 0.0
    %2410 = vmatpush.xpose.msra.mxu0 0.0
    %2411 = vmatpush.xpose.msra.mxu0 0.0
    %2412 = vmatpush.xpose.msra.mxu0 0.0
    %2413 = vmatpush.xpose.msra.mxu0 0.0
    %2414 = vmatpush.xpose.msra.mxu0 0.0
    %2415 = vmatpush.xpose.msra.mxu0 0.0
    %2416 = vmatpush.xpose.msra.mxu0 %v2401
    %2417 = vmatpush.xpose.msra.mxu0 %v2399
    %2418 = vmatpush.xpose.msra.mxu0 %v694
    %2419 = vmatmul.f32.gmra.mxu0 %v2395
    %v2420 = vpop.f32.mrf.mxu0
    %v2421 = vadd.f32 0.0, %v2420
    %2422 = vmatmul.f32.gmra.mxu0 %v2397
    %v2423 = vpop.f32.mrf.mxu0
    %v2424 = vadd.f32 0.0, %v2423
    %2425 = vdwg.mxu0
    %2426 = vrot.lane.b32.xlu0 %v179, 104
    %v2427 = vpop.permute.xlu0 %2426
    %2428 = vrot.lane.b32.xlu0 %v182, 104
    %v2429 = vpop.permute.xlu0 %2428
    %2430 = vrot.lane.b32.xlu0 %v176, 72
    %v2431 = vpop.permute.xlu0 %2430
    %2432 = vrot.lane.b32.xlu0 %v179, 72
    %v2433 = vpop.permute.xlu0 %2432
    %2434 = vrot.lane.b32.xlu0 %v182, 72
    %v2435 = vpop.permute.xlu0 %2434
    %v2436 = vsel %vm196, %v2427, 0
    %v2438 = vsel %vm196, %v2429, 0
    %v2440 = vsel %vm196, %v2431, 0
    %v2442 = vsel %vm196, %v2433, 0
    %v2444 = vsel %vm196, %v2435, 0
    %2446 = vmatpush.xpose.msra.mxu0 0.0
    %2447 = vmatpush.xpose.msra.mxu0 0.0
    %2448 = vmatpush.xpose.msra.mxu0 0.0
    %2449 = vmatpush.xpose.msra.mxu0 0.0
    %2450 = vmatpush.xpose.msra.mxu0 0.0
    %2451 = vmatpush.xpose.msra.mxu0 0.0
    %2452 = vmatpush.xpose.msra.mxu0 0.0
    %2453 = vmatpush.xpose.msra.mxu0 0.0
    %2454 = vmatpush.xpose.msra.mxu0 0.0
    %2455 = vmatpush.xpose.msra.mxu0 0.0
    %2456 = vmatpush.xpose.msra.mxu0 0.0
    %2457 = vmatpush.xpose.msra.mxu0 0.0
    %2458 = vmatpush.xpose.msra.mxu0 0.0
    %2459 = vmatpush.xpose.msra.mxu0 %v2444
    %2460 = vmatpush.xpose.msra.mxu0 %v2442
    %2461 = vmatpush.xpose.msra.mxu0 %v2440
    %2462 = vmatmul.f32.gmra.mxu0 %v2436
    %v2463 = vpop.f32.mrf.mxu0
    %v2464 = vadd.f32 0.0, %v2463
    %2465 = vmatmul.f32.gmra.mxu0 %v2438
    %v2466 = vpop.f32.mrf.mxu0
    %v2467 = vadd.f32 0.0, %v2466
    %2468 = vdwg.mxu0
    %2469 = vrot.lane.b32.xlu0 %v188, 104
    %v2470 = vpop.permute.xlu0 %2469
    %2471 = vrot.lane.b32.xlu0 %v191, 104
    %v2472 = vpop.permute.xlu0 %2471
    %2473 = vrot.lane.b32.xlu0 %v185, 72
    %v2474 = vpop.permute.xlu0 %2473
    %2475 = vrot.lane.b32.xlu0 %v188, 72
    %v2476 = vpop.permute.xlu0 %2475
    %2477 = vrot.lane.b32.xlu0 %v191, 72
    %v2478 = vpop.permute.xlu0 %2477
    %v2479 = vsel %vm196, %v2470, 0
    %v2481 = vsel %vm196, %v2472, 0
    %v2483 = vsel %vm196, %v2474, 0
    %v2485 = vsel %vm196, %v2476, 0
    %v2487 = vsel %vm196, %v2478, 0
    %2489 = vmatpush.xpose.msra.mxu0 0.0
    %2490 = vmatpush.xpose.msra.mxu0 0.0
    %2491 = vmatpush.xpose.msra.mxu0 0.0
    %2492 = vmatpush.xpose.msra.mxu0 0.0
    %2493 = vmatpush.xpose.msra.mxu0 0.0
    %2494 = vmatpush.xpose.msra.mxu0 0.0
    %2495 = vmatpush.xpose.msra.mxu0 0.0
    %2496 = vmatpush.xpose.msra.mxu0 0.0
    %2497 = vmatpush.xpose.msra.mxu0 0.0
    %2498 = vmatpush.xpose.msra.mxu0 0.0
    %2499 = vmatpush.xpose.msra.mxu0 0.0
    %2500 = vmatpush.xpose.msra.mxu0 0.0
    %2501 = vmatpush.xpose.msra.mxu0 0.0
    %2502 = vmatpush.xpose.msra.mxu0 %v2487
    %2503 = vmatpush.xpose.msra.mxu0 %v2485
    %2504 = vmatpush.xpose.msra.mxu0 %v2483
    %2505 = vmatmul.f32.gmra.mxu0 %v2479
    %v2506 = vpop.f32.mrf.mxu0
    %v2507 = vadd.f32 0.0, %v2506
    %2508 = vmatmul.f32.gmra.mxu0 %v2481
    %v2509 = vpop.f32.mrf.mxu0
    %v2510 = vadd.f32 0.0, %v2509
    %2511 = vdwg.mxu0
    %v2512 = vsel %vm845, %v2382, -inf
    %2513 = vmax.xlane.f32.xlu0 %v2512
    %v2514 = vpop.xlane.xlu0 %2513
    %v2515 = vsel %vm845, %v2385, -inf
    %2516 = vmax.xlane.f32.xlu0 %v2515
    %v2517 = vpop.xlane.xlu0 %2516
    %v2518 = vsel %vm845, %v2421, -inf
    %2519 = vmax.xlane.f32.xlu0 %v2518
    %v2520 = vpop.xlane.xlu0 %2519
    %v2521 = vsel %vm845, %v2424, -inf
    %2522 = vmax.xlane.f32.xlu0 %v2521
    %v2523 = vpop.xlane.xlu0 %2522
    %v2524 = vsel %vm845, %v2464, -inf
    %2525 = vmax.xlane.f32.xlu0 %v2524
    %v2526 = vpop.xlane.xlu0 %2525
    %v2527 = vsel %vm845, %v2467, -inf
    %2528 = vmax.xlane.f32.xlu0 %v2527
    %v2529 = vpop.xlane.xlu0 %2528
    %v2530 = vsel %vm845, %v2507, -inf
    %2531 = vmax.xlane.f32.xlu0 %v2530
    %v2532 = vpop.xlane.xlu0 %2531
    %v2533 = vsel %vm845, %v2510, -inf
    %2534 = vmax.xlane.f32.xlu0 %v2533
    %v2535 = vpop.xlane.xlu0 %2534
    %v2536 = vsub.f32 %v2382, %v2514
    %v2537 = vsub.f32 %v2385, %v2517
    %v2538 = vsub.f32 %v2421, %v2520
    %v2539 = vsub.f32 %v2424, %v2523
    %v2540 = vsub.f32 %v2464, %v2526
    %v2541 = vsub.f32 %v2467, %v2529
    %v2542 = vsub.f32 %v2507, %v2532
    %v2543 = vsub.f32 %v2510, %v2535
    %v2544 = vmul.f32 %v2536, 1.442695
    %v2545 = vpow.pop %v2544
    %v2546 = vmul.f32 %v2537, 1.442695
    %v2547 = vpow.pop %v2546
    %v2548 = vmul.f32 %v2538, 1.442695
    %v2549 = vpow.pop %v2548
    %v2550 = vmul.f32 %v2539, 1.442695
    %v2551 = vpow.pop %v2550
    %v2552 = vmul.f32 %v2540, 1.442695
    %v2553 = vpow.pop %v2552
    %v2554 = vmul.f32 %v2541, 1.442695
    %v2555 = vpow.pop %v2554
    %v2556 = vmul.f32 %v2542, 1.442695
    %v2557 = vpow.pop %v2556
    %v2558 = vmul.f32 %v2543, 1.442695
    %v2559 = vpow.pop %v2558
    %v2560 = vsel %vm845, %v2545, 0.0
    %2561 = vadd.xlane.f32.xlu0 %v2560
    %v2562 = vpop.xlane.xlu0 %2561
    %v2563 = vsel %vm845, %v2547, 0.0
    %2564 = vadd.xlane.f32.xlu0 %v2563
    %v2565 = vpop.xlane.xlu0 %2564
    %v2566 = vsel %vm845, %v2549, 0.0
    %2567 = vadd.xlane.f32.xlu0 %v2566
    %v2568 = vpop.xlane.xlu0 %2567
    %v2569 = vsel %vm845, %v2551, 0.0
    %2570 = vadd.xlane.f32.xlu0 %v2569
    %v2571 = vpop.xlane.xlu0 %2570
    %v2572 = vsel %vm845, %v2553, 0.0
    %2573 = vadd.xlane.f32.xlu0 %v2572
    %v2574 = vpop.xlane.xlu0 %2573
    %v2575 = vsel %vm845, %v2555, 0.0
    %2576 = vadd.xlane.f32.xlu0 %v2575
    %v2577 = vpop.xlane.xlu0 %2576
    %v2578 = vsel %vm845, %v2557, 0.0
    %2579 = vadd.xlane.f32.xlu0 %v2578
    %v2580 = vpop.xlane.xlu0 %2579
    %v2581 = vsel %vm845, %v2559, 0.0
    %2582 = vadd.xlane.f32.xlu0 %v2581
    %v2583 = vpop.xlane.xlu0 %2582
    %v2584 = vrcp.pop %v2562
    %v2585 = vmul.f32 %v2562, %v2584
    %v2586 = vsub.f32 1.0, %v2585
    %v2587 = vmul.f32 %v2584, %v2586
    %v2588 = vadd.f32 %v2584, %v2587
    %vm2589 = vweird.f32 %v2562
    %vm2590 = vweird.f32 %v2584
    %vm2591 = vmor %vm2589, %vm2590
    %v2592 = vsel %vm2591, %v2584, %v2588
    %v2593 = vand.u32 2147483647, %v2562
    %vm2594 = vcmp.eq.f32.partialorder %v2593, 8.507059e+37
    %v2595 = vand.u32 %v2562, 2147483648
    %v2596 = vor.u32 1.1754944e-38, %v2595
    %v2597 = vsel %vm2594, %v2596, %v2592
    %v2598 = vmul.f32 %v2545, %v2597
    %v2599 = vrcp.pop %v2565
    %v2600 = vmul.f32 %v2565, %v2599
    %v2601 = vsub.f32 1.0, %v2600
    %v2602 = vmul.f32 %v2599, %v2601
    %v2603 = vadd.f32 %v2599, %v2602
    %vm2604 = vweird.f32 %v2565
    %vm2605 = vweird.f32 %v2599
    %vm2606 = vmor %vm2604, %vm2605
    %v2607 = vsel %vm2606, %v2599, %v2603
    %v2608 = vand.u32 2147483647, %v2565
    %vm2609 = vcmp.eq.f32.partialorder %v2608, 8.507059e+37
    %v2610 = vand.u32 %v2565, 2147483648
    %v2611 = vor.u32 1.1754944e-38, %v2610
    %v2612 = vsel %vm2609, %v2611, %v2607
    %v2613 = vmul.f32 %v2547, %v2612
    %v2614 = vrcp.pop %v2568
    %v2615 = vmul.f32 %v2568, %v2614
    %v2616 = vsub.f32 1.0, %v2615
    %v2617 = vmul.f32 %v2614, %v2616
    %v2618 = vadd.f32 %v2614, %v2617
    %vm2619 = vweird.f32 %v2568
    %vm2620 = vweird.f32 %v2614
    %vm2621 = vmor %vm2619, %vm2620
    %v2622 = vsel %vm2621, %v2614, %v2618
    %v2623 = vand.u32 2147483647, %v2568
    %vm2624 = vcmp.eq.f32.partialorder %v2623, 8.507059e+37
    %v2625 = vand.u32 %v2568, 2147483648
    %v2626 = vor.u32 1.1754944e-38, %v2625
    %v2627 = vsel %vm2624, %v2626, %v2622
    %v2628 = vmul.f32 %v2549, %v2627
    %v2629 = vrcp.pop %v2571
    %v2630 = vmul.f32 %v2571, %v2629
    %v2631 = vsub.f32 1.0, %v2630
    %v2632 = vmul.f32 %v2629, %v2631
    %v2633 = vadd.f32 %v2629, %v2632
    %vm2634 = vweird.f32 %v2571
    %vm2635 = vweird.f32 %v2629
    %vm2636 = vmor %vm2634, %vm2635
    %v2637 = vsel %vm2636, %v2629, %v2633
    %v2638 = vand.u32 2147483647, %v2571
    %vm2639 = vcmp.eq.f32.partialorder %v2638, 8.507059e+37
    %v2640 = vand.u32 %v2571, 2147483648
    %v2641 = vor.u32 1.1754944e-38, %v2640
    %v2642 = vsel %vm2639, %v2641, %v2637
    %v2643 = vmul.f32 %v2551, %v2642
    %v2644 = vrcp.pop %v2574
    %v2645 = vmul.f32 %v2574, %v2644
    %v2646 = vsub.f32 1.0, %v2645
    %v2647 = vmul.f32 %v2644, %v2646
    %v2648 = vadd.f32 %v2644, %v2647
    %vm2649 = vweird.f32 %v2574
    %vm2650 = vweird.f32 %v2644
    %vm2651 = vmor %vm2649, %vm2650
    %v2652 = vsel %vm2651, %v2644, %v2648
    %v2653 = vand.u32 2147483647, %v2574
    %vm2654 = vcmp.eq.f32.partialorder %v2653, 8.507059e+37
    %v2655 = vand.u32 %v2574, 2147483648
    %v2656 = vor.u32 1.1754944e-38, %v2655
    %v2657 = vsel %vm2654, %v2656, %v2652
    %v2658 = vmul.f32 %v2553, %v2657
    %v2659 = vrcp.pop %v2577
    %v2660 = vmul.f32 %v2577, %v2659
    %v2661 = vsub.f32 1.0, %v2660
    %v2662 = vmul.f32 %v2659, %v2661
    %v2663 = vadd.f32 %v2659, %v2662
    %vm2664 = vweird.f32 %v2577
    %vm2665 = vweird.f32 %v2659
    %vm2666 = vmor %vm2664, %vm2665
    %v2667 = vsel %vm2666, %v2659, %v2663
    %v2668 = vand.u32 2147483647, %v2577
    %vm2669 = vcmp.eq.f32.partialorder %v2668, 8.507059e+37
    %v2670 = vand.u32 %v2577, 2147483648
    %v2671 = vor.u32 1.1754944e-38, %v2670
    %v2672 = vsel %vm2669, %v2671, %v2667
    %v2673 = vmul.f32 %v2555, %v2672
    %v2674 = vrcp.pop %v2580
    %v2675 = vmul.f32 %v2580, %v2674
    %v2676 = vsub.f32 1.0, %v2675
    %v2677 = vmul.f32 %v2674, %v2676
    %v2678 = vadd.f32 %v2674, %v2677
    %vm2679 = vweird.f32 %v2580
    %vm2680 = vweird.f32 %v2674
    %vm2681 = vmor %vm2679, %vm2680
    %v2682 = vsel %vm2681, %v2674, %v2678
    %v2683 = vand.u32 2147483647, %v2580
    %vm2684 = vcmp.eq.f32.partialorder %v2683, 8.507059e+37
    %v2685 = vand.u32 %v2580, 2147483648
    %v2686 = vor.u32 1.1754944e-38, %v2685
    %v2687 = vsel %vm2684, %v2686, %v2682
    %v2688 = vmul.f32 %v2557, %v2687
    %v2689 = vrcp.pop %v2583
    %v2690 = vmul.f32 %v2583, %v2689
    %v2691 = vsub.f32 1.0, %v2690
    %v2692 = vmul.f32 %v2689, %v2691
    %v2693 = vadd.f32 %v2689, %v2692
    %vm2694 = vweird.f32 %v2583
    %vm2695 = vweird.f32 %v2689
    %vm2696 = vmor %vm2694, %vm2695
    %v2697 = vsel %vm2696, %v2689, %v2693
    %v2698 = vand.u32 2147483647, %v2583
    %vm2699 = vcmp.eq.f32.partialorder %v2698, 8.507059e+37
    %v2700 = vand.u32 %v2583, 2147483648
    %v2701 = vor.u32 1.1754944e-38, %v2700
    %v2702 = vsel %vm2699, %v2701, %v2697
    %v2703 = vmul.f32 %v2559, %v2702
    %2704 = vrot.lane.b32.xlu0 %v161, 40
    %v2705 = vpop.permute.xlu0 %2704
    %2706 = vrot.lane.b32.xlu0 %v164, 40
    %v2707 = vpop.permute.xlu0 %2706
    %v2711 = vsel %vm845, %v2598, 0
    %v2714 = vsel %vm845, %v2613, 0
    %2716 = vmatpush.msra.mxu0 0.0
    %2717 = vmatpush.msra.mxu0 0.0
    %2718 = vmatpush.msra.mxu0 0.0
    %2719 = vmatpush.msra.mxu0 0.0
    %2720 = vmatpush.msra.mxu0 0.0
    %2721 = vmatpush.msra.mxu0 0.0
    %2722 = vmatpush.msra.mxu0 0.0
    %2723 = vmatpush.msra.mxu0 0.0
    %2724 = vmatpush.msra.mxu0 0.0
    %2725 = vmatpush.msra.mxu0 0.0
    %2726 = vmatpush.msra.mxu0 0.0
    %2727 = vmatpush.msra.mxu0 0.0
    %2728 = vmatpush.msra.mxu0 0.0
    %2729 = vmatpush.msra.mxu0 %v2707
    %2730 = vmatpush.msra.mxu0 %v2705
    %2731 = vmatpush.msra.mxu0 %v765
    %2732 = vmatmul.f32.gmra.mxu0 %v2711
    %v2733 = vpop.f32.mrf.mxu0
    %v2734 = vadd.f32 0.0, %v2733
    %2735 = vmatmul.f32.gmra.mxu0 %v2714
    %v2736 = vpop.f32.mrf.mxu0
    %v2737 = vadd.f32 0.0, %v2736
    %2738 = vdwg.mxu0
    %2739 = vrot.lane.b32.xlu0 %v170, 40
    %v2740 = vpop.permute.xlu0 %2739
    %2741 = vrot.lane.b32.xlu0 %v173, 40
    %v2742 = vpop.permute.xlu0 %2741
    %v2746 = vsel %vm845, %v2628, 0
    %v2749 = vsel %vm845, %v2643, 0
    %2751 = vmatpush.msra.mxu0 0.0
    %2752 = vmatpush.msra.mxu0 0.0
    %2753 = vmatpush.msra.mxu0 0.0
    %2754 = vmatpush.msra.mxu0 0.0
    %2755 = vmatpush.msra.mxu0 0.0
    %2756 = vmatpush.msra.mxu0 0.0
    %2757 = vmatpush.msra.mxu0 0.0
    %2758 = vmatpush.msra.mxu0 0.0
    %2759 = vmatpush.msra.mxu0 0.0
    %2760 = vmatpush.msra.mxu0 0.0
    %2761 = vmatpush.msra.mxu0 0.0
    %2762 = vmatpush.msra.mxu0 0.0
    %2763 = vmatpush.msra.mxu0 0.0
    %2764 = vmatpush.msra.mxu0 %v2742
    %2765 = vmatpush.msra.mxu0 %v2740
    %2766 = vmatpush.msra.mxu0 %v791
    %2767 = vmatmul.f32.gmra.mxu0 %v2746
    %v2768 = vpop.f32.mrf.mxu0
    %v2769 = vadd.f32 0.0, %v2768
    %2770 = vmatmul.f32.gmra.mxu0 %v2749
    %v2771 = vpop.f32.mrf.mxu0
    %v2772 = vadd.f32 0.0, %v2771
    %2773 = vdwg.mxu0
    %2774 = vrot.lane.b32.xlu0 %v176, 40
    %v2775 = vpop.permute.xlu0 %2774
    %2776 = vrot.lane.b32.xlu0 %v179, 40
    %v2777 = vpop.permute.xlu0 %2776
    %2778 = vrot.lane.b32.xlu0 %v182, 40
    %v2779 = vpop.permute.xlu0 %2778
    %v2784 = vsel %vm845, %v2658, 0
    %v2787 = vsel %vm845, %v2673, 0
    %2789 = vmatpush.msra.mxu0 0.0
    %2790 = vmatpush.msra.mxu0 0.0
    %2791 = vmatpush.msra.mxu0 0.0
    %2792 = vmatpush.msra.mxu0 0.0
    %2793 = vmatpush.msra.mxu0 0.0
    %2794 = vmatpush.msra.mxu0 0.0
    %2795 = vmatpush.msra.mxu0 0.0
    %2796 = vmatpush.msra.mxu0 0.0
    %2797 = vmatpush.msra.mxu0 0.0
    %2798 = vmatpush.msra.mxu0 0.0
    %2799 = vmatpush.msra.mxu0 0.0
    %2800 = vmatpush.msra.mxu0 0.0
    %2801 = vmatpush.msra.mxu0 0.0
    %2802 = vmatpush.msra.mxu0 %v2779
    %2803 = vmatpush.msra.mxu0 %v2777
    %2804 = vmatpush.msra.mxu0 %v2775
    %2805 = vmatmul.f32.gmra.mxu0 %v2784
    %v2806 = vpop.f32.mrf.mxu0
    %v2807 = vadd.f32 0.0, %v2806
    %2808 = vmatmul.f32.gmra.mxu0 %v2787
    %v2809 = vpop.f32.mrf.mxu0
    %v2810 = vadd.f32 0.0, %v2809
    %2811 = vdwg.mxu0
    %2812 = vrot.lane.b32.xlu0 %v185, 40
    %v2813 = vpop.permute.xlu0 %2812
    %2814 = vrot.lane.b32.xlu0 %v188, 40
    %v2815 = vpop.permute.xlu0 %2814
    %2816 = vrot.lane.b32.xlu0 %v191, 40
    %v2817 = vpop.permute.xlu0 %2816
    %v2822 = vsel %vm845, %v2688, 0
    %v2825 = vsel %vm845, %v2703, 0
    %2827 = vmatpush.msra.mxu0 0.0
    %2828 = vmatpush.msra.mxu0 0.0
    %2829 = vmatpush.msra.mxu0 0.0
    %2830 = vmatpush.msra.mxu0 0.0
    %2831 = vmatpush.msra.mxu0 0.0
    %2832 = vmatpush.msra.mxu0 0.0
    %2833 = vmatpush.msra.mxu0 0.0
    %2834 = vmatpush.msra.mxu0 0.0
    %2835 = vmatpush.msra.mxu0 0.0
    %2836 = vmatpush.msra.mxu0 0.0
    %2837 = vmatpush.msra.mxu0 0.0
    %2838 = vmatpush.msra.mxu0 0.0
    %2839 = vmatpush.msra.mxu0 0.0
    %2840 = vmatpush.msra.mxu0 %v2817
    %2841 = vmatpush.msra.mxu0 %v2815
    %2842 = vmatpush.msra.mxu0 %v2813
    %2843 = vmatmul.f32.gmra.mxu0 %v2822
    %v2844 = vpop.f32.mrf.mxu0
    %v2845 = vadd.f32 0.0, %v2844
    %2846 = vmatmul.f32.gmra.mxu0 %v2825
    %v2847 = vpop.f32.mrf.mxu0
    %v2848 = vadd.f32 0.0, %v2847
    %2849 = vdwg.mxu0
    %2858 = vrot.lane.b32.xlu0 %v1730, 8
    %v2859 = vpop.permute.xlu0 %2858
    %2860 = vrot.lane.b32.xlu0 %v1733, 8
    %v2861 = vpop.permute.xlu0 %2860
    %2862 = vrot.lane.b32.xlu0 %v1765, 8
    %v2863 = vpop.permute.xlu0 %2862
    %2864 = vrot.lane.b32.xlu0 %v1768, 8
    %v2865 = vpop.permute.xlu0 %2864
    %2866 = vrot.lane.b32.xlu0 %v1803, 8
    %v2867 = vpop.permute.xlu0 %2866
    %2868 = vrot.lane.b32.xlu0 %v1806, 8
    %v2869 = vpop.permute.xlu0 %2868
    %2870 = vrot.lane.b32.xlu0 %v1841, 8
    %v2871 = vpop.permute.xlu0 %2870
    %2872 = vrot.lane.b32.xlu0 %v1844, 8
    %v2873 = vpop.permute.xlu0 %2872
    %2890 = vrot.lane.b32.xlu0 %v2232, 16
    %v2891 = vpop.permute.xlu0 %2890
    %2892 = vrot.lane.b32.xlu0 %v2235, 16
    %v2893 = vpop.permute.xlu0 %2892
    %2894 = vrot.lane.b32.xlu0 %v2267, 16
    %v2895 = vpop.permute.xlu0 %2894
    %2896 = vrot.lane.b32.xlu0 %v2270, 16
    %v2897 = vpop.permute.xlu0 %2896
    %2898 = vrot.lane.b32.xlu0 %v2305, 16
    %v2899 = vpop.permute.xlu0 %2898
    %2900 = vrot.lane.b32.xlu0 %v2308, 16
    %v2901 = vpop.permute.xlu0 %2900
    %2902 = vrot.lane.b32.xlu0 %v2343, 16
    %v2903 = vpop.permute.xlu0 %2902
    %2904 = vrot.lane.b32.xlu0 %v2346, 16
    %v2905 = vpop.permute.xlu0 %2904
    %2922 = vrot.lane.b32.xlu0 %v2734, 24
    %v2923 = vpop.permute.xlu0 %2922
    %2924 = vrot.lane.b32.xlu0 %v2737, 24
    %v2925 = vpop.permute.xlu0 %2924
    %2926 = vrot.lane.b32.xlu0 %v2769, 24
    %v2927 = vpop.permute.xlu0 %2926
    %2928 = vrot.lane.b32.xlu0 %v2772, 24
    %v2929 = vpop.permute.xlu0 %2928
    %2930 = vrot.lane.b32.xlu0 %v2807, 24
    %v2931 = vpop.permute.xlu0 %2930
    %2932 = vrot.lane.b32.xlu0 %v2810, 24
    %v2933 = vpop.permute.xlu0 %2932
    %2934 = vrot.lane.b32.xlu0 %v2845, 24
    %v2935 = vpop.permute.xlu0 %2934
    %2936 = vrot.lane.b32.xlu0 %v2848, 24
    %v2937 = vpop.permute.xlu0 %2936
    %v2946 = vsel %vm196, %v1228, %v2859
    %v2947 = vsel %vm196, %v1231, %v2861
    %v2948 = vsel %vm196, %v1263, %v2863
    %v2949 = vsel %vm196, %v1266, %v2865
    %v2950 = vsel %vm196, %v1301, %v2867
    %v2951 = vsel %vm196, %v1304, %v2869
    %v2952 = vsel %vm196, %v1339, %v2871
    %v2953 = vsel %vm196, %v1342, %v2873
    %v2954 = vsel %vm842, %v2946, %v2891
    %v2955 = vsel %vm842, %v2947, %v2893
    %v2956 = vsel %vm842, %v2948, %v2895
    %v2957 = vsel %vm842, %v2949, %v2897
    %v2958 = vsel %vm842, %v2950, %v2899
    %v2959 = vsel %vm842, %v2951, %v2901
    %v2960 = vsel %vm842, %v2952, %v2903
    %v2961 = vsel %vm842, %v2953, %v2905
    %v2962 = vsel %vm845, %v2954, %v2923
    %v2963 = vsel %vm845, %v2955, %v2925
    %v2964 = vsel %vm845, %v2956, %v2927
    %v2965 = vsel %vm845, %v2957, %v2929
    %v2966 = vsel %vm845, %v2958, %v2931
    %v2967 = vsel %vm845, %v2959, %v2933
    %v2968 = vsel %vm845, %v2960, %v2935
    %v2969 = vsel %vm845, %v2961, %v2937
    %v2970 = vld [vmem:[#allocation8] sm:$0xff]
    %v2971 = vld [vmem:[#allocation8 + $0x8] sm:$0xff]
    %v2972 = vld [vmem:[#allocation8 + $0x10] sm:$0xff]
    %v2973 = vld [vmem:[#allocation8 + $0x18] sm:$0xff]
    %v2974 = vld [vmem:[%s4] sm:$0x1]
    %v2976 = vperm.slane %v2974, 0
    %v2979 = vsel %vm103, %v846, 0
    %v2982 = vsel %vm103, %v2962, 0
    %v2985 = vsel %vm103, %v2963, 0
    %v2988 = vsel %vm103, %v847, 0
    %v2991 = vsel %vm103, %v2964, 0
    %v2994 = vsel %vm103, %v2965, 0
    %v2997 = vsel %vm103, %v2966, 0
    %v3000 = vsel %vm103, %v2967, 0
    %v3003 = vsel %vm103, %v2968, 0
    %v3006 = vsel %vm103, %v2969, 0
    %3008 = vmatpush.msra.mxu0 0.0
    %3009 = vmatpush.msra.mxu0 0.0
    %3010 = vmatpush.msra.mxu0 0.0
    %3011 = vmatpush.msra.mxu0 0.0
    %3012 = vmatpush.msra.mxu0 0.0
    %3013 = vmatpush.msra.mxu0 0.0
    %3014 = vmatpush.msra.mxu0 0.0
    %3015 = vmatpush.msra.mxu0 0.0
    %3016 = vmatpush.msra.mxu0 0.0
    %3017 = vmatpush.msra.mxu0 0.0
    %3018 = vmatpush.msra.mxu0 0.0
    %3019 = vmatpush.msra.mxu0 0.0
    %3020 = vmatpush.msra.mxu0 %v2973
    %3021 = vmatpush.msra.mxu0 %v2972
    %3022 = vmatpush.msra.mxu0 %v2971
    %3023 = vmatpush.msra.mxu0 %v2970
    %3024 = vmatmul.f32.gmra.mxu0 %v2979
    %v3025 = vpop.f32.mrf.mxu0
    %v3026 = vadd.f32 %v2976, %v3025
    %3027 = vmatmul.f32.gmra.mxu0 %v2982
    %v3028 = vpop.f32.mrf.mxu0
    %v3029 = vadd.f32 %v2976, %v3028
    %3030 = vmatmul.f32.gmra.mxu0 %v2985
    %v3031 = vpop.f32.mrf.mxu0
    %v3032 = vadd.f32 %v2976, %v3031
    %3033 = vmatmul.f32.gmra.mxu0 %v2988
    %v3034 = vpop.f32.mrf.mxu0
    %v3035 = vadd.f32 %v2976, %v3034
    %3036 = vmatmul.f32.gmra.mxu0 %v2991
    %v3037 = vpop.f32.mrf.mxu0
    %v3038 = vadd.f32 %v2976, %v3037
    %3039 = vmatmul.f32.gmra.mxu0 %v2994
    %v3040 = vpop.f32.mrf.mxu0
    %v3041 = vadd.f32 %v2976, %v3040
    %3042 = vmatmul.f32.gmra.mxu0 %v2979
    %v3043 = vpop.f32.mrf.mxu0
    %v3044 = vadd.f32 %v2976, %v3043
    %3045 = vmatmul.f32.gmra.mxu0 %v2997
    %v3046 = vpop.f32.mrf.mxu0
    %v3047 = vadd.f32 %v2976, %v3046
    %3048 = vmatmul.f32.gmra.mxu0 %v3000
    %v3049 = vpop.f32.mrf.mxu0
    %v3050 = vadd.f32 %v2976, %v3049
    %3051 = vmatmul.f32.gmra.mxu0 %v2988
    %v3052 = vpop.f32.mrf.mxu0
    %v3053 = vadd.f32 %v2976, %v3052
    %3054 = vmatmul.f32.gmra.mxu0 %v3003
    %v3055 = vpop.f32.mrf.mxu0
    %v3056 = vadd.f32 %v2976, %v3055
    %3057 = vmatmul.f32.gmra.mxu0 %v3006
    %v3058 = vpop.f32.mrf.mxu0
    %v3059 = vadd.f32 %v2976, %v3058
    %3060 = vdwg.mxu0
    %3061 = vst.msk [vmem:[#allocation10] sm:$0xff] %vm103, %v3026
    %3062 = vst.msk [vmem:[#allocation10 + $0x8] sm:$0xff] %vm103, %v3029
    %3063 = vst.msk [vmem:[#allocation10 + $0x10] sm:$0xff] %vm103, %v3032
    %3064 = vst.msk [vmem:[#allocation10 + $0x18] sm:$0xff] %vm103, %v3035
    %3065 = vst.msk [vmem:[#allocation10 + $0x20] sm:$0xff] %vm103, %v3038
    %3066 = vst.msk [vmem:[#allocation10 + $0x28] sm:$0xff] %vm103, %v3041
    %3067 = vst.msk [vmem:[#allocation11] sm:$0xff] %vm103, %v3044
    %3068 = vst.msk [vmem:[#allocation11 + $0x8] sm:$0xff] %vm103, %v3047
    %3069 = vst.msk [vmem:[#allocation11 + $0x10] sm:$0xff] %vm103, %v3050
    %3070 = vst.msk [vmem:[#allocation11 + $0x18] sm:$0xff] %vm103, %v3053
    %3071 = vst.msk [vmem:[#allocation11 + $0x20] sm:$0xff] %vm103, %v3056
    %3072 = vst.msk [vmem:[#allocation11 + $0x28] sm:$0xff] %vm103, %v3059
    // Predicated region
    $region38: #{tpu_custom_call.1} parent=1 // pred_check
      _
    $region39: #{tpu_custom_call.1} parent=1 // pred_check_branch
      %3074 = sbr.rel (0) target = $region41
    $region40: #{tpu_custom_call.1} parent=1 // pred_region
      %3076 = vsyncadd [#allocation4], 0
      %s3077 = sshll.u32 [#allocation10], 4
      %s3078 = int_to_ptr.vmem [resolvable:$true] %s3077
      %s3079 = sshll.u32 %s5, 4
      %s3080 = int_to_ptr.hbm [resolvable:$true] %s3079
      %3085 = dma.vmem_to_hbm [thread:$0]  %s3078, 768, %s3080, [#allocation4], 128, 128, 8
    $region41: #{tpu_custom_call.1} parent=1 // pred_fallthru
      _
    // Predicated region
    $region42: #{tpu_custom_call.1} parent=1 // pred_check
      _
    $region43: #{tpu_custom_call.1} parent=1 // pred_check_branch
      %3087 = sbr.rel (0) target = $region45
    $region44: #{tpu_custom_call.1} parent=1 // pred_region
      %3089 = vsyncadd [#allocation12], 0
      %s3090 = sshll.u32 [#allocation11], 4
      %s3091 = int_to_ptr.vmem [resolvable:$true] %s3090
      %s3092 = sshll.u32 %s6, 4
      %s3093 = int_to_ptr.hbm [resolvable:$true] %s3092
      %3098 = dma.vmem_to_hbm [thread:$0]  %s3091, 768, %s3093, [#allocation12], 128, 128, 8
    $region45: #{tpu_custom_call.1} parent=1 // pred_fallthru
      _
    // Predicated region
    $region46: #{tpu_custom_call.1} parent=1 // pred_check
      _
    $region47: #{tpu_custom_call.1} parent=1 // pred_check_branch
      %3100 = sbr.rel (0) target = $region49
    $region48: #{tpu_custom_call.1} parent=1 // pred_region
      %3102 = dma.done [#allocation4], 768
    $region49: #{tpu_custom_call.1} parent=1 // pred_fallthru
      _
    // Predicated region
    $region50: #{tpu_custom_call.1} parent=1 // pred_check
      _
    $region51: #{tpu_custom_call.1} parent=1 // pred_check_branch
      %3104 = sbr.rel (0) target = $region53
    $region52: #{tpu_custom_call.1} parent=1 // pred_region
      %3106 = dma.done [#allocation12], 768
    $region53: #{tpu_custom_call.1} parent=1 // pred_fallthru
      _
    %3107 = vsyncpa [#allocation3], 1
    %3108 = vsyncpa [#allocation6], 1
    %3109 = vsyncpa [#allocation9], 1
    %3110 = vsyncpa [#allocation4], 1
    %3111 = vsyncpa [#allocation12], 1

</llo_original>
